<compile_context>
chip_gen: v6e
topology: v6e:2x2x1
jax: 0.10.0
libtpu: 0.0.40
codegen_flags: <defaults>
</compile_context>

<pallas_src>
import math

import jax
import jax.numpy as jnp
from jax import lax
from jax.experimental import pallas as pl
from jax.experimental.pallas import tpu as pltpu

# ----------------------- small, module-consistent sizes -----------------------
B = 2          # batch
L = 8          # n_groups (padded text length; module default 40)
HT = 48        # text-encoder hidden size (stand-in for 768)
C = 32         # emb_dim (module default 512)
H = 4          # num_heads
D = C // H     # head dim
FF = 64        # decoder FFN hidden
N = 128        # number of points (stand-in for N_raw = 2048; lane-dense)
CP = 32        # hidden width of the synthetic point encoder MLP (kept == C)
assert CP == C

VEC_W = 128    # f32 slab lane width  (>= 3*C and >= FF)
WSLAB_W = 128  # bf16 slab lane width (>= 3*C)

# ---- f32 bias / LayerNorm / pos slab row layout ([NVEC, VEC_W]) ----
ROW_BQKV = 0                      # L rows, lanes [0,3C): fused self-attn in-proj bias
ROW_BQC = L                       # L rows, lanes [0,C) : cross-attn Q bias
_r0 = 2 * L
ROW_B_TR, ROW_G_TR, ROW_BE_TR = _r0 + 0, _r0 + 1, _r0 + 2
ROW_BO_S, ROW_G1, ROW_BE1 = _r0 + 3, _r0 + 4, _r0 + 5
ROW_BO_C, ROW_G2, ROW_BE2 = _r0 + 6, _r0 + 7, _r0 + 8
ROW_BF1, ROW_BF2 = _r0 + 9, _r0 + 10
ROW_G3, ROW_BE3 = _r0 + 11, _r0 + 12
ROW_GF, ROW_BEF = _r0 + 13, _r0 + 14
ROW_PENC = ((_r0 + 15 + 7) // 8) * 8      # point-encoder block (sublane aligned)
NVEC = ROW_PENC + CP

# ---- bf16 matmul-weight slab row layout ([RW_TOTAL, WSLAB_W]) ----
def _r16(x):
    return ((x + 15) // 16) * 16          # bf16 sublane-packing alignment

RW_QKV_S = 0                              # C rows,  lanes [0,3C): Wq*scale | Wk | Wv
RW_TR = _r16(RW_QKV_S + C)                # HT rows, lanes [0,C) : text resizer
RW_QC = _r16(RW_TR + HT)                  # C rows,  lanes [0,C) : cross-attn Wq*scale
RW_KV_CT = _r16(RW_QC + C)                # 2C rows, lanes [0,C) : [Wk_c^T ; Wv_c^T]
RW_P2T = _r16(RW_KV_CT + 2 * C)           # C rows,  lanes [0,CP): point MLP layer-2 W^T
RW_F1 = _r16(RW_P2T + C)                  # C rows,  lanes [0,FF): FFN W1
RW_F2 = _r16(RW_F1 + C)                   # FF rows, lanes [0,C) : FFN W2
RW_TOTAL = _r16(RW_F2 + FF)


def _layernorm(x, g, b, eps):
    # single-pass stats: var = E[x^2] - mu^2 (shorter serial XLU reduce chain)
    mu = jnp.mean(x, axis=-1, keepdims=True)
    ex2 = jnp.mean(x * x, axis=-1, keepdims=True)
    var = ex2 - mu * mu
    return (x - mu) * lax.rsqrt(var + eps) * g + b


def _softmax(s):
    s = s - jnp.max(s, axis=-1, keepdims=True)
    p = jnp.exp(s)
    return p * pl.reciprocal(jnp.sum(p, axis=-1, keepdims=True), approx=True)


def pointrefer_kernel(text_ref, mrow_ref, xyz_ref,
                      wslab_ref, wo3_ref, vec_ref,
                      out_ref):
    f32 = jnp.float32
    bf16 = jnp.bfloat16

    x_text = text_ref[0]            # [L, HT]
    m_row = mrow_ref[0]             # [1, L]  (1 = valid token)
    xyz = xyz_ref[0]                # [3, N]
    vec = vec_ref[...]              # [NVEC, VEC_W] f32 bias/LN/pos slab

    def vrow(i, w=C):               # [1, w] row from the f32 slab
        return vec[i:i + 1, 0:w]

    def heads(x, base=0):           # lane chunks of width D -> [H, L, D] bf16
        return jnp.stack([x[:, base + h * D: base + (h + 1) * D]
                          for h in range(H)], axis=0).astype(bf16)

    # ---- text_resizer: Linear(HT -> C) + LayerNorm(eps=1e-12) ----
    # TODO(synk): RoBERTa text encoder + tokenizer (forward_text) has no Pallas
    # equivalent; the kernel consumes precomputed text features [B, L, HT].
    t = jnp.dot(x_text.astype(bf16), wslab_ref[RW_TR:RW_TR + HT, 0:C],
                preferred_element_type=f32) + vrow(ROW_B_TR)
    t = _layernorm(t, vrow(ROW_G_TR), vrow(ROW_BE_TR), 1e-12)

    # ---- point encoder, channels-first [C, N] (== PyTorch point_feature [B,C,N]) --
    # TODO(synk): PointUni3d backbone is not defined in the given source; a
    # pointwise 2-layer MLP stands in.  The K=3 first layer runs on the VPU
    # (3 broadcast FMAs), the second layer as W^T @ h1 so N stays in lanes.
    penc = vec[ROW_PENC:ROW_PENC + CP, :]           # cols 0:3 W1^T, col 3 b1, col 4 b2
    h1 = (penc[:, 3:4]
          + penc[:, 0:1] * xyz[0:1, :]
          + penc[:, 1:2] * xyz[1:2, :]
          + penc[:, 2:3] * xyz[2:3, :])             # [CP, N]
    h1 = jnp.maximum(h1, 0.0)
    pf = jnp.dot(wslab_ref[RW_P2T:RW_P2T + C, 0:CP], h1.astype(bf16),
                 preferred_element_type=f32) + penc[:, 4:5]     # [C, N] f32
    pf_b = pf.astype(bf16)

    # ---- 1-layer DETR-style transformer decoder (post-norm, dropout=0) ----
    # TODO(synk): custom TransformerDecoderLayer source not provided; DETR-style
    # layer used, tgt_key_padding_mask interpreted as 1 = valid token.

    # self-attention: one fused QKV matmul (pos1d and 1/sqrt(D) folded at pack time)
    key_bias = (m_row - 1.0) * 1e9                  # [1, L]: 0 valid, -1e9 pad
    qkv = jnp.dot(t.astype(bf16), wslab_ref[RW_QKV_S:RW_QKV_S + C, 0:3 * C],
                  preferred_element_type=f32) + vec[ROW_BQKV:ROW_BQKV + L, 0:3 * C]
    q3, k3, v3 = heads(qkv, 0), heads(qkv, C), heads(qkv, 2 * C)   # [H, L, D]
    s = jnp.einsum("hld,hmd->hlm", q3, k3, preferred_element_type=f32) + key_bias
    p = _softmax(s)
    o3 = jnp.einsum("hlm,hmd->hld", p.astype(bf16), v3, preferred_element_type=f32)
    sa = jnp.sum(jnp.einsum("hld,hdc->hlc", o3.astype(bf16), wo3_ref[0],
                            preferred_element_type=f32), axis=0) + vrow(ROW_BO_S)
    t = _layernorm(t + sa, vrow(ROW_G1), vrow(ROW_BE1), 1e-5)

    # cross-attention: text queries attend over the N points (pf as K/V memory).
    # K and V generated by ONE fused matmul; the head split of [2C, N] is a
    # free sublane-leading reshape.  The K in-proj bias cancels in softmax; the
    # V in-proj bias is folded into the output bias row (rows of p sum to 1).
    q = jnp.dot(t.astype(bf16), wslab_ref[RW_QC:RW_QC + C, 0:C],
                preferred_element_type=f32) + vec[ROW_BQC:ROW_BQC + L, 0:C]
    q3 = heads(q, 0)                                               # [H, L, D]
    kv = jnp.dot(wslab_ref[RW_KV_CT:RW_KV_CT + 2 * C, 0:C], pf_b,
                 preferred_element_type=f32)                       # [2C, N]
    kv3 = kv.reshape(2, H, D, N).astype(bf16)
    k3, v3 = kv3[0], kv3[1]                                        # [H, D, N]
    s = jnp.einsum("hld,hdn->hln", q3, k3, preferred_element_type=f32)
    p = _softmax(s)
    o3 = jnp.einsum("hln,hdn->hld", p.astype(bf16), v3, preferred_element_type=f32)
    ca = jnp.sum(jnp.einsum("hld,hdc->hlc", o3.astype(bf16), wo3_ref[1],
                            preferred_element_type=f32), axis=0) + vrow(ROW_BO_C)
    t = _layernorm(t + ca, vrow(ROW_G2), vrow(ROW_BE2), 1e-5)

    # FFN
    ff = jnp.maximum(jnp.dot(t.astype(bf16), wslab_ref[RW_F1:RW_F1 + C, 0:FF],
                             preferred_element_type=f32) + vrow(ROW_BF1, FF), 0.0)
    ff = jnp.dot(ff.astype(bf16), wslab_ref[RW_F2:RW_F2 + FF, 0:C],
                 preferred_element_type=f32) + vrow(ROW_BF2)
    t = _layernorm(t + ff, vrow(ROW_G3), vrow(ROW_BE3), 1e-5)

    # TransformerDecoder final norm
    t = _layernorm(t, vrow(ROW_GF), vrow(ROW_BEF), 1e-5)

    # ---- head: masked token mean as a matmul (exact), then [1,C]@[C,N], sigmoid
    msum = jnp.maximum(jnp.sum(m_row, axis=-1, keepdims=True), 1.0)    # [1,1] guard
    tbar = jnp.dot(m_row.astype(bf16), t.astype(bf16),
                   preferred_element_type=f32) * pl.reciprocal(msum, approx=True)
    aff = jnp.dot(tbar.astype(bf16), pf_b, preferred_element_type=f32)  # [1, N]
    out_ref[0] = jax.nn.sigmoid(aff)


def pack_params(p):
    """Pack the PyTorch-style parameter dict into three DMA-friendly slabs."""
    f32, bf = jnp.float32, jnp.bfloat16
    scale = 1.0 / math.sqrt(D)
    pos = p["pos1d"]                                       # [L, C]

    def put(slab, r, w):
        rows, cols = w.shape
        return slab.at[r:r + rows, 0:cols].set(w)

    # ---- bf16 matmul-weight slab ----
    wslab = jnp.zeros((RW_TOTAL, WSLAB_W), f32)
    wslab = put(wslab, RW_QKV_S,
                jnp.concatenate([p["wq_s"] * scale, p["wk_s"], p["wv_s"]], axis=1))
    wslab = put(wslab, RW_TR, p["w_tr"])
    wslab = put(wslab, RW_QC, p["wq_c"] * scale)
    wslab = put(wslab, RW_KV_CT, jnp.concatenate([p["wk_c"].T, p["wv_c"].T], axis=0))
    wslab = put(wslab, RW_P2T, p["w_p2"].T)
    wslab = put(wslab, RW_F1, p["wf1"])
    wslab = put(wslab, RW_F2, p["wf2"])
    wslab = wslab.astype(bf)

    # ---- out-projection weights, head-split at pack time: [2, H, D, C] ----
    wo3 = jnp.stack([p["wo_s"].reshape(H, D, C),
                     p["wo_c"].reshape(H, D, C)], axis=0).astype(bf)

    # ---- f32 bias / LayerNorm / pos slab ----
    vec = jnp.zeros((NVEC, VEC_W), f32)
    # pos1d and 1/sqrt(D) folded through the Q/K projections (V uses bare t).
    b_qkv = jnp.concatenate([
        (pos @ p["wq_s"] + p["bq_s"]) * scale,
        pos @ p["wk_s"] + p["bk_s"],
        jnp.broadcast_to(p["bv_s"], (L, C)),
    ], axis=1)                                             # [L, 3C]
    vec = put(vec, ROW_BQKV, b_qkv)
    vec = put(vec, ROW_BQC, (pos @ p["wq_c"] + p["bq_c"]) * scale)
    # cross-attn V in-proj bias folds through the out-projection (softmax rows sum
    # to 1); the cross-attn K in-proj bias cancels in softmax and is dropped.
    bo_c_eff = p["bv_c"] @ p["wo_c"] + p["bo_c"]
    for r, v in [(ROW_B_TR, p["b_tr"]), (ROW_G_TR, p["g_tr"]), (ROW_BE_TR, p["be_tr"]),
                 (ROW_BO_S, p["bo_s"]), (ROW_G1, p["g1"]), (ROW_BE1, p["be1"]),
                 (ROW_BO_C, bo_c_eff), (ROW_G2, p["g2"]), (ROW_BE2, p["be2"]),
                 (ROW_BF1, p["bf1"]), (ROW_BF2, p["bf2"]),
                 (ROW_G3, p["g3"]), (ROW_BE3, p["be3"]),
                 (ROW_GF, p["gf"]), (ROW_BEF, p["bef"])]:
        vec = put(vec, r, v)
    # point-encoder block: cols 0:3 = W1^T, col 3 = b1 column, col 4 = b2 column
    vec = put(vec, ROW_PENC, p["w_p1"].T)                            # [CP, 3]
    vec = vec.at[ROW_PENC:ROW_PENC + CP, 3:4].set(p["b_p1"].T)
    vec = vec.at[ROW_PENC:ROW_PENC + C, 4:5].set(p["b_p2"].T)

    return dict(wslab=wslab, wo3=wo3, vec=vec)


def pointrefer_forward(text_feat, token_mask, xyz, params):
    """text_feat: [B, L, HT], token_mask: [B, L] float {0,1}, xyz: [B, 3, N]."""
    packed = pack_params(params)
    m_row = token_mask[:, None, :]                   # [B, 1, L]

    data = [text_feat, m_row, xyz]
    weights = [packed["wslab"], packed["wo3"], packed["vec"]]

    def batch_spec(shape):
        nd = len(shape)
        return pl.BlockSpec((1,) + tuple(shape[1:]),
                            lambda b, nd=nd: (b,) + (0,) * (nd - 1))

    def full_spec(arr):
        # constant index map -> the packed weight slabs stay resident in VMEM
        # and are not re-fetched per grid step.
        return pl.BlockSpec(arr.shape, lambda b, nd=arr.ndim: (0,) * nd)

    in_specs = [batch_spec(a.shape) for a in data] + [full_spec(w) for w in weights]

    out = pl.pallas_call(
        pointrefer_kernel,
        out_shape=jax.ShapeDtypeStruct((B, 1, N), jnp.float32),
        grid=(B,),
        in_specs=in_specs,
        out_specs=pl.BlockSpec((1, 1, N), lambda b: (b, 0, 0)),
        compiler_params=pltpu.CompilerParams(
            dimension_semantics=("parallel",)),          # uses both TCs on v7x
    )(*data, *weights)
    return out[:, 0, :]                                  # [B, N]


def init_params(key):
    keys = list(jax.random.split(key, 16))
    ki = iter(keys)

    def w(shape, scale=0.02):
        return (scale * jax.random.normal(next(ki), shape)).astype(jnp.float32)

    def zeros(shape):
        return jnp.zeros(shape, jnp.float32)

    def ones(shape):
        return jnp.ones(shape, jnp.float32)

    p = {}
    p["pos1d"] = w((L, C), 0.2)                      # trunc_normal_(std=0.2) stand-in
    p["w_tr"], p["b_tr"] = w((HT, C)), zeros((1, C))
    p["g_tr"], p["be_tr"] = ones((1, C)), zeros((1, C))
    p["w_p1"], p["b_p1"] = w((3, CP)), zeros((1, CP))
    p["w_p2"], p["b_p2"] = w((CP, C)), zeros((1, C))
    # self-attention
    p["wq_s"], p["bq_s"] = w((C, C)), zeros((1, C))
    p["wk_s"], p["bk_s"] = w((C, C)), zeros((1, C))
    p["wv_s"], p["bv_s"] = w((C, C)), zeros((1, C))
    p["wo_s"], p["bo_s"] = w((C, C)), zeros((1, C))
    p["g1"], p["be1"] = ones((1, C)), zeros((1, C))
    # cross-attention
    p["wq_c"], p["bq_c"] = w((C, C)), zeros((1, C))
    p["wk_c"], p["bk_c"] = w((C, C)), zeros((1, C))   # bk_c cancels in softmax
    p["wv_c"], p["bv_c"] = w((C, C)), zeros((1, C))
    p["wo_c"], p["bo_c"] = w((C, C)), zeros((1, C))
    p["g2"], p["be2"] = ones((1, C)), zeros((1, C))
    # FFN
    p["wf1"], p["bf1"] = w((C, FF)), zeros((1, FF))
    p["wf2"], p["bf2"] = w((FF, C)), zeros((1, C))
    p["g3"], p["be3"] = ones((1, C)), zeros((1, C))
    # decoder final LayerNorm
    p["gf"], p["bef"] = ones((1, C)), zeros((1, C))
    return p


if __name__ == "__main__":
    key = jax.random.PRNGKey(0)
    k_param, k_text, k_xyz = jax.random.split(key, 3)

    params = init_params(k_param)
    text_feat = jax.random.normal(k_text, (B, L, HT), dtype=jnp.float32)
    xyz = jax.random.normal(k_xyz, (B, 3, N), dtype=jnp.float32)
    lengths = jnp.array([6, 4], dtype=jnp.int32)                      # valid tokens
    token_mask = (jnp.arange(L)[None, :] < lengths[:, None]).astype(jnp.float32)

    out = pointrefer_forward(text_feat, token_mask, xyz, params)
    out = jax.block_until_ready(out)
    assert out.shape == (B, N), out.shape
    assert bool(jnp.all(jnp.isfinite(out)))
    assert bool(jnp.all((out >= 0.0) & (out <= 1.0)))                 # sigmoid output
    print("KERNEL_OK")
</pallas_src>

<mosaic_0001>
module attributes {stable_mosaic.version = 11 : i64} {
  func.func @pointrefer_kernel(%arg0: i32, %arg1: memref<1x8x48xf32, #tpu.memory_space<vmem>>, %arg2: memref<1x1x8xf32, #tpu.memory_space<vmem>>, %arg3: memref<1x3x128xf32, #tpu.memory_space<vmem>>, %arg4: memref<304x128xbf16, #tpu.memory_space<vmem>>, %arg5: memref<2x4x8x32xbf16, #tpu.memory_space<vmem>>, %arg6: memref<64x128xf32, #tpu.memory_space<vmem>>, %arg7: memref<1x1x128xf32, #tpu.memory_space<vmem>>) attributes {dimension_semantics = [#tpu.dimension_semantics<parallel>], iteration_bounds = array<i64: 2>, scalar_prefetch = 0 : i64, scratch_operands = 0 : i64, tpu.core_type = #tpu.core_type<tc>, window_params = [{transform_indices = @transform_0, window_bounds = array<i64: 1, 8, 48>}, {transform_indices = @transform_1, window_bounds = array<i64: 1, 1, 8>}, {transform_indices = @transform_2, window_bounds = array<i64: 1, 3, 128>}, {pipeline_mode = #tpu.pipeline_mode<synchronous>, transform_indices = @transform_3, window_bounds = array<i64: 304, 128>}, {pipeline_mode = #tpu.pipeline_mode<synchronous>, transform_indices = @transform_4, window_bounds = array<i64: 2, 4, 8, 32>}, {pipeline_mode = #tpu.pipeline_mode<synchronous>, transform_indices = @transform_5, window_bounds = array<i64: 64, 128>}, {transform_indices = @transform_6, window_bounds = array<i64: 1, 1, 128>}]} {
    %c0 = arith.constant 0 : index
    %c0_0 = arith.constant 0 : index
    %c0_1 = arith.constant 0 : index
    %0 = vector.load %arg1[%c0, %c0_0, %c0_1] : memref<1x8x48xf32, #tpu.memory_space<vmem>>, vector<1x8x48xf32>
    %1 = vector.shape_cast %0 : vector<1x8x48xf32> to vector<8x48xf32>
    %c0_2 = arith.constant 0 : index
    %c0_3 = arith.constant 0 : index
    %c0_4 = arith.constant 0 : index
    %2 = vector.load %arg2[%c0_2, %c0_3, %c0_4] : memref<1x1x8xf32, #tpu.memory_space<vmem>>, vector<1x1x8xf32>
    %3 = vector.shape_cast %2 : vector<1x1x8xf32> to vector<1x8xf32>
    %c0_5 = arith.constant 0 : index
    %c0_6 = arith.constant 0 : index
    %c0_7 = arith.constant 0 : index
    %4 = vector.load %arg3[%c0_5, %c0_6, %c0_7] : memref<1x3x128xf32, #tpu.memory_space<vmem>>, vector<1x3x128xf32>
    %5 = vector.shape_cast %4 : vector<1x3x128xf32> to vector<3x128xf32>
    %c0_8 = arith.constant 0 : index
    %c0_9 = arith.constant 0 : index
    %6 = vector.load %arg6[%c0_8, %c0_9] : memref<64x128xf32, #tpu.memory_space<vmem>>, vector<64x128xf32>
    %7 = arith.truncf %1 : vector<8x48xf32> to vector<8x48xbf16>
    %c32 = arith.constant 32 : index
    %c0_10 = arith.constant 0 : index
    %8 = vector.load %arg4[%c32, %c0_10] : memref<304x128xbf16, #tpu.memory_space<vmem>>, vector<48x32xbf16>
    %cst = arith.constant dense<0.000000e+00> : vector<8x32xf32>
    %9 = tpu.matmul %7, %8, %cst {dimension_numbers = #tpu.dot_dimension_numbers<[1], [0], [0], [1], [0, 0, 1, 1], [], []>} : vector<8x48xbf16>, vector<48x32xbf16>, vector<8x32xf32> -> vector<8x32xf32>
    %10 = vector.extract_strided_slice %6 {offsets = [16, 0], sizes = [1, 32], strides = [1, 1]} : vector<64x128xf32> to vector<1x32xf32>
    %11 = vector.broadcast %10 : vector<1x32xf32> to vector<8x32xf32>
    %12 = arith.addf %9, %11 : vector<8x32xf32>
    %13 = vector.extract_strided_slice %6 {offsets = [17, 0], sizes = [1, 32], strides = [1, 1]} : vector<64x128xf32> to vector<1x32xf32>
    %14 = vector.extract_strided_slice %6 {offsets = [18, 0], sizes = [1, 32], strides = [1, 1]} : vector<64x128xf32> to vector<1x32xf32>
    %cst_11 = arith.constant dense<0.000000e+00> : vector<8xf32>
    %15 = vector.multi_reduction <add>, %12, %cst_11 [1] : vector<8x32xf32> to vector<8xf32>
    %16 = vector.shape_cast %15 : vector<8xf32> to vector<8x1xf32>
    %cst_12 = arith.constant 3.200000e+01 : f32
    %17 = vector.broadcast %cst_12 : f32 to vector<8x1xf32>
    %18 = arith.divf %16, %17 : vector<8x1xf32>
    %19 = arith.mulf %12, %12 : vector<8x32xf32>
    %cst_13 = arith.constant dense<0.000000e+00> : vector<8xf32>
    %20 = vector.multi_reduction <add>, %19, %cst_13 [1] : vector<8x32xf32> to vector<8xf32>
    %21 = vector.shape_cast %20 : vector<8xf32> to vector<8x1xf32>
    %cst_14 = arith.constant 3.200000e+01 : f32
    %22 = vector.broadcast %cst_14 : f32 to vector<8x1xf32>
    %23 = arith.divf %21, %22 : vector<8x1xf32>
    %24 = arith.mulf %18, %18 : vector<8x1xf32>
    %25 = arith.subf %23, %24 : vector<8x1xf32>
    %26 = vector.broadcast %18 : vector<8x1xf32> to vector<8x32xf32>
    %27 = arith.subf %12, %26 : vector<8x32xf32>
    %cst_15 = arith.constant 9.99999996E-13 : f32
    %28 = vector.broadcast %cst_15 : f32 to vector<8x1xf32>
    %29 = arith.addf %25, %28 : vector<8x1xf32>
    %30 = math.rsqrt %29 : vector<8x1xf32>
    %31 = vector.broadcast %30 : vector<8x1xf32> to vector<8x32xf32>
    %32 = arith.mulf %27, %31 : vector<8x32xf32>
    %33 = vector.broadcast %13 : vector<1x32xf32> to vector<8x32xf32>
    %34 = arith.mulf %32, %33 : vector<8x32xf32>
    %35 = vector.broadcast %14 : vector<1x32xf32> to vector<8x32xf32>
    %36 = arith.addf %34, %35 : vector<8x32xf32>
    %37 = vector.extract_strided_slice %6 {offsets = [32, 0], sizes = [32, 128], strides = [1, 1]} : vector<64x128xf32> to vector<32x128xf32>
    %38 = vector.extract_strided_slice %37 {offsets = [0, 3], sizes = [32, 1], strides = [1, 1]} : vector<32x128xf32> to vector<32x1xf32>
    %39 = vector.extract_strided_slice %37 {offsets = [0, 0], sizes = [32, 1], strides = [1, 1]} : vector<32x128xf32> to vector<32x1xf32>
    %40 = vector.extract_strided_slice %5 {offsets = [0, 0], sizes = [1, 128], strides = [1, 1]} : vector<3x128xf32> to vector<1x128xf32>
    %41 = vector.broadcast %39 : vector<32x1xf32> to vector<32x128xf32>
    %42 = vector.broadcast %40 : vector<1x128xf32> to vector<32x128xf32>
    %43 = arith.mulf %41, %42 : vector<32x128xf32>
    %44 = vector.broadcast %38 : vector<32x1xf32> to vector<32x128xf32>
    %45 = arith.addf %44, %43 : vector<32x128xf32>
    %46 = vector.extract_strided_slice %37 {offsets = [0, 1], sizes = [32, 1], strides = [1, 1]} : vector<32x128xf32> to vector<32x1xf32>
    %47 = vector.extract_strided_slice %5 {offsets = [1, 0], sizes = [1, 128], strides = [1, 1]} : vector<3x128xf32> to vector<1x128xf32>
    %48 = vector.broadcast %46 : vector<32x1xf32> to vector<32x128xf32>
    %49 = vector.broadcast %47 : vector<1x128xf32> to vector<32x128xf32>
    %50 = arith.mulf %48, %49 : vector<32x128xf32>
    %51 = arith.addf %45, %50 : vector<32x128xf32>
    %52 = vector.extract_strided_slice %37 {offsets = [0, 2], sizes = [32, 1], strides = [1, 1]} : vector<32x128xf32> to vector<32x1xf32>
    %53 = vector.extract_strided_slice %5 {offsets = [2, 0], sizes = [1, 128], strides = [1, 1]} : vector<3x128xf32> to vector<1x128xf32>
    %54 = vector.broadcast %52 : vector<32x1xf32> to vector<32x128xf32>
    %55 = vector.broadcast %53 : vector<1x128xf32> to vector<32x128xf32>
    %56 = arith.mulf %54, %55 : vector<32x128xf32>
    %57 = arith.addf %51, %56 : vector<32x128xf32>
    %cst_16 = arith.constant 0.000000e+00 : f32
    %58 = vector.broadcast %cst_16 : f32 to vector<32x128xf32>
    %59 = arith.maximumf %57, %58 : vector<32x128xf32>
    %c176 = arith.constant 176 : index
    %c0_17 = arith.constant 0 : index
    %60 = vector.load %arg4[%c176, %c0_17] : memref<304x128xbf16, #tpu.memory_space<vmem>>, vector<32x32xbf16>
    %61 = arith.truncf %59 : vector<32x128xf32> to vector<32x128xbf16>
    %cst_18 = arith.constant dense<0.000000e+00> : vector<32x128xf32>
    %62 = tpu.matmul %60, %61, %cst_18 {dimension_numbers = #tpu.dot_dimension_numbers<[1], [0], [0], [1], [0, 0, 1, 1], [], []>} : vector<32x32xbf16>, vector<32x128xbf16>, vector<32x128xf32> -> vector<32x128xf32>
    %63 = vector.extract_strided_slice %37 {offsets = [0, 4], sizes = [32, 1], strides = [1, 1]} : vector<32x128xf32> to vector<32x1xf32>
    %64 = vector.broadcast %63 : vector<32x1xf32> to vector<32x128xf32>
    %65 = arith.addf %62, %64 : vector<32x128xf32>
    %66 = arith.truncf %65 : vector<32x128xf32> to vector<32x128xbf16>
    %cst_19 = arith.constant 1.000000e+00 : f32
    %67 = vector.broadcast %cst_19 : f32 to vector<1x8xf32>
    %68 = arith.subf %3, %67 : vector<1x8xf32>
    %cst_20 = arith.constant 1.000000e+09 : f32
    %69 = vector.broadcast %cst_20 : f32 to vector<1x8xf32>
    %70 = arith.mulf %68, %69 : vector<1x8xf32>
    %71 = arith.truncf %36 : vector<8x32xf32> to vector<8x32xbf16>
    %c0_21 = arith.constant 0 : index
    %c0_22 = arith.constant 0 : index
    %72 = vector.load %arg4[%c0_21, %c0_22] : memref<304x128xbf16, #tpu.memory_space<vmem>>, vector<32x96xbf16>
    %cst_23 = arith.constant dense<0.000000e+00> : vector<8x96xf32>
    %73 = tpu.matmul %71, %72, %cst_23 {dimension_numbers = #tpu.dot_dimension_numbers<[1], [0], [0], [1], [0, 0, 1, 1], [], []>} : vector<8x32xbf16>, vector<32x96xbf16>, vector<8x96xf32> -> vector<8x96xf32>
    %74 = vector.extract_strided_slice %6 {offsets = [0, 0], sizes = [8, 96], strides = [1, 1]} : vector<64x128xf32> to vector<8x96xf32>
    %75 = arith.addf %73, %74 : vector<8x96xf32>
    %76 = vector.extract_strided_slice %75 {offsets = [0, 0], sizes = [8, 8], strides = [1, 1]} : vector<8x96xf32> to vector<8x8xf32>
    %77 = vector.extract_strided_slice %75 {offsets = [0, 8], sizes = [8, 8], strides = [1, 1]} : vector<8x96xf32> to vector<8x8xf32>
    %78 = vector.extract_strided_slice %75 {offsets = [0, 16], sizes = [8, 8], strides = [1, 1]} : vector<8x96xf32> to vector<8x8xf32>
    %79 = vector.extract_strided_slice %75 {offsets = [0, 24], sizes = [8, 8], strides = [1, 1]} : vector<8x96xf32> to vector<8x8xf32>
    %80 = vector.shape_cast %76 : vector<8x8xf32> to vector<1x8x8xf32>
    %81 = vector.shape_cast %77 : vector<8x8xf32> to vector<1x8x8xf32>
    %82 = vector.shape_cast %78 : vector<8x8xf32> to vector<1x8x8xf32>
    %83 = vector.shape_cast %79 : vector<8x8xf32> to vector<1x8x8xf32>
    %84 = tpu.concatenate %80, %81, %82, %83 in 0 : vector<1x8x8xf32>, vector<1x8x8xf32>, vector<1x8x8xf32>, vector<1x8x8xf32> -> vector<4x8x8xf32>
    %85 = arith.truncf %84 : vector<4x8x8xf32> to vector<4x8x8xbf16>
    %86 = vector.extract_strided_slice %75 {offsets = [0, 32], sizes = [8, 8], strides = [1, 1]} : vector<8x96xf32> to vector<8x8xf32>
    %87 = vector.extract_strided_slice %75 {offsets = [0, 40], sizes = [8, 8], strides = [1, 1]} : vector<8x96xf32> to vector<8x8xf32>
    %88 = vector.extract_strided_slice %75 {offsets = [0, 48], sizes = [8, 8], strides = [1, 1]} : vector<8x96xf32> to vector<8x8xf32>
    %89 = vector.extract_strided_slice %75 {offsets = [0, 56], sizes = [8, 8], strides = [1, 1]} : vector<8x96xf32> to vector<8x8xf32>
    %90 = vector.shape_cast %86 : vector<8x8xf32> to vector<1x8x8xf32>
    %91 = vector.shape_cast %87 : vector<8x8xf32> to vector<1x8x8xf32>
    %92 = vector.shape_cast %88 : vector<8x8xf32> to vector<1x8x8xf32>
    %93 = vector.shape_cast %89 : vector<8x8xf32> to vector<1x8x8xf32>
    %94 = tpu.concatenate %90, %91, %92, %93 in 0 : vector<1x8x8xf32>, vector<1x8x8xf32>, vector<1x8x8xf32>, vector<1x8x8xf32> -> vector<4x8x8xf32>
    %95 = arith.truncf %94 : vector<4x8x8xf32> to vector<4x8x8xbf16>
    %96 = vector.extract_strided_slice %75 {offsets = [0, 64], sizes = [8, 8], strides = [1, 1]} : vector<8x96xf32> to vector<8x8xf32>
    %97 = vector.extract_strided_slice %75 {offsets = [0, 72], sizes = [8, 8], strides = [1, 1]} : vector<8x96xf32> to vector<8x8xf32>
    %98 = vector.extract_strided_slice %75 {offsets = [0, 80], sizes = [8, 8], strides = [1, 1]} : vector<8x96xf32> to vector<8x8xf32>
    %99 = vector.extract_strided_slice %75 {offsets = [0, 88], sizes = [8, 8], strides = [1, 1]} : vector<8x96xf32> to vector<8x8xf32>
    %100 = vector.shape_cast %96 : vector<8x8xf32> to vector<1x8x8xf32>
    %101 = vector.shape_cast %97 : vector<8x8xf32> to vector<1x8x8xf32>
    %102 = vector.shape_cast %98 : vector<8x8xf32> to vector<1x8x8xf32>
    %103 = vector.shape_cast %99 : vector<8x8xf32> to vector<1x8x8xf32>
    %104 = tpu.concatenate %100, %101, %102, %103 in 0 : vector<1x8x8xf32>, vector<1x8x8xf32>, vector<1x8x8xf32>, vector<1x8x8xf32> -> vector<4x8x8xf32>
    %105 = arith.truncf %104 : vector<4x8x8xf32> to vector<4x8x8xbf16>
    "tpu.trace_start"() <{level = 10 : i32, message = "hld,hmd->hlm"}> : () -> ()
    %cst_24 = arith.constant dense<0.000000e+00> : vector<4x8x8xf32>
    %106 = tpu.matmul %85, %95, %cst_24 {dimension_numbers = #tpu.dot_dimension_numbers<[2], [2], [1], [1], [0, 0, 0, 1, 1, 1], [0], [0]>} : vector<4x8x8xbf16>, vector<4x8x8xbf16>, vector<4x8x8xf32> -> vector<4x8x8xf32>
    "tpu.trace_stop"() : () -> ()
    %107 = vector.shape_cast %70 : vector<1x8xf32> to vector<1x1x8xf32>
    %108 = vector.broadcast %107 : vector<1x1x8xf32> to vector<4x8x8xf32>
    %109 = arith.addf %106, %108 : vector<4x8x8xf32>
    %cst_25 = arith.constant dense<0xFF800000> : vector<4x8xf32>
    %110 = vector.multi_reduction <maximumf>, %109, %cst_25 [2] : vector<4x8x8xf32> to vector<4x8xf32>
    %111 = vector.shape_cast %110 : vector<4x8xf32> to vector<4x8x1xf32>
    %112 = vector.broadcast %111 : vector<4x8x1xf32> to vector<4x8x8xf32>
    %113 = arith.subf %109, %112 : vector<4x8x8xf32>
    %114 = math.exp %113 : vector<4x8x8xf32>
    %cst_26 = arith.constant dense<0.000000e+00> : vector<4x8xf32>
    %115 = vector.multi_reduction <add>, %114, %cst_26 [2] : vector<4x8x8xf32> to vector<4x8xf32>
    %116 = vector.shape_cast %115 : vector<4x8xf32> to vector<4x8x1xf32>
    %117 = tpu.reciprocal %116 {approx = true} : vector<4x8x1xf32> -> vector<4x8x1xf32>
    %118 = vector.broadcast %117 : vector<4x8x1xf32> to vector<4x8x8xf32>
    %119 = arith.mulf %114, %118 : vector<4x8x8xf32>
    %120 = arith.truncf %119 : vector<4x8x8xf32> to vector<4x8x8xbf16>
    "tpu.trace_start"() <{level = 10 : i32, message = "hlm,hmd->hld"}> : () -> ()
    %cst_27 = arith.constant dense<0.000000e+00> : vector<4x8x8xf32>
    %121 = tpu.matmul %120, %105, %cst_27 {dimension_numbers = #tpu.dot_dimension_numbers<[2], [1], [1], [2], [0, 0, 0, 1, 1, 2], [0], [0]>} : vector<4x8x8xbf16>, vector<4x8x8xbf16>, vector<4x8x8xf32> -> vector<4x8x8xf32>
    "tpu.trace_stop"() : () -> ()
    %122 = arith.truncf %121 : vector<4x8x8xf32> to vector<4x8x8xbf16>
    %c0_28 = arith.constant 0 : index
    %c0_29 = arith.constant 0 : index
    %c0_30 = arith.constant 0 : index
    %c0_31 = arith.constant 0 : index
    %123 = vector.load %arg5[%c0_28, %c0_29, %c0_30, %c0_31] : memref<2x4x8x32xbf16, #tpu.memory_space<vmem>>, vector<1x4x8x32xbf16>
    %124 = vector.shape_cast %123 : vector<1x4x8x32xbf16> to vector<4x8x32xbf16>
    "tpu.trace_start"() <{level = 10 : i32, message = "hld,hdc->hlc"}> : () -> ()
    %cst_32 = arith.constant dense<0.000000e+00> : vector<4x8x32xf32>
    %125 = tpu.matmul %122, %124, %cst_32 {dimension_numbers = #tpu.dot_dimension_numbers<[2], [1], [1], [2], [0, 0, 0, 1, 1, 2], [0], [0]>} : vector<4x8x8xbf16>, vector<4x8x32xbf16>, vector<4x8x32xf32> -> vector<4x8x32xf32>
    "tpu.trace_stop"() : () -> ()
    %cst_33 = arith.constant dense<0.000000e+00> : vector<8x32xf32>
    %126 = vector.multi_reduction <add>, %125, %cst_33 [0] : vector<4x8x32xf32> to vector<8x32xf32>
    %127 = vector.extract_strided_slice %6 {offsets = [19, 0], sizes = [1, 32], strides = [1, 1]} : vector<64x128xf32> to vector<1x32xf32>
    %128 = vector.broadcast %127 : vector<1x32xf32> to vector<8x32xf32>
    %129 = arith.addf %126, %128 : vector<8x32xf32>
    %130 = arith.addf %36, %129 : vector<8x32xf32>
    %131 = vector.extract_strided_slice %6 {offsets = [20, 0], sizes = [1, 32], strides = [1, 1]} : vector<64x128xf32> to vector<1x32xf32>
    %132 = vector.extract_strided_slice %6 {offsets = [21, 0], sizes = [1, 32], strides = [1, 1]} : vector<64x128xf32> to vector<1x32xf32>
    %cst_34 = arith.constant dense<0.000000e+00> : vector<8xf32>
    %133 = vector.multi_reduction <add>, %130, %cst_34 [1] : vector<8x32xf32> to vector<8xf32>
    %134 = vector.shape_cast %133 : vector<8xf32> to vector<8x1xf32>
    %cst_35 = arith.constant 3.200000e+01 : f32
    %135 = vector.broadcast %cst_35 : f32 to vector<8x1xf32>
    %136 = arith.divf %134, %135 : vector<8x1xf32>
    %137 = arith.mulf %130, %130 : vector<8x32xf32>
    %cst_36 = arith.constant dense<0.000000e+00> : vector<8xf32>
    %138 = vector.multi_reduction <add>, %137, %cst_36 [1] : vector<8x32xf32> to vector<8xf32>
    %139 = vector.shape_cast %138 : vector<8xf32> to vector<8x1xf32>
    %cst_37 = arith.constant 3.200000e+01 : f32
    %140 = vector.broadcast %cst_37 : f32 to vector<8x1xf32>
    %141 = arith.divf %139, %140 : vector<8x1xf32>
    %142 = arith.mulf %136, %136 : vector<8x1xf32>
    %143 = arith.subf %141, %142 : vector<8x1xf32>
    %144 = vector.broadcast %136 : vector<8x1xf32> to vector<8x32xf32>
    %145 = arith.subf %130, %144 : vector<8x32xf32>
    %cst_38 = arith.constant 9.99999974E-6 : f32
    %146 = vector.broadcast %cst_38 : f32 to vector<8x1xf32>
    %147 = arith.addf %143, %146 : vector<8x1xf32>
    %148 = math.rsqrt %147 : vector<8x1xf32>
    %149 = vector.broadcast %148 : vector<8x1xf32> to vector<8x32xf32>
    %150 = arith.mulf %145, %149 : vector<8x32xf32>
    %151 = vector.broadcast %131 : vector<1x32xf32> to vector<8x32xf32>
    %152 = arith.mulf %150, %151 : vector<8x32xf32>
    %153 = vector.broadcast %132 : vector<1x32xf32> to vector<8x32xf32>
    %154 = arith.addf %152, %153 : vector<8x32xf32>
    %155 = arith.truncf %154 : vector<8x32xf32> to vector<8x32xbf16>
    %c80 = arith.constant 80 : index
    %c0_39 = arith.constant 0 : index
    %156 = vector.load %arg4[%c80, %c0_39] : memref<304x128xbf16, #tpu.memory_space<vmem>>, vector<32x32xbf16>
    %cst_40 = arith.constant dense<0.000000e+00> : vector<8x32xf32>
    %157 = tpu.matmul %155, %156, %cst_40 {dimension_numbers = #tpu.dot_dimension_numbers<[1], [0], [0], [1], [0, 0, 1, 1], [], []>} : vector<8x32xbf16>, vector<32x32xbf16>, vector<8x32xf32> -> vector<8x32xf32>
    %158 = vector.extract_strided_slice %6 {offsets = [8, 0], sizes = [8, 32], strides = [1, 1]} : vector<64x128xf32> to vector<8x32xf32>
    %159 = arith.addf %157, %158 : vector<8x32xf32>
    %160 = vector.extract_strided_slice %159 {offsets = [0, 0], sizes = [8, 8], strides = [1, 1]} : vector<8x32xf32> to vector<8x8xf32>
    %161 = vector.extract_strided_slice %159 {offsets = [0, 8], sizes = [8, 8], strides = [1, 1]} : vector<8x32xf32> to vector<8x8xf32>
    %162 = vector.extract_strided_slice %159 {offsets = [0, 16], sizes = [8, 8], strides = [1, 1]} : vector<8x32xf32> to vector<8x8xf32>
    %163 = vector.extract_strided_slice %159 {offsets = [0, 24], sizes = [8, 8], strides = [1, 1]} : vector<8x32xf32> to vector<8x8xf32>
    %164 = vector.shape_cast %160 : vector<8x8xf32> to vector<1x8x8xf32>
    %165 = vector.shape_cast %161 : vector<8x8xf32> to vector<1x8x8xf32>
    %166 = vector.shape_cast %162 : vector<8x8xf32> to vector<1x8x8xf32>
    %167 = vector.shape_cast %163 : vector<8x8xf32> to vector<1x8x8xf32>
    %168 = tpu.concatenate %164, %165, %166, %167 in 0 : vector<1x8x8xf32>, vector<1x8x8xf32>, vector<1x8x8xf32>, vector<1x8x8xf32> -> vector<4x8x8xf32>
    %169 = arith.truncf %168 : vector<4x8x8xf32> to vector<4x8x8xbf16>
    %c112 = arith.constant 112 : index
    %c0_41 = arith.constant 0 : index
    %170 = vector.load %arg4[%c112, %c0_41] : memref<304x128xbf16, #tpu.memory_space<vmem>>, vector<64x32xbf16>
    %cst_42 = arith.constant dense<0.000000e+00> : vector<64x128xf32>
    %171 = tpu.matmul %170, %66, %cst_42 {dimension_numbers = #tpu.dot_dimension_numbers<[1], [0], [0], [1], [0, 0, 1, 1], [], []>} : vector<64x32xbf16>, vector<32x128xbf16>, vector<64x128xf32> -> vector<64x128xf32>
    %172 = vector.shape_cast %171 : vector<64x128xf32> to vector<2x4x8x128xf32>
    %173 = arith.truncf %172 : vector<2x4x8x128xf32> to vector<2x4x8x128xbf16>
    %174 = vector.extract_strided_slice %173 {offsets = [0, 0, 0, 0], sizes = [1, 4, 8, 128], strides = [1, 1, 1, 1]} : vector<2x4x8x128xbf16> to vector<1x4x8x128xbf16>
    %175 = vector.shape_cast %174 : vector<1x4x8x128xbf16> to vector<4x8x128xbf16>
    %176 = vector.extract_strided_slice %173 {offsets = [1, 0, 0, 0], sizes = [1, 4, 8, 128], strides = [1, 1, 1, 1]} : vector<2x4x8x128xbf16> to vector<1x4x8x128xbf16>
    %177 = vector.shape_cast %176 : vector<1x4x8x128xbf16> to vector<4x8x128xbf16>
    "tpu.trace_start"() <{level = 10 : i32, message = "hld,hdn->hln"}> : () -> ()
    %cst_43 = arith.constant dense<0.000000e+00> : vector<4x8x128xf32>
    %178 = tpu.matmul %169, %175, %cst_43 {dimension_numbers = #tpu.dot_dimension_numbers<[2], [1], [1], [2], [0, 0, 0, 1, 1, 2], [0], [0]>} : vector<4x8x8xbf16>, vector<4x8x128xbf16>, vector<4x8x128xf32> -> vector<4x8x128xf32>
    "tpu.trace_stop"() : () -> ()
    %cst_44 = arith.constant dense<0xFF800000> : vector<4x8xf32>
    %179 = vector.multi_reduction <maximumf>, %178, %cst_44 [2] : vector<4x8x128xf32> to vector<4x8xf32>
    %180 = vector.shape_cast %179 : vector<4x8xf32> to vector<4x8x1xf32>
    %181 = vector.broadcast %180 : vector<4x8x1xf32> to vector<4x8x128xf32>
    %182 = arith.subf %178, %181 : vector<4x8x128xf32>
    %183 = math.exp %182 : vector<4x8x128xf32>
    %cst_45 = arith.constant dense<0.000000e+00> : vector<4x8xf32>
    %184 = vector.multi_reduction <add>, %183, %cst_45 [2] : vector<4x8x128xf32> to vector<4x8xf32>
    %185 = vector.shape_cast %184 : vector<4x8xf32> to vector<4x8x1xf32>
    %186 = tpu.reciprocal %185 {approx = true} : vector<4x8x1xf32> -> vector<4x8x1xf32>
    %187 = vector.broadcast %186 : vector<4x8x1xf32> to vector<4x8x128xf32>
    %188 = arith.mulf %183, %187 : vector<4x8x128xf32>
    %189 = arith.truncf %188 : vector<4x8x128xf32> to vector<4x8x128xbf16>
    "tpu.trace_start"() <{level = 10 : i32, message = "hln,hdn->hld"}> : () -> ()
    %cst_46 = arith.constant dense<0.000000e+00> : vector<4x8x8xf32>
    %190 = tpu.matmul %189, %177, %cst_46 {dimension_numbers = #tpu.dot_dimension_numbers<[2], [2], [1], [1], [0, 0, 0, 1, 1, 1], [0], [0]>} : vector<4x8x128xbf16>, vector<4x8x128xbf16>, vector<4x8x8xf32> -> vector<4x8x8xf32>
    "tpu.trace_stop"() : () -> ()
    %191 = arith.truncf %190 : vector<4x8x8xf32> to vector<4x8x8xbf16>
    %c1 = arith.constant 1 : index
    %c0_47 = arith.constant 0 : index
    %c0_48 = arith.constant 0 : index
    %c0_49 = arith.constant 0 : index
    %192 = vector.load %arg5[%c1, %c0_47, %c0_48, %c0_49] : memref<2x4x8x32xbf16, #tpu.memory_space<vmem>>, vector<1x4x8x32xbf16>
    %193 = vector.shape_cast %192 : vector<1x4x8x32xbf16> to vector<4x8x32xbf16>
    "tpu.trace_start"() <{level = 10 : i32, message = "hld,hdc->hlc"}> : () -> ()
    %cst_50 = arith.constant dense<0.000000e+00> : vector<4x8x32xf32>
    %194 = tpu.matmul %191, %193, %cst_50 {dimension_numbers = #tpu.dot_dimension_numbers<[2], [1], [1], [2], [0, 0, 0, 1, 1, 2], [0], [0]>} : vector<4x8x8xbf16>, vector<4x8x32xbf16>, vector<4x8x32xf32> -> vector<4x8x32xf32>
    "tpu.trace_stop"() : () -> ()
    %cst_51 = arith.constant dense<0.000000e+00> : vector<8x32xf32>
    %195 = vector.multi_reduction <add>, %194, %cst_51 [0] : vector<4x8x32xf32> to vector<8x32xf32>
    %196 = vector.extract_strided_slice %6 {offsets = [22, 0], sizes = [1, 32], strides = [1, 1]} : vector<64x128xf32> to vector<1x32xf32>
    %197 = vector.broadcast %196 : vector<1x32xf32> to vector<8x32xf32>
    %198 = arith.addf %195, %197 : vector<8x32xf32>
    %199 = arith.addf %154, %198 : vector<8x32xf32>
    %200 = vector.extract_strided_slice %6 {offsets = [23, 0], sizes = [1, 32], strides = [1, 1]} : vector<64x128xf32> to vector<1x32xf32>
    %201 = vector.extract_strided_slice %6 {offsets = [24, 0], sizes = [1, 32], strides = [1, 1]} : vector<64x128xf32> to vector<1x32xf32>
    %cst_52 = arith.constant dense<0.000000e+00> : vector<8xf32>
    %202 = vector.multi_reduction <add>, %199, %cst_52 [1] : vector<8x32xf32> to vector<8xf32>
    %203 = vector.shape_cast %202 : vector<8xf32> to vector<8x1xf32>
    %cst_53 = arith.constant 3.200000e+01 : f32
    %204 = vector.broadcast %cst_53 : f32 to vector<8x1xf32>
    %205 = arith.divf %203, %204 : vector<8x1xf32>
    %206 = arith.mulf %199, %199 : vector<8x32xf32>
    %cst_54 = arith.constant dense<0.000000e+00> : vector<8xf32>
    %207 = vector.multi_reduction <add>, %206, %cst_54 [1] : vector<8x32xf32> to vector<8xf32>
    %208 = vector.shape_cast %207 : vector<8xf32> to vector<8x1xf32>
    %cst_55 = arith.constant 3.200000e+01 : f32
    %209 = vector.broadcast %cst_55 : f32 to vector<8x1xf32>
    %210 = arith.divf %208, %209 : vector<8x1xf32>
    %211 = arith.mulf %205, %205 : vector<8x1xf32>
    %212 = arith.subf %210, %211 : vector<8x1xf32>
    %213 = vector.broadcast %205 : vector<8x1xf32> to vector<8x32xf32>
    %214 = arith.subf %199, %213 : vector<8x32xf32>
    %cst_56 = arith.constant 9.99999974E-6 : f32
    %215 = vector.broadcast %cst_56 : f32 to vector<8x1xf32>
    %216 = arith.addf %212, %215 : vector<8x1xf32>
    %217 = math.rsqrt %216 : vector<8x1xf32>
    %218 = vector.broadcast %217 : vector<8x1xf32> to vector<8x32xf32>
    %219 = arith.mulf %214, %218 : vector<8x32xf32>
    %220 = vector.broadcast %200 : vector<1x32xf32> to vector<8x32xf32>
    %221 = arith.mulf %219, %220 : vector<8x32xf32>
    %222 = vector.broadcast %201 : vector<1x32xf32> to vector<8x32xf32>
    %223 = arith.addf %221, %222 : vector<8x32xf32>
    %224 = arith.truncf %223 : vector<8x32xf32> to vector<8x32xbf16>
    %c208 = arith.constant 208 : index
    %c0_57 = arith.constant 0 : index
    %225 = vector.load %arg4[%c208, %c0_57] : memref<304x128xbf16, #tpu.memory_space<vmem>>, vector<32x64xbf16>
    %cst_58 = arith.constant dense<0.000000e+00> : vector<8x64xf32>
    %226 = tpu.matmul %224, %225, %cst_58 {dimension_numbers = #tpu.dot_dimension_numbers<[1], [0], [0], [1], [0, 0, 1, 1], [], []>} : vector<8x32xbf16>, vector<32x64xbf16>, vector<8x64xf32> -> vector<8x64xf32>
    %227 = vector.extract_strided_slice %6 {offsets = [25, 0], sizes = [1, 64], strides = [1, 1]} : vector<64x128xf32> to vector<1x64xf32>
    %228 = vector.broadcast %227 : vector<1x64xf32> to vector<8x64xf32>
    %229 = arith.addf %226, %228 : vector<8x64xf32>
    %cst_59 = arith.constant 0.000000e+00 : f32
    %230 = vector.broadcast %cst_59 : f32 to vector<8x64xf32>
    %231 = arith.maximumf %229, %230 : vector<8x64xf32>
    %232 = arith.truncf %231 : vector<8x64xf32> to vector<8x64xbf16>
    %c240 = arith.constant 240 : index
    %c0_60 = arith.constant 0 : index
    %233 = vector.load %arg4[%c240, %c0_60] : memref<304x128xbf16, #tpu.memory_space<vmem>>, vector<64x32xbf16>
    %cst_61 = arith.constant dense<0.000000e+00> : vector<8x32xf32>
    %234 = tpu.matmul %232, %233, %cst_61 {dimension_numbers = #tpu.dot_dimension_numbers<[1], [0], [0], [1], [0, 0, 1, 1], [], []>} : vector<8x64xbf16>, vector<64x32xbf16>, vector<8x32xf32> -> vector<8x32xf32>
    %235 = vector.extract_strided_slice %6 {offsets = [26, 0], sizes = [1, 32], strides = [1, 1]} : vector<64x128xf32> to vector<1x32xf32>
    %236 = vector.broadcast %235 : vector<1x32xf32> to vector<8x32xf32>
    %237 = arith.addf %234, %236 : vector<8x32xf32>
    %238 = arith.addf %223, %237 : vector<8x32xf32>
    %239 = vector.extract_strided_slice %6 {offsets = [27, 0], sizes = [1, 32], strides = [1, 1]} : vector<64x128xf32> to vector<1x32xf32>
    %240 = vector.extract_strided_slice %6 {offsets = [28, 0], sizes = [1, 32], strides = [1, 1]} : vector<64x128xf32> to vector<1x32xf32>
    %cst_62 = arith.constant dense<0.000000e+00> : vector<8xf32>
    %241 = vector.multi_reduction <add>, %238, %cst_62 [1] : vector<8x32xf32> to vector<8xf32>
    %242 = vector.shape_cast %241 : vector<8xf32> to vector<8x1xf32>
    %cst_63 = arith.constant 3.200000e+01 : f32
    %243 = vector.broadcast %cst_63 : f32 to vector<8x1xf32>
    %244 = arith.divf %242, %243 : vector<8x1xf32>
    %245 = arith.mulf %238, %238 : vector<8x32xf32>
    %cst_64 = arith.constant dense<0.000000e+00> : vector<8xf32>
    %246 = vector.multi_reduction <add>, %245, %cst_64 [1] : vector<8x32xf32> to vector<8xf32>
    %247 = vector.shape_cast %246 : vector<8xf32> to vector<8x1xf32>
    %cst_65 = arith.constant 3.200000e+01 : f32
    %248 = vector.broadcast %cst_65 : f32 to vector<8x1xf32>
    %249 = arith.divf %247, %248 : vector<8x1xf32>
    %250 = arith.mulf %244, %244 : vector<8x1xf32>
    %251 = arith.subf %249, %250 : vector<8x1xf32>
    %252 = vector.broadcast %244 : vector<8x1xf32> to vector<8x32xf32>
    %253 = arith.subf %238, %252 : vector<8x32xf32>
    %cst_66 = arith.constant 9.99999974E-6 : f32
    %254 = vector.broadcast %cst_66 : f32 to vector<8x1xf32>
    %255 = arith.addf %251, %254 : vector<8x1xf32>
    %256 = math.rsqrt %255 : vector<8x1xf32>
    %257 = vector.broadcast %256 : vector<8x1xf32> to vector<8x32xf32>
    %258 = arith.mulf %253, %257 : vector<8x32xf32>
    %259 = vector.broadcast %239 : vector<1x32xf32> to vector<8x32xf32>
    %260 = arith.mulf %258, %259 : vector<8x32xf32>
    %261 = vector.broadcast %240 : vector<1x32xf32> to vector<8x32xf32>
    %262 = arith.addf %260, %261 : vector<8x32xf32>
    %263 = vector.extract_strided_slice %6 {offsets = [29, 0], sizes = [1, 32], strides = [1, 1]} : vector<64x128xf32> to vector<1x32xf32>
    %264 = vector.extract_strided_slice %6 {offsets = [30, 0], sizes = [1, 32], strides = [1, 1]} : vector<64x128xf32> to vector<1x32xf32>
    %cst_67 = arith.constant dense<0.000000e+00> : vector<8xf32>
    %265 = vector.multi_reduction <add>, %262, %cst_67 [1] : vector<8x32xf32> to vector<8xf32>
    %266 = vector.shape_cast %265 : vector<8xf32> to vector<8x1xf32>
    %cst_68 = arith.constant 3.200000e+01 : f32
    %267 = vector.broadcast %cst_68 : f32 to vector<8x1xf32>
    %268 = arith.divf %266, %267 : vector<8x1xf32>
    %269 = arith.mulf %262, %262 : vector<8x32xf32>
    %cst_69 = arith.constant dense<0.000000e+00> : vector<8xf32>
    %270 = vector.multi_reduction <add>, %269, %cst_69 [1] : vector<8x32xf32> to vector<8xf32>
    %271 = vector.shape_cast %270 : vector<8xf32> to vector<8x1xf32>
    %cst_70 = arith.constant 3.200000e+01 : f32
    %272 = vector.broadcast %cst_70 : f32 to vector<8x1xf32>
    %273 = arith.divf %271, %272 : vector<8x1xf32>
    %274 = arith.mulf %268, %268 : vector<8x1xf32>
    %275 = arith.subf %273, %274 : vector<8x1xf32>
    %276 = vector.broadcast %268 : vector<8x1xf32> to vector<8x32xf32>
    %277 = arith.subf %262, %276 : vector<8x32xf32>
    %cst_71 = arith.constant 9.99999974E-6 : f32
    %278 = vector.broadcast %cst_71 : f32 to vector<8x1xf32>
    %279 = arith.addf %275, %278 : vector<8x1xf32>
    %280 = math.rsqrt %279 : vector<8x1xf32>
    %281 = vector.broadcast %280 : vector<8x1xf32> to vector<8x32xf32>
    %282 = arith.mulf %277, %281 : vector<8x32xf32>
    %283 = vector.broadcast %263 : vector<1x32xf32> to vector<8x32xf32>
    %284 = arith.mulf %282, %283 : vector<8x32xf32>
    %285 = vector.broadcast %264 : vector<1x32xf32> to vector<8x32xf32>
    %286 = arith.addf %284, %285 : vector<8x32xf32>
    %cst_72 = arith.constant dense<0.000000e+00> : vector<1xf32>
    %287 = vector.multi_reduction <add>, %3, %cst_72 [1] : vector<1x8xf32> to vector<1xf32>
    %288 = vector.shape_cast %287 : vector<1xf32> to vector<1x1xf32>
    %cst_73 = arith.constant 1.000000e+00 : f32
    %289 = vector.broadcast %cst_73 : f32 to vector<1x1xf32>
    %290 = arith.maximumf %288, %289 : vector<1x1xf32>
    %291 = arith.truncf %3 : vector<1x8xf32> to vector<1x8xbf16>
    %292 = arith.truncf %286 : vector<8x32xf32> to vector<8x32xbf16>
    %cst_74 = arith.constant dense<0.000000e+00> : vector<1x32xf32>
    %293 = tpu.matmul %291, %292, %cst_74 {dimension_numbers = #tpu.dot_dimension_numbers<[1], [0], [0], [1], [0, 0, 1, 1], [], []>} : vector<1x8xbf16>, vector<8x32xbf16>, vector<1x32xf32> -> vector<1x32xf32>
    %294 = tpu.reciprocal %290 {approx = true} : vector<1x1xf32> -> vector<1x1xf32>
    %295 = vector.broadcast %294 : vector<1x1xf32> to vector<1x32xf32>
    %296 = arith.mulf %293, %295 : vector<1x32xf32>
    %297 = arith.truncf %296 : vector<1x32xf32> to vector<1x32xbf16>
    %cst_75 = arith.constant dense<0.000000e+00> : vector<1x128xf32>
    %298 = tpu.matmul %297, %66, %cst_75 {dimension_numbers = #tpu.dot_dimension_numbers<[1], [0], [0], [1], [0, 0, 1, 1], [], []>} : vector<1x32xbf16>, vector<32x128xbf16>, vector<1x128xf32> -> vector<1x128xf32>
    %299 = arith.negf %298 : vector<1x128xf32>
    %300 = math.exp %299 : vector<1x128xf32>
    %cst_76 = arith.constant 1.000000e+00 : f32
    %301 = vector.broadcast %cst_76 : f32 to vector<1x128xf32>
    %302 = arith.addf %301, %300 : vector<1x128xf32>
    %303 = arith.divf %301, %302 : vector<1x128xf32>
    %c0_77 = arith.constant 0 : index
    %c0_78 = arith.constant 0 : index
    %c0_79 = arith.constant 0 : index
    %304 = vector.load %arg7[%c0_77, %c0_78, %c0_79] : memref<1x1x128xf32, #tpu.memory_space<vmem>>, vector<1x1x128xf32>
    %305 = vector.shape_cast %304 : vector<1x1x128xf32> to vector<1x128xf32>
    %306 = vector.shape_cast %303 : vector<1x128xf32> to vector<1x1x128xf32>
    tpu.vector_store %arg7[%c0_77, %c0_78, %c0_79], %306 {strides = array<i32>} : memref<1x1x128xf32, #tpu.memory_space<vmem>>, vector<1x1x128xf32>,
    return
  }
  func.func @transform_0(%arg0: i32) -> (i32, i32, i32) {
    %c0_i32 = arith.constant 0 : i32
    %c0_i32_0 = arith.constant 0 : i32
    %c0_i32_1 = arith.constant 0 : i32
    return %arg0, %c0_i32, %c0_i32_0 : i32, i32, i32
  }
  func.func @transform_1(%arg0: i32) -> (i32, i32, i32) {
    %c0_i32 = arith.constant 0 : i32
    %c0_i32_0 = arith.constant 0 : i32
    %c0_i32_1 = arith.constant 0 : i32
    return %arg0, %c0_i32, %c0_i32_0 : i32, i32, i32
  }
  func.func @transform_2(%arg0: i32) -> (i32, i32, i32) {
    %c0_i32 = arith.constant 0 : i32
    %c0_i32_0 = arith.constant 0 : i32
    %c0_i32_1 = arith.constant 0 : i32
    return %arg0, %c0_i32, %c0_i32_0 : i32, i32, i32
  }
  func.func @transform_3(%arg0: i32) -> (i32, i32) {
    %c0_i32 = arith.constant 0 : i32
    %c0_i32_0 = arith.constant 0 : i32
    %c0_i32_1 = arith.constant 0 : i32
    return %c0_i32, %c0_i32_0 : i32, i32
  }
  func.func @transform_4(%arg0: i32) -> (i32, i32, i32, i32) {
    %c0_i32 = arith.constant 0 : i32
    %c0_i32_0 = arith.constant 0 : i32
    %c0_i32_1 = arith.constant 0 : i32
    %c0_i32_2 = arith.constant 0 : i32
    %c0_i32_3 = arith.constant 0 : i32
    return %c0_i32, %c0_i32_0, %c0_i32_1, %c0_i32_2 : i32, i32, i32, i32
  }
  func.func @transform_5(%arg0: i32) -> (i32, i32) {
    %c0_i32 = arith.constant 0 : i32
    %c0_i32_0 = arith.constant 0 : i32
    %c0_i32_1 = arith.constant 0 : i32
    return %c0_i32, %c0_i32_0 : i32, i32
  }
  func.func @transform_6(%arg0: i32) -> (i32, i32, i32) {
    %c0_i32 = arith.constant 0 : i32
    %c0_i32_0 = arith.constant 0 : i32
    %c0_i32_1 = arith.constant 0 : i32
    return %arg0, %c0_i32, %c0_i32_0 : i32, i32, i32
  }
}

</mosaic_0001>

<llo_original>
// kernel: tpu_custom_call.1
$region0: #{tpu_custom_call.1}
  #allocation0 [shape = 'u32[]', space=smem, size = 0x4, offset = 0x4, fixed_abs, tag = 'smem constant byte address 0x4 - core index']
  #allocation1 [shape = 'u32[144,128]{1,0:T(1,128)}', space=vmem, size = 0x12000, scoped, tag = 'internal scratch']
  %s0 = inlined_call_operand.hbm [shape: f32[2,8,48], index: 0, kind: input, shape index: {}]
  %s1 = inlined_call_operand.vmem [shape: f32[2,1,8], index: 1, kind: input, shape index: {}]
  %s2 = inlined_call_operand.vmem [shape: f32[2,3,128], index: 2, kind: input, shape index: {}]
  %s3 = inlined_call_operand.hbm [shape: bf16[304,128], index: 3, kind: input, shape index: {}]
  %s4 = inlined_call_operand.hbm [shape: bf16[2,4,8,32], index: 4, kind: input, shape index: {}]
  %s5 = inlined_call_operand.hbm [shape: f32[64,128], index: 5, kind: input, shape index: {}]
  %s6 = inlined_call_operand.hbm [shape: f32[2,1,128], index: 6, kind: output, shape index: {}]
  %s7 = sld [smem:[#allocation0]]
  $region73: #{tpu_custom_call.1} parent=0
    _
  %s9 = ssub.s32 1, %s7
  %s10 = scalar_select 0, %s9, %s7
  $region1: #{tpu_custom_call.1} parent=0
    #allocation2 [shape = 'u8[8192]{0}', space=vmem, size = 0x2000, scoped, tag = 'input window, operand 0']
    #allocation3 [shape = 's32[2]{0}', space=sflag, size = 0x8, scoped, tag = 'scoped memory for tpu_custom_call.1']
    #allocation4 [shape = 's32[2]{0}', space=sflag, size = 0x8, scoped, tag = 'scoped memory for tpu_custom_call.1']
    #allocation5 [shape = 'u8[77824]{0}', space=vmem, size = 0x13000, scoped, tag = 'input window, operand 3, single buffered']
    #allocation6 [shape = 's32[1]{0}', space=sflag, size = 0x4, scoped, tag = 'scoped memory for tpu_custom_call.1']
    #allocation7 [shape = 'u8[16384]{0}', space=vmem, size = 0x4000, scoped, tag = 'input window, operand 4, single buffered']
    #allocation8 [shape = 'u8[32768]{0}', space=vmem, size = 0x8000, scoped, tag = 'input window, operand 5, single buffered']
    #allocation9 [shape = 's32[1]{0}', space=sflag, size = 0x4, scoped, tag = 'scoped memory for tpu_custom_call.1']
    #allocation10 [shape = 'u8[1024]{0}', space=vmem, size = 0x400, scoped, tag = 'output window, operand 0']
    %11 = vsyncpa [#allocation3], 0
    %s12 = scalar_lea.sflag [#allocation3], 1
    %13 = vsyncpa %s12, 0
    %14 = vsyncpa [#allocation6], 0
    %15 = vsyncpa [#allocation9], 0
    %16 = vsyncpa [#allocation4], 0
    %s17 = scalar_lea.sflag [#allocation4], 1
    %18 = vsyncpa %s17, 0
    loop: start=0, step=1, limit=4
    $region2: #{tpu_custom_call.1} parent=1 // loop_pre_header
      _
    $region3: #{tpu_custom_call.1} parent=1 // loop_header
      %s20 = sphi 0, %s24
      %p21 = scmp.ge.s32.totalorder %s20, 4
      %s30 = sphi 0, %s32
      %s33 = sphi 0, %s30
      %s34 = sphi 0, %s33
      %s50 = sphi 0, %s34
      %s56 = sphi 0, %s58
      %s59 = sphi 0, %s56
      %s60 = sphi 0, %s59
      %s76 = sphi 0, %s60
      %s82 = sphi 0, %s84
      %s85 = sphi 0, %s82
      %s86 = sphi 0, %s85
      %s102 = sphi 0, %s86
      %s106 = sphi 0, %s106
      %s108 = sphi 0, %s106
      %s109 = sphi 0, %s108
      %s123 = sphi 0, %s109
      %s127 = sphi 0, %s127
      %s129 = sphi 0, %s127
      %s130 = sphi 0, %s129
      %s144 = sphi 0, %s130
      %s148 = sphi 0, %s148
      %s150 = sphi 0, %s148
      %s151 = sphi 0, %s150
      %s165 = sphi 0, %s151
      %s171 = sphi 0, %s173
      %s174 = sphi 0, %s171
      %s175 = sphi 0, %s174
      %s191 = sphi 0, %s175
    $region4: #{tpu_custom_call.1} parent=1 // loop_header_branch
      %23 = sbr.rel (%p21) target = $region8
    $region5: #{tpu_custom_call.1} parent=1 // loop_body
      %s25 = ssub.s32 %s20, 1
      %s26 = ssub.s32 %s20, 2
      %s27 = sadd.s32 %s20, 1
      %s28 = ssub.s32 %s20, %s27
      %p29 = scmp.eq.s32.totalorder %s28, 0
      %s31 = sadd.s32 %s30, 1
      %s32 = scalar_select %p29, %s30, %s31
      %p35 = pneg %p29
      %p36 = scmp.eq.s32.totalorder %s20, 1
      %p37 = por %p35, %p36
      %p38 = scmp.ne.s32.totalorder %s30, %s33
      %p39 = scmp.eq.s32.totalorder %s20, 0
      %p40 = por %p38, %p39
      %p41 = scmp.ne.s32.totalorder %s30, %s33
      %p42 = scmp.eq.s32.totalorder %s25, 1
      %p43 = por %p41, %p42
      %p44 = scmp.ne.s32.totalorder %s33, %s34
      %p45 = scmp.eq.s32.totalorder %s25, 0
      %p46 = por %p44, %p45
      %p47 = scmp.ne.s32.totalorder %s33, %s34
      %p48 = scmp.eq.s32.totalorder %s26, 1
      %p49 = por %p47, %p48
      %p51 = scmp.ne.s32.totalorder %s34, %s50
      %p52 = scmp.eq.s32.totalorder %s26, 0
      %p53 = por %p51, %p52
      %s54 = ssub.s32 %s20, %s27
      %p55 = scmp.eq.s32.totalorder %s54, 0
      %s57 = sadd.s32 %s56, 1
      %s58 = scalar_select %p55, %s56, %s57
      %p61 = pneg %p55
      %p62 = scmp.eq.s32.totalorder %s20, 1
      %p63 = por %p61, %p62
      %p64 = scmp.ne.s32.totalorder %s56, %s59
      %p65 = scmp.eq.s32.totalorder %s20, 0
      %p66 = por %p64, %p65
      %p67 = scmp.ne.s32.totalorder %s56, %s59
      %p68 = scmp.eq.s32.totalorder %s25, 1
      %p69 = por %p67, %p68
      %p70 = scmp.ne.s32.totalorder %s59, %s60
      %p71 = scmp.eq.s32.totalorder %s25, 0
      %p72 = por %p70, %p71
      %p73 = scmp.ne.s32.totalorder %s59, %s60
      %p74 = scmp.eq.s32.totalorder %s26, 1
      %p75 = por %p73, %p74
      %p77 = scmp.ne.s32.totalorder %s60, %s76
      %p78 = scmp.eq.s32.totalorder %s26, 0
      %p79 = por %p77, %p78
      %s80 = ssub.s32 %s20, %s27
      %p81 = scmp.eq.s32.totalorder %s80, 0
      %s83 = sadd.s32 %s82, 1
      %s84 = scalar_select %p81, %s82, %s83
      %p87 = pneg %p81
      %p88 = scmp.eq.s32.totalorder %s20, 1
      %p89 = por %p87, %p88
      %p90 = scmp.ne.s32.totalorder %s82, %s85
      %p91 = scmp.eq.s32.totalorder %s20, 0
      %p92 = por %p90, %p91
      %p93 = scmp.ne.s32.totalorder %s82, %s85
      %p94 = scmp.eq.s32.totalorder %s25, 1
      %p95 = por %p93, %p94
      %p96 = scmp.ne.s32.totalorder %s85, %s86
      %p97 = scmp.eq.s32.totalorder %s25, 0
      %p98 = por %p96, %p97
      %p99 = scmp.ne.s32.totalorder %s85, %s86
      %p100 = scmp.eq.s32.totalorder %s26, 1
      %p101 = por %p99, %p100
      %p103 = scmp.ne.s32.totalorder %s86, %s102
      %p104 = scmp.eq.s32.totalorder %s26, 0
      %p105 = por %p103, %p104
      %s107 = sadd.s32 %s106, 1
      %p110 = scmp.eq.s32.totalorder %s20, 1
      %p111 = scmp.ne.s32.totalorder %s106, %s108
      %p112 = scmp.eq.s32.totalorder %s20, 0
      %p113 = por %p111, %p112
      %p114 = scmp.ne.s32.totalorder %s106, %s108
      %p115 = scmp.eq.s32.totalorder %s25, 1
      %p116 = por %p114, %p115
      %p117 = scmp.ne.s32.totalorder %s108, %s109
      %p118 = scmp.eq.s32.totalorder %s25, 0
      %p119 = por %p117, %p118
      %p120 = scmp.ne.s32.totalorder %s108, %s109
      %p121 = scmp.eq.s32.totalorder %s26, 1
      %p122 = por %p120, %p121
      %p124 = scmp.ne.s32.totalorder %s109, %s123
      %p125 = scmp.eq.s32.totalorder %s26, 0
      %p126 = por %p124, %p125
      %s128 = sadd.s32 %s127, 1
      %p131 = scmp.eq.s32.totalorder %s20, 1
      %p132 = scmp.ne.s32.totalorder %s127, %s129
      %p133 = scmp.eq.s32.totalorder %s20, 0
      %p134 = por %p132, %p133
      %p135 = scmp.ne.s32.totalorder %s127, %s129
      %p136 = scmp.eq.s32.totalorder %s25, 1
      %p137 = por %p135, %p136
      %p138 = scmp.ne.s32.totalorder %s129, %s130
      %p139 = scmp.eq.s32.totalorder %s25, 0
      %p140 = por %p138, %p139
      %p141 = scmp.ne.s32.totalorder %s129, %s130
      %p142 = scmp.eq.s32.totalorder %s26, 1
      %p143 = por %p141, %p142
      %p145 = scmp.ne.s32.totalorder %s130, %s144
      %p146 = scmp.eq.s32.totalorder %s26, 0
      %p147 = por %p145, %p146
      %s149 = sadd.s32 %s148, 1
      %p152 = scmp.eq.s32.totalorder %s20, 1
      %p153 = scmp.ne.s32.totalorder %s148, %s150
      %p154 = scmp.eq.s32.totalorder %s20, 0
      %p155 = por %p153, %p154
      %p156 = scmp.ne.s32.totalorder %s148, %s150
      %p157 = scmp.eq.s32.totalorder %s25, 1
      %p158 = por %p156, %p157
      %p159 = scmp.ne.s32.totalorder %s150, %s151
      %p160 = scmp.eq.s32.totalorder %s25, 0
      %p161 = por %p159, %p160
      %p162 = scmp.ne.s32.totalorder %s150, %s151
      %p163 = scmp.eq.s32.totalorder %s26, 1
      %p164 = por %p162, %p163
      %p166 = scmp.ne.s32.totalorder %s151, %s165
      %p167 = scmp.eq.s32.totalorder %s26, 0
      %p168 = por %p166, %p167
      %s169 = ssub.s32 %s20, %s27
      %p170 = scmp.eq.s32.totalorder %s169, 0
      %s172 = sadd.s32 %s171, 1
      %s173 = scalar_select %p170, %s171, %s172
      %p176 = pneg %p170
      %p177 = scmp.eq.s32.totalorder %s20, 1
      %p178 = por %p176, %p177
      %p179 = scmp.ne.s32.totalorder %s171, %s174
      %p180 = scmp.eq.s32.totalorder %s20, 0
      %p181 = por %p179, %p180
      %p182 = scmp.ne.s32.totalorder %s171, %s174
      %p183 = scmp.eq.s32.totalorder %s25, 1
      %p184 = por %p182, %p183
      %p185 = scmp.ne.s32.totalorder %s174, %s175
      %p186 = scmp.eq.s32.totalorder %s25, 0
      %p187 = por %p185, %p186
      %p188 = scmp.ne.s32.totalorder %s174, %s175
      %p189 = scmp.eq.s32.totalorder %s26, 1
      %p190 = por %p188, %p189
      %p192 = scmp.ne.s32.totalorder %s175, %s191
      %p193 = scmp.eq.s32.totalorder %s26, 0
      %p194 = por %p192, %p193
      %p195 = scmp.le.s32.totalorder 1, %s20
      %p196 = scmp.lt.s32.totalorder %s20, 3
      %p197 = pnand %p195, %p196
      %p198 = pneg %p197
      // Predicated region
      $region9: #{tpu_custom_call.1} parent=5 // pred_check
        _
      $region10: #{tpu_custom_call.1} parent=5 // pred_check_branch
        %200 = sbr.rel (%p197) target = $region12
      $region11: #{tpu_custom_call.1} parent=5 // pred_region
        %s201 = ssub.s32 %s20, 1
        // Predicated region
        $region13: #{tpu_custom_call.1} parent=11 // pred_check
          %p202 = pneg %p119
        $region14: #{tpu_custom_call.1} parent=11 // pred_check_branch
          %204 = sbr.rel (%p202) target = $region16
        $region15: #{tpu_custom_call.1} parent=11 // pred_region
          %s206 = ssub.s32 2432, 2432
          %207 = vsyncadd [#allocation6], %s206
          %s208 = sshll.u32 [#allocation5], 4
          %s209 = int_to_ptr.vmem [resolvable:$true] %s208
          %214 = dma.hbm_to_vmem [thread:$0]  %s3, 2432, %s209, [#allocation6], 64, 64, 4
        $region16: #{tpu_custom_call.1} parent=11 // pred_fallthru
          _
        // Predicated region
        $region17: #{tpu_custom_call.1} parent=11 // pred_check
          %p215 = pneg %p140
        $region18: #{tpu_custom_call.1} parent=11 // pred_check_branch
          %217 = sbr.rel (%p215) target = $region20
        $region19: #{tpu_custom_call.1} parent=11 // pred_region
          %s219 = ssub.s32 512, 512
          %220 = vsyncadd [#allocation6], %s219
          %s221 = sshll.u32 [#allocation7], 4
          %s222 = int_to_ptr.vmem [resolvable:$true] %s221
          %227 = dma.hbm_to_vmem [thread:$0]  %s4, 512, %s222, [#allocation6], 64, 64, 4
        $region20: #{tpu_custom_call.1} parent=11 // pred_fallthru
          _
        // Predicated region
        $region21: #{tpu_custom_call.1} parent=11 // pred_check
          %p228 = pneg %p161
        $region22: #{tpu_custom_call.1} parent=11 // pred_check_branch
          %230 = sbr.rel (%p228) target = $region24
        $region23: #{tpu_custom_call.1} parent=11 // pred_region
          %s232 = ssub.s32 1024, 1024
          %233 = vsyncadd [#allocation9], %s232
          %s234 = sshll.u32 [#allocation8], 4
          %s235 = int_to_ptr.vmem [resolvable:$true] %s234
          %240 = dma.hbm_to_vmem [thread:$0]  %s5, 1024, %s235, [#allocation9], 128, 128, 8
        $region24: #{tpu_custom_call.1} parent=11 // pred_fallthru
          _
      $region12: #{tpu_custom_call.1} parent=5 // pred_fallthru
        _
      %p241 = scmp.lt.s32.totalorder %s20, 2
      // Predicated region
      $region25: #{tpu_custom_call.1} parent=5 // pred_check
        %p242 = pneg %p241
      $region26: #{tpu_custom_call.1} parent=5 // pred_check_branch
        %244 = sbr.rel (%p242) target = $region28
      $region27: #{tpu_custom_call.1} parent=5 // pred_region
        // Predicated region
        $region29: #{tpu_custom_call.1} parent=27 // pred_check
          %p245 = pneg %p40
        $region30: #{tpu_custom_call.1} parent=27 // pred_check_branch
          %247 = sbr.rel (%p245) target = $region32
        $region31: #{tpu_custom_call.1} parent=27 // pred_region
          %s248 = sand.u32 %s30, 1
          %s249 = scalar_lea.sflag [#allocation3], %s248
          %s250 = sand.u32 %s30, 1
          %s251 = smul.addr %s250, 8
          %s252 = scalar_lea.vmem [#allocation2], %s251
          %s254 = ssub.s32 128, 128
          %255 = vsyncadd %s249, %s254
          %s256 = smul.addr %s20, 128
          %s257 = scalar_lea.hbm %s0, %s256
          %s259 = sshll.u32 %s252, 4
          %s260 = int_to_ptr.vmem [resolvable:$true] %s259
          %262 = dma.hbm_to_vmem [thread:$0]  %s257, 128, %s260, %s249
        $region32: #{tpu_custom_call.1} parent=27 // pred_fallthru
          _
        // Predicated region
        $region33: #{tpu_custom_call.1} parent=27 // pred_check
          %p263 = pneg %p66
        $region34: #{tpu_custom_call.1} parent=27 // pred_check_branch
          %265 = sbr.rel (%p263) target = $region36
        $region35: #{tpu_custom_call.1} parent=27 // pred_region
          %p266 = scmp.lt.s32.totalorder %s20, 1
          %s267 = scalar_select %p266, %s20, 1
          %s268 = scalar_lea.vmem %s1, %s267
        $region36: #{tpu_custom_call.1} parent=27 // pred_fallthru
          _
        // Predicated region
        $region37: #{tpu_custom_call.1} parent=27 // pred_check
          %p269 = pneg %p92
        $region38: #{tpu_custom_call.1} parent=27 // pred_check_branch
          %271 = sbr.rel (%p269) target = $region40
        $region39: #{tpu_custom_call.1} parent=27 // pred_region
          %p272 = scmp.lt.s32.totalorder %s20, 1
          %s273 = scalar_select %p272, %s20, 1
          %s274 = smul.addr %s273, 4
          %s275 = scalar_lea.vmem %s2, %s274
        $region40: #{tpu_custom_call.1} parent=27 // pred_fallthru
          _
      $region28: #{tpu_custom_call.1} parent=5 // pred_fallthru
        _
      %p276 = scmp.le.s32.totalorder 1, %s20
      %p277 = scmp.lt.s32.totalorder %s20, 3
      %p278 = pnand %p276, %p277
      %p279 = pneg %p278
      // Predicated region
      $region41: #{tpu_custom_call.1} parent=5 // pred_check
        _
      $region42: #{tpu_custom_call.1} parent=5 // pred_check_branch
        %281 = sbr.rel (%p278) target = $region44
      $region43: #{tpu_custom_call.1} parent=5 // pred_region
        %s282 = ssub.s32 %s20, 1
        %s283 = sand.u32 %s33, 1
        %s284 = scalar_lea.sflag [#allocation3], %s283
        %s285 = sand.u32 %s33, 1
        %s286 = smul.addr %s285, 8
        %s287 = scalar_lea.vmem [#allocation2], %s286
        // Predicated region
        $region45: #{tpu_custom_call.1} parent=43 // pred_check
          %p288 = pneg %p46
        $region46: #{tpu_custom_call.1} parent=43 // pred_check_branch
          %290 = sbr.rel (%p288) target = $region48
        $region47: #{tpu_custom_call.1} parent=43 // pred_region
          %291 = dma.done %s284, 128
        $region48: #{tpu_custom_call.1} parent=43 // pred_fallthru
          _
        // Predicated region
        $region49: #{tpu_custom_call.1} parent=43 // pred_check
          %p292 = pneg %p119
        $region50: #{tpu_custom_call.1} parent=43 // pred_check_branch
          %294 = sbr.rel (%p292) target = $region52
        $region51: #{tpu_custom_call.1} parent=43 // pred_region
          %295 = dma.done [#allocation6], 2432
        $region52: #{tpu_custom_call.1} parent=43 // pred_fallthru
          _
        // Predicated region
        $region53: #{tpu_custom_call.1} parent=43 // pred_check
          %p296 = pneg %p140
        $region54: #{tpu_custom_call.1} parent=43 // pred_check_branch
          %298 = sbr.rel (%p296) target = $region56
        $region55: #{tpu_custom_call.1} parent=43 // pred_region
          %299 = dma.done [#allocation6], 512
        $region56: #{tpu_custom_call.1} parent=43 // pred_fallthru
          _
        // Predicated region
        $region57: #{tpu_custom_call.1} parent=43 // pred_check
          %p300 = pneg %p161
        $region58: #{tpu_custom_call.1} parent=43 // pred_check_branch
          %302 = sbr.rel (%p300) target = $region60
        $region59: #{tpu_custom_call.1} parent=43 // pred_region
          %303 = dma.done [#allocation9], 1024
        $region60: #{tpu_custom_call.1} parent=43 // pred_fallthru
          _
        %s304 = sand.u32 %s33, 1
        %s305 = scalar_lea.sflag [#allocation3], %s304
        %s306 = sand.u32 %s33, 1
        %s307 = smul.addr %s306, 8
        %s308 = scalar_lea.vmem [#allocation2], %s307
        %p309 = pneg %p46
        %p310 = pneg %p43
        %p311 = scmp.lt.s32.totalorder %s25, 1
        %s312 = scalar_select %p311, %s25, 1
        %s313 = scalar_lea.vmem %s1, %s312
        %p314 = pneg %p72
        %p315 = pneg %p69
        %p316 = scmp.lt.s32.totalorder %s25, 1
        %s317 = scalar_select %p316, %s25, 1
        %s318 = smul.addr %s317, 4
        %s319 = scalar_lea.vmem %s2, %s318
        %p320 = pneg %p98
        %p321 = pneg %p95
        %p322 = pneg %p119
        %p323 = pneg %p116
        %p324 = pneg %p140
        %p325 = pneg %p137
        %p326 = pneg %p161
        %p327 = pneg %p158
        %p328 = pneg %p187
        %p329 = pneg %p184
        %s330 = sand.u32 %s174, 1
        %s331 = scalar_lea.sflag [#allocation4], %s330
        %s332 = sand.u32 %s174, 1
        %s333 = scalar_lea.vmem [#allocation10], %s332
        %p334 = scmp.lt.s32.totalorder %s25, 1
        %s335 = scalar_select %p334, %s25, 1
        %s336 = scalar_lea.vmem %s1, %s335
        %p337 = scmp.lt.s32.totalorder %s25, 1
        %s338 = scalar_select %p337, %s25, 1
        %s339 = smul.addr %s338, 4
        %s340 = scalar_lea.vmem %s2, %s339
        %v342 = vld [vmem:[%s287] sm:$0xff]
        %v343 = vld [vmem:[%s336] sm:$0x1]
        %v344 = vld [vmem:[%s340] sm:$0x7]
        %v345 = vld [vmem:[#allocation8] sm:$0xff]
        %v346 = vld [vmem:[#allocation8 + $0x8] sm:$0xff]
        %v347 = vld [vmem:[#allocation8 + $0x10] sm:$0xff]
        %v348 = vld [vmem:[#allocation8 + $0x18] sm:$0xff]
        %v349 = vld [vmem:[#allocation8 + $0x20] sm:$0xff]
        %v350 = vld [vmem:[#allocation8 + $0x28] sm:$0xff]
        %v351 = vld [vmem:[#allocation8 + $0x30] sm:$0xff]
        %v352 = vld [vmem:[#allocation8 + $0x38] sm:$0xff]
        %v353 = vpack.c.bf16 %v342, %v342
        %v354 = vld [vmem:[#allocation5 + $0x10] sm:$0xf]
        %v355 = vld [vmem:[#allocation5 + $0x14] sm:$0xf]
        %v356 = vld [vmem:[#allocation5 + $0x18] sm:$0xf]
        %v357 = vld [vmem:[#allocation5 + $0x1c] sm:$0xf]
        %v358 = vld [vmem:[#allocation5 + $0x20] sm:$0xf]
        %v359 = vld [vmem:[#allocation5 + $0x24] sm:$0xf]
        %v360 = vlaneseq
        %v361 = vshrl.u32 %v360, 7
        %v362 = vsub.s32 0, %v361
        %v363 = vrot.slane %v347, %v362
        %v370 = vunpack.c.l.b16 %v354
        %v371 = vunpack.c.l.b16 %v355
        %v372 = vunpack.c.l.b16 %v356
        %v373 = vunpack.c.l.b16 %v357
        %v374 = vunpack.c.l.b16 %v358
        %v375 = vunpack.c.l.b16 %v359
        %v376 = vpack.c.b16 %v371, %v370
        %v377 = vpack.c.b16 %v373, %v372
        %v378 = vpack.c.b16 %v375, %v374
        %vm382 = vcmask 392192
        %v384 = vsel %vm382, %v353, 0
        %386 = vmatprep.subr.bf16.mxu0 0
        %387 = vmatpush1.bf16.msra.mxu0 0
        %388 = vmatprep.subr.bf16.mxu0 0
        %389 = vmatpush1.bf16.msra.mxu0 0
        %390 = vmatprep.subr.bf16.mxu0 0
        %391 = vmatpush1.bf16.msra.mxu0 0
        %392 = vmatprep.subr.bf16.mxu0 0
        %393 = vmatpush1.bf16.msra.mxu0 0
        %394 = vmatprep.subr.bf16.mxu0 0
        %395 = vmatpush1.bf16.msra.mxu0 0
        %396 = vmatprep.subr.bf16.mxu0 0
        %397 = vmatpush1.bf16.msra.mxu0 %v378
        %398 = vmatprep.subr.bf16.mxu0 0
        %399 = vmatpush1.bf16.msra.mxu0 %v377
        %400 = vmatprep.subr.bf16.mxu0 0
        %401 = vmatpush1.bf16.msra.mxu0 %v376
        %402 = vmatprep.subr.bf16.mxu0 0
        %403 = vmatpush2.bf16.msra.mxu0 0
        %404 = vmatprep.subr.bf16.mxu0 0
        %405 = vmatpush2.bf16.msra.mxu0 0
        %406 = vmatprep.subr.bf16.mxu0 0
        %407 = vmatpush2.bf16.msra.mxu0 0
        %408 = vmatprep.subr.bf16.mxu0 0
        %409 = vmatpush2.bf16.msra.mxu0 0
        %410 = vmatprep.subr.bf16.mxu0 0
        %411 = vmatpush2.bf16.msra.mxu0 0
        %412 = vmatprep.subr.bf16.mxu0 0
        %413 = vmatpush2.bf16.msra.mxu0 0
        %414 = vmatprep.subr.bf16.mxu0 0
        %415 = vmatpush2.bf16.msra.mxu0 0
        %416 = vmatprep.subr.bf16.mxu0 0
        %417 = vmatpush2.bf16.msra.mxu0 0
        %418 = vmatprep.mubr.bf16.mxu0 0
        %419 = vmatmul.mubr.bf16.gmra.mxu0 %v384
        %v420 = vpop.f32.mrf.mxu0
        %v421 = vadd.f32 %v363, %v420
        %v422 = vpop.f32.mrf.mxu0
        %v423 = vpop.f32.mrf.mxu0
        %v424 = vpop.f32.mrf.mxu0
        %425 = vdwg.mxu0
        %vm426 = vcmask 261120
        %v427 = vsel %vm426, %v421, 0.0
        %428 = vadd.xlane.f32.xlu0 %v427
        %v429 = vpop.xlane.xlu0 %428
        %v430 = vrcp.pop 32.0
        %v431 = vmul.f32 %v429, %v430
        %v432 = vmul.f32 %v421, %v421
        %v433 = vsel %vm426, %v432, 0.0
        %434 = vadd.xlane.f32.xlu0 %v433
        %v435 = vpop.xlane.xlu0 %434
        %v436 = vmul.f32 %v435, %v430
        %v437 = vmul.f32 %v431, %v431
        %v438 = vsub.f32 %v436, %v437
        %v439 = vsub.f32 %v421, %v431
        %v440 = vadd.f32 %v438, 1e-12
        %v441 = vrsqrt.pop %v440
        %v442 = vmul.f32 %v439, %v441
        %v443 = vlaneseq
        %v444 = vshrl.u32 %v443, 7
        %v445 = vsub.s32 1, %v444
        %v446 = vrot.slane %v347, %v445
        %v447 = vmul.f32 %v442, %v446
        %v448 = vlaneseq
        %v449 = vshrl.u32 %v448, 7
        %v450 = vsub.s32 2, %v449
        %v451 = vrot.slane %v347, %v450
        %v452 = vadd.f32 %v447, %v451
        %454 = vset.pattern.permute.xlu0 0
        %455 = vperm.xlu0 %454, %v349
        %v456 = vpop.permute.xlu0 %455
        %459 = vset.pattern.permute.xlu0 0
        %460 = vperm.xlu0 %459, %v350
        %v461 = vpop.permute.xlu0 %460
        %464 = vset.pattern.permute.xlu0 0
        %465 = vperm.xlu0 %464, %v351
        %v466 = vpop.permute.xlu0 %465
        %469 = vset.pattern.permute.xlu0 0
        %470 = vperm.xlu0 %469, %v352
        %v471 = vpop.permute.xlu0 %470
        %v473 = vlaneseq
        %v474 = vshrl.u32 %v473, 7
        %v475 = vsub.s32 0, %v474
        %v476 = vrot.slane %v344, %v475
        %v477 = vmul.f32 %v456, %v476
        %v478 = vmul.f32 %v461, %v476
        %v479 = vmul.f32 %v466, %v476
        %v480 = vmul.f32 %v471, %v476
        %481 = vset.pattern.permute.xlu0 3
        %482 = vperm.xlu0 %481, %v349
        %v483 = vpop.permute.xlu0 %482
        %485 = vset.pattern.permute.xlu0 3
        %486 = vperm.xlu0 %485, %v350
        %v487 = vpop.permute.xlu0 %486
        %489 = vset.pattern.permute.xlu0 3
        %490 = vperm.xlu0 %489, %v351
        %v491 = vpop.permute.xlu0 %490
        %493 = vset.pattern.permute.xlu0 3
        %494 = vperm.xlu0 %493, %v352
        %v495 = vpop.permute.xlu0 %494
        %v497 = vadd.f32 %v483, %v477
        %v498 = vadd.f32 %v487, %v478
        %v499 = vadd.f32 %v491, %v479
        %v500 = vadd.f32 %v495, %v480
        %501 = vset.pattern.permute.xlu0 1
        %502 = vperm.xlu0 %501, %v349
        %v503 = vpop.permute.xlu0 %502
        %505 = vset.pattern.permute.xlu0 1
        %506 = vperm.xlu0 %505, %v350
        %v507 = vpop.permute.xlu0 %506
        %509 = vset.pattern.permute.xlu0 1
        %510 = vperm.xlu0 %509, %v351
        %v511 = vpop.permute.xlu0 %510
        %513 = vset.pattern.permute.xlu0 1
        %514 = vperm.xlu0 %513, %v352
        %v515 = vpop.permute.xlu0 %514
        %v517 = vlaneseq
        %v518 = vshrl.u32 %v517, 7
        %v519 = vsub.s32 1, %v518
        %v520 = vrot.slane %v344, %v519
        %v521 = vmul.f32 %v503, %v520
        %v522 = vmul.f32 %v507, %v520
        %v523 = vmul.f32 %v511, %v520
        %v524 = vmul.f32 %v515, %v520
        %v525 = vadd.f32 %v497, %v521
        %v526 = vadd.f32 %v498, %v522
        %v527 = vadd.f32 %v499, %v523
        %v528 = vadd.f32 %v500, %v524
        %529 = vset.pattern.permute.xlu0 2
        %530 = vperm.xlu0 %529, %v349
        %v531 = vpop.permute.xlu0 %530
        %533 = vset.pattern.permute.xlu0 2
        %534 = vperm.xlu0 %533, %v350
        %v535 = vpop.permute.xlu0 %534
        %537 = vset.pattern.permute.xlu0 2
        %538 = vperm.xlu0 %537, %v351
        %v539 = vpop.permute.xlu0 %538
        %541 = vset.pattern.permute.xlu0 2
        %542 = vperm.xlu0 %541, %v352
        %v543 = vpop.permute.xlu0 %542
        %v545 = vlaneseq
        %v546 = vshrl.u32 %v545, 7
        %v547 = vsub.s32 2, %v546
        %v548 = vrot.slane %v344, %v547
        %v549 = vmul.f32 %v531, %v548
        %v550 = vmul.f32 %v535, %v548
        %v551 = vmul.f32 %v539, %v548
        %v552 = vmul.f32 %v543, %v548
        %v553 = vadd.f32 %v525, %v549
        %v554 = vadd.f32 %v526, %v550
        %v555 = vadd.f32 %v527, %v551
        %v556 = vadd.f32 %v528, %v552
        %v557 = vmax.f32 %v553, 0.0
        %v558 = vmax.f32 %v554, 0.0
        %v559 = vmax.f32 %v555, 0.0
        %v560 = vmax.f32 %v556, 0.0
        %v561 = vld [vmem:[#allocation5 + $0x58] sm:$0xf]
        %v562 = vld [vmem:[#allocation5 + $0x5c] sm:$0xf]
        %v563 = vld [vmem:[#allocation5 + $0x60] sm:$0xf]
        %v564 = vld [vmem:[#allocation5 + $0x64] sm:$0xf]
        %v565 = vpack.c.bf16 %v558, %v557
        %v566 = vpack.c.bf16 %v560, %v559
        %567 = vset.pattern.permute.xlu0 4
        %568 = vperm.xlu0 %567, %v349
        %v569 = vpop.permute.xlu0 %568
        %571 = vset.pattern.permute.xlu0 4
        %572 = vperm.xlu0 %571, %v350
        %v573 = vpop.permute.xlu0 %572
        %575 = vset.pattern.permute.xlu0 4
        %576 = vperm.xlu0 %575, %v351
        %v577 = vpop.permute.xlu0 %576
        %579 = vset.pattern.permute.xlu0 4
        %580 = vperm.xlu0 %579, %v352
        %v581 = vpop.permute.xlu0 %580
        %v587 = vunpack.c.l.b16 %v561
        %v588 = vunpack.c.l.b16 %v562
        %v589 = vunpack.c.l.b16 %v563
        %v590 = vunpack.c.l.b16 %v564
        %v591 = vpack.c.b16 %v588, %v587
        %v592 = vpack.c.b16 %v590, %v589
        %v594 = vsel %vm426, %v591, 0
        %v597 = vsel %vm426, %v592, 0
        %599 = vmatprep.subr.bf16.mxu0 0
        %600 = vmatpush1.bf16.msra.mxu0 0
        %601 = vmatprep.subr.bf16.mxu0 0
        %602 = vmatpush1.bf16.msra.mxu0 0
        %603 = vmatprep.subr.bf16.mxu0 0
        %604 = vmatpush1.bf16.msra.mxu0 0
        %605 = vmatprep.subr.bf16.mxu0 0
        %606 = vmatpush1.bf16.msra.mxu0 0
        %607 = vmatprep.subr.bf16.mxu0 0
        %608 = vmatpush1.bf16.msra.mxu0 0
        %609 = vmatprep.subr.bf16.mxu0 0
        %610 = vmatpush1.bf16.msra.mxu0 0
        %611 = vmatprep.subr.bf16.mxu0 0
        %612 = vmatpush1.bf16.msra.mxu0 %v566
        %613 = vmatprep.subr.bf16.mxu0 0
        %614 = vmatpush1.bf16.msra.mxu0 %v565
        %615 = vmatprep.subr.bf16.mxu0 0
        %616 = vmatpush2.bf16.msra.mxu0 0
        %617 = vmatprep.subr.bf16.mxu0 0
        %618 = vmatpush2.bf16.msra.mxu0 0
        %619 = vmatprep.subr.bf16.mxu0 0
        %620 = vmatpush2.bf16.msra.mxu0 0
        %621 = vmatprep.subr.bf16.mxu0 0
        %622 = vmatpush2.bf16.msra.mxu0 0
        %623 = vmatprep.subr.bf16.mxu0 0
        %624 = vmatpush2.bf16.msra.mxu0 0
        %625 = vmatprep.subr.bf16.mxu0 0
        %626 = vmatpush2.bf16.msra.mxu0 0
        %627 = vmatprep.subr.bf16.mxu0 0
        %628 = vmatpush2.bf16.msra.mxu0 0
        %629 = vmatprep.subr.bf16.mxu0 0
        %630 = vmatpush2.bf16.msra.mxu0 0
        %631 = vmatprep.mubr.bf16.mxu0 0
        %632 = vmatmul.mubr.bf16.gmra.mxu0 %v594
        %v633 = vpop.f32.mrf.mxu0
        %v634 = vadd.f32 %v569, %v633
        %v635 = vpop.f32.mrf.mxu0
        %v636 = vpop.f32.mrf.mxu0
        %v637 = vadd.f32 %v573, %v636
        %v638 = vpop.f32.mrf.mxu0
        %639 = vmatprep.mubr.bf16.mxu0 0
        %640 = vmatmul.mubr.bf16.gmra.mxu0 %v597
        %v641 = vpop.f32.mrf.mxu0
        %v642 = vadd.f32 %v577, %v641
        %v643 = vpop.f32.mrf.mxu0
        %v644 = vpop.f32.mrf.mxu0
        %v645 = vadd.f32 %v581, %v644
        %v646 = vpop.f32.mrf.mxu0
        %647 = vdwg.mxu0
        %v648 = vpack.c.bf16 %v637, %v634
        %v649 = vpack.c.bf16 %v645, %v642
        %v650 = vsub.f32 %v343, 1.0
        %v651 = vmul.f32 %v650, 1e+09
        %v652 = vpack.c.bf16 %v452, %v452
        %v653 = vld [vmem:[#allocation5] sm:$0xf]
        %v654 = vld [vmem:[#allocation5 + $0x4] sm:$0xf]
        %v655 = vld [vmem:[#allocation5 + $0x8] sm:$0xf]
        %v656 = vld [vmem:[#allocation5 + $0xc] sm:$0xf]
        %v661 = vunpack.c.l.b16 %v653
        %v662 = vunpack.c.l.b16 %v654
        %v663 = vunpack.c.l.b16 %v655
        %v664 = vunpack.c.l.b16 %v656
        %v665 = vpack.c.b16 %v662, %v661
        %v666 = vpack.c.b16 %v664, %v663
        %v670 = vsel %vm426, %v652, 0
        %672 = vmatprep.subr.bf16.mxu0 0
        %673 = vmatpush1.bf16.msra.mxu0 0
        %674 = vmatprep.subr.bf16.mxu0 0
        %675 = vmatpush1.bf16.msra.mxu0 0
        %676 = vmatprep.subr.bf16.mxu0 0
        %677 = vmatpush1.bf16.msra.mxu0 0
        %678 = vmatprep.subr.bf16.mxu0 0
        %679 = vmatpush1.bf16.msra.mxu0 0
        %680 = vmatprep.subr.bf16.mxu0 0
        %681 = vmatpush1.bf16.msra.mxu0 0
        %682 = vmatprep.subr.bf16.mxu0 0
        %683 = vmatpush1.bf16.msra.mxu0 0
        %684 = vmatprep.subr.bf16.mxu0 0
        %685 = vmatpush1.bf16.msra.mxu0 %v666
        %686 = vmatprep.subr.bf16.mxu0 0
        %687 = vmatpush1.bf16.msra.mxu0 %v665
        %688 = vmatprep.subr.bf16.mxu0 0
        %689 = vmatpush2.bf16.msra.mxu0 0
        %690 = vmatprep.subr.bf16.mxu0 0
        %691 = vmatpush2.bf16.msra.mxu0 0
        %692 = vmatprep.subr.bf16.mxu0 0
        %693 = vmatpush2.bf16.msra.mxu0 0
        %694 = vmatprep.subr.bf16.mxu0 0
        %695 = vmatpush2.bf16.msra.mxu0 0
        %696 = vmatprep.subr.bf16.mxu0 0
        %697 = vmatpush2.bf16.msra.mxu0 0
        %698 = vmatprep.subr.bf16.mxu0 0
        %699 = vmatpush2.bf16.msra.mxu0 0
        %700 = vmatprep.subr.bf16.mxu0 0
        %701 = vmatpush2.bf16.msra.mxu0 0
        %702 = vmatprep.subr.bf16.mxu0 0
        %703 = vmatpush2.bf16.msra.mxu0 0
        %704 = vmatprep.mubr.bf16.mxu0 0
        %705 = vmatmul.mubr.bf16.gmra.mxu0 %v670
        %v706 = vpop.f32.mrf.mxu0
        %v707 = vadd.f32 %v345, %v706
        %v708 = vpop.f32.mrf.mxu0
        %v709 = vpop.f32.mrf.mxu0
        %v710 = vpop.f32.mrf.mxu0
        %711 = vdwg.mxu0
        %713 = vrot.lane.b32.xlu0 %v707, 120
        %v714 = vpop.permute.xlu0 %713
        %716 = vrot.lane.b32.xlu0 %v707, 112
        %v717 = vpop.permute.xlu0 %716
        %719 = vrot.lane.b32.xlu0 %v707, 104
        %v720 = vpop.permute.xlu0 %719
        %v722 = vpack.c.bf16 %v707, %v707
        %v723 = vpack.c.bf16 %v714, %v714
        %v724 = vpack.c.bf16 %v717, %v717
        %v725 = vpack.c.bf16 %v720, %v720
        %v727 = vlaneseq
        %v728 = vshrl.u32 %v727, 7
        %v729 = vsub.s32 0, %v728
        %v730 = vrot.slane %v651, %v729
        %733 = vrot.lane.b32.xlu0 %v722, 96
        %v734 = vpop.permute.xlu0 %733
        %vm735 = vcmask 64512
        %v737 = vsel %vm735, %v722, 0
        %v740 = vsel %vm735, %v734, 0
        %742 = vmatprep.subr.bf16.mxu0 0
        %743 = vmatpush1.bf16.xpose.msra.mxu0 0
        %744 = vmatprep.subr.bf16.mxu0 0
        %745 = vmatpush1.bf16.xpose.msra.mxu0 0
        %746 = vmatprep.subr.bf16.mxu0 0
        %747 = vmatpush1.bf16.xpose.msra.mxu0 0
        %748 = vmatprep.subr.bf16.mxu0 0
        %749 = vmatpush1.bf16.xpose.msra.mxu0 0
        %750 = vmatprep.subr.bf16.mxu0 0
        %751 = vmatpush1.bf16.xpose.msra.mxu0 0
        %752 = vmatprep.subr.bf16.mxu0 0
        %753 = vmatpush1.bf16.xpose.msra.mxu0 0
        %754 = vmatprep.subr.bf16.mxu0 0
        %755 = vmatpush1.bf16.xpose.msra.mxu0 0
        %756 = vmatprep.subr.bf16.mxu0 0
        %757 = vmatpush1.bf16.xpose.msra.mxu0 %v740
        %758 = vmatprep.subr.bf16.mxu0 0
        %759 = vmatpush2.bf16.xpose.msra.mxu0 0
        %760 = vmatprep.subr.bf16.mxu0 0
        %761 = vmatpush2.bf16.xpose.msra.mxu0 0
        %762 = vmatprep.subr.bf16.mxu0 0
        %763 = vmatpush2.bf16.xpose.msra.mxu0 0
        %764 = vmatprep.subr.bf16.mxu0 0
        %765 = vmatpush2.bf16.xpose.msra.mxu0 0
        %766 = vmatprep.subr.bf16.mxu0 0
        %767 = vmatpush2.bf16.xpose.msra.mxu0 0
        %768 = vmatprep.subr.bf16.mxu0 0
        %769 = vmatpush2.bf16.xpose.msra.mxu0 0
        %770 = vmatprep.subr.bf16.mxu0 0
        %771 = vmatpush2.bf16.xpose.msra.mxu0 0
        %772 = vmatprep.subr.bf16.mxu0 0
        %773 = vmatpush2.bf16.xpose.msra.mxu0 0
        %774 = vmatprep.mubr.bf16.mxu0 0
        %775 = vmatmul.mubr.bf16.gmra.mxu0 %v737
        %v776 = vpop.f32.mrf.mxu0
        %v777 = vadd.f32 %v730, %v776
        %v778 = vpop.f32.mrf.mxu0
        %v779 = vpop.f32.mrf.mxu0
        %v780 = vpop.f32.mrf.mxu0
        %781 = vdwg.mxu0
        %783 = vrot.lane.b32.xlu0 %v723, 96
        %v784 = vpop.permute.xlu0 %783
        %v786 = vsel %vm735, %v723, 0
        %v789 = vsel %vm735, %v784, 0
        %791 = vmatprep.subr.bf16.mxu0 0
        %792 = vmatpush1.bf16.xpose.msra.mxu0 0
        %793 = vmatprep.subr.bf16.mxu0 0
        %794 = vmatpush1.bf16.xpose.msra.mxu0 0
        %795 = vmatprep.subr.bf16.mxu0 0
        %796 = vmatpush1.bf16.xpose.msra.mxu0 0
        %797 = vmatprep.subr.bf16.mxu0 0
        %798 = vmatpush1.bf16.xpose.msra.mxu0 0
        %799 = vmatprep.subr.bf16.mxu0 0
        %800 = vmatpush1.bf16.xpose.msra.mxu0 0
        %801 = vmatprep.subr.bf16.mxu0 0
        %802 = vmatpush1.bf16.xpose.msra.mxu0 0
        %803 = vmatprep.subr.bf16.mxu0 0
        %804 = vmatpush1.bf16.xpose.msra.mxu0 0
        %805 = vmatprep.subr.bf16.mxu0 0
        %806 = vmatpush1.bf16.xpose.msra.mxu0 %v789
        %807 = vmatprep.subr.bf16.mxu0 0
        %808 = vmatpush2.bf16.xpose.msra.mxu0 0
        %809 = vmatprep.subr.bf16.mxu0 0
        %810 = vmatpush2.bf16.xpose.msra.mxu0 0
        %811 = vmatprep.subr.bf16.mxu0 0
        %812 = vmatpush2.bf16.xpose.msra.mxu0 0
        %813 = vmatprep.subr.bf16.mxu0 0
        %814 = vmatpush2.bf16.xpose.msra.mxu0 0
        %815 = vmatprep.subr.bf16.mxu0 0
        %816 = vmatpush2.bf16.xpose.msra.mxu0 0
        %817 = vmatprep.subr.bf16.mxu0 0
        %818 = vmatpush2.bf16.xpose.msra.mxu0 0
        %819 = vmatprep.subr.bf16.mxu0 0
        %820 = vmatpush2.bf16.xpose.msra.mxu0 0
        %821 = vmatprep.subr.bf16.mxu0 0
        %822 = vmatpush2.bf16.xpose.msra.mxu0 0
        %823 = vmatprep.mubr.bf16.mxu0 0
        %824 = vmatmul.mubr.bf16.gmra.mxu0 %v786
        %v825 = vpop.f32.mrf.mxu0
        %v826 = vadd.f32 %v730, %v825
        %v827 = vpop.f32.mrf.mxu0
        %v828 = vpop.f32.mrf.mxu0
        %v829 = vpop.f32.mrf.mxu0
        %830 = vdwg.mxu0
        %832 = vrot.lane.b32.xlu0 %v724, 96
        %v833 = vpop.permute.xlu0 %832
        %v835 = vsel %vm735, %v724, 0
        %v838 = vsel %vm735, %v833, 0
        %840 = vmatprep.subr.bf16.mxu0 0
        %841 = vmatpush1.bf16.xpose.msra.mxu0 0
        %842 = vmatprep.subr.bf16.mxu0 0
        %843 = vmatpush1.bf16.xpose.msra.mxu0 0
        %844 = vmatprep.subr.bf16.mxu0 0
        %845 = vmatpush1.bf16.xpose.msra.mxu0 0
        %846 = vmatprep.subr.bf16.mxu0 0
        %847 = vmatpush1.bf16.xpose.msra.mxu0 0
        %848 = vmatprep.subr.bf16.mxu0 0
        %849 = vmatpush1.bf16.xpose.msra.mxu0 0
        %850 = vmatprep.subr.bf16.mxu0 0
        %851 = vmatpush1.bf16.xpose.msra.mxu0 0
        %852 = vmatprep.subr.bf16.mxu0 0
        %853 = vmatpush1.bf16.xpose.msra.mxu0 0
        %854 = vmatprep.subr.bf16.mxu0 0
        %855 = vmatpush1.bf16.xpose.msra.mxu0 %v838
        %856 = vmatprep.subr.bf16.mxu0 0
        %857 = vmatpush2.bf16.xpose.msra.mxu0 0
        %858 = vmatprep.subr.bf16.mxu0 0
        %859 = vmatpush2.bf16.xpose.msra.mxu0 0
        %860 = vmatprep.subr.bf16.mxu0 0
        %861 = vmatpush2.bf16.xpose.msra.mxu0 0
        %862 = vmatprep.subr.bf16.mxu0 0
        %863 = vmatpush2.bf16.xpose.msra.mxu0 0
        %864 = vmatprep.subr.bf16.mxu0 0
        %865 = vmatpush2.bf16.xpose.msra.mxu0 0
        %866 = vmatprep.subr.bf16.mxu0 0
        %867 = vmatpush2.bf16.xpose.msra.mxu0 0
        %868 = vmatprep.subr.bf16.mxu0 0
        %869 = vmatpush2.bf16.xpose.msra.mxu0 0
        %870 = vmatprep.subr.bf16.mxu0 0
        %871 = vmatpush2.bf16.xpose.msra.mxu0 0
        %872 = vmatprep.mubr.bf16.mxu0 0
        %873 = vmatmul.mubr.bf16.gmra.mxu0 %v835
        %v874 = vpop.f32.mrf.mxu0
        %v875 = vadd.f32 %v730, %v874
        %v876 = vpop.f32.mrf.mxu0
        %v877 = vpop.f32.mrf.mxu0
        %v878 = vpop.f32.mrf.mxu0
        %879 = vdwg.mxu0
        %881 = vrot.lane.b32.xlu0 %v725, 96
        %v882 = vpop.permute.xlu0 %881
        %v884 = vsel %vm735, %v725, 0
        %v887 = vsel %vm735, %v882, 0
        %889 = vmatprep.subr.bf16.mxu0 0
        %890 = vmatpush1.bf16.xpose.msra.mxu0 0
        %891 = vmatprep.subr.bf16.mxu0 0
        %892 = vmatpush1.bf16.xpose.msra.mxu0 0
        %893 = vmatprep.subr.bf16.mxu0 0
        %894 = vmatpush1.bf16.xpose.msra.mxu0 0
        %895 = vmatprep.subr.bf16.mxu0 0
        %896 = vmatpush1.bf16.xpose.msra.mxu0 0
        %897 = vmatprep.subr.bf16.mxu0 0
        %898 = vmatpush1.bf16.xpose.msra.mxu0 0
        %899 = vmatprep.subr.bf16.mxu0 0
        %900 = vmatpush1.bf16.xpose.msra.mxu0 0
        %901 = vmatprep.subr.bf16.mxu0 0
        %902 = vmatpush1.bf16.xpose.msra.mxu0 0
        %903 = vmatprep.subr.bf16.mxu0 0
        %904 = vmatpush1.bf16.xpose.msra.mxu0 %v887
        %905 = vmatprep.subr.bf16.mxu0 0
        %906 = vmatpush2.bf16.xpose.msra.mxu0 0
        %907 = vmatprep.subr.bf16.mxu0 0
        %908 = vmatpush2.bf16.xpose.msra.mxu0 0
        %909 = vmatprep.subr.bf16.mxu0 0
        %910 = vmatpush2.bf16.xpose.msra.mxu0 0
        %911 = vmatprep.subr.bf16.mxu0 0
        %912 = vmatpush2.bf16.xpose.msra.mxu0 0
        %913 = vmatprep.subr.bf16.mxu0 0
        %914 = vmatpush2.bf16.xpose.msra.mxu0 0
        %915 = vmatprep.subr.bf16.mxu0 0
        %916 = vmatpush2.bf16.xpose.msra.mxu0 0
        %917 = vmatprep.subr.bf16.mxu0 0
        %918 = vmatpush2.bf16.xpose.msra.mxu0 0
        %919 = vmatprep.subr.bf16.mxu0 0
        %920 = vmatpush2.bf16.xpose.msra.mxu0 0
        %921 = vmatprep.mubr.bf16.mxu0 0
        %922 = vmatmul.mubr.bf16.gmra.mxu0 %v884
        %v923 = vpop.f32.mrf.mxu0
        %v924 = vadd.f32 %v730, %v923
        %v925 = vpop.f32.mrf.mxu0
        %v926 = vpop.f32.mrf.mxu0
        %v927 = vpop.f32.mrf.mxu0
        %928 = vdwg.mxu0
        %v929 = vsel %vm735, %v777, -inf
        %930 = vmax.xlane.f32.xlu0 %v929
        %v931 = vpop.xlane.xlu0 %930
        %v932 = vsel %vm735, %v826, -inf
        %933 = vmax.xlane.f32.xlu0 %v932
        %v934 = vpop.xlane.xlu0 %933
        %v935 = vsel %vm735, %v875, -inf
        %936 = vmax.xlane.f32.xlu0 %v935
        %v937 = vpop.xlane.xlu0 %936
        %v938 = vsel %vm735, %v924, -inf
        %939 = vmax.xlane.f32.xlu0 %v938
        %v940 = vpop.xlane.xlu0 %939
        %v941 = vsub.f32 %v777, %v931
        %v942 = vsub.f32 %v826, %v934
        %v943 = vsub.f32 %v875, %v937
        %v944 = vsub.f32 %v924, %v940
        %v945 = vmul.f32 %v941, 1.442695
        %v946 = vpow.pop %v945
        %v947 = vmul.f32 %v942, 1.442695
        %v948 = vpow.pop %v947
        %v949 = vmul.f32 %v943, 1.442695
        %v950 = vpow.pop %v949
        %v951 = vmul.f32 %v944, 1.442695
        %v952 = vpow.pop %v951
        %v953 = vsel %vm735, %v946, 0.0
        %954 = vadd.xlane.f32.xlu0 %v953
        %v955 = vpop.xlane.xlu0 %954
        %v956 = vsel %vm735, %v948, 0.0
        %957 = vadd.xlane.f32.xlu0 %v956
        %v958 = vpop.xlane.xlu0 %957
        %v959 = vsel %vm735, %v950, 0.0
        %960 = vadd.xlane.f32.xlu0 %v959
        %v961 = vpop.xlane.xlu0 %960
        %v962 = vsel %vm735, %v952, 0.0
        %963 = vadd.xlane.f32.xlu0 %v962
        %v964 = vpop.xlane.xlu0 %963
        %v965 = vrcp.pop %v955
        %v966 = vrcp.pop %v958
        %v967 = vrcp.pop %v961
        %v968 = vrcp.pop %v964
        %v969 = vmul.f32 %v946, %v965
        %v970 = vmul.f32 %v948, %v966
        %v971 = vmul.f32 %v950, %v967
        %v972 = vmul.f32 %v952, %v968
        %v973 = vpack.c.bf16 %v969, %v969
        %v974 = vpack.c.bf16 %v970, %v970
        %v975 = vpack.c.bf16 %v971, %v971
        %v976 = vpack.c.bf16 %v972, %v972
        %977 = vrot.lane.b32.xlu0 %v722, 64
        %v978 = vpop.permute.xlu0 %977
        %v980 = vsel %vm735, %v973, 0
        %vm982 = vcmask 1043456
        %v984 = vsel %vm982, %v978, 0
        %986 = vmatprep.subr.bf16.mxu0 0
        %987 = vmatpush1.bf16.msra.mxu0 0
        %988 = vmatprep.subr.bf16.mxu0 0
        %989 = vmatpush1.bf16.msra.mxu0 0
        %990 = vmatprep.subr.bf16.mxu0 0
        %991 = vmatpush1.bf16.msra.mxu0 0
        %992 = vmatprep.subr.bf16.mxu0 0
        %993 = vmatpush1.bf16.msra.mxu0 0
        %994 = vmatprep.subr.bf16.mxu0 0
        %995 = vmatpush1.bf16.msra.mxu0 0
        %996 = vmatprep.subr.bf16.mxu0 0
        %997 = vmatpush1.bf16.msra.mxu0 0
        %998 = vmatprep.subr.bf16.mxu0 0
        %999 = vmatpush1.bf16.msra.mxu0 0
        %1000 = vmatprep.subr.bf16.mxu0 0
        %1001 = vmatpush1.bf16.msra.mxu0 %v984
        %1002 = vmatprep.subr.bf16.mxu0 0
        %1003 = vmatpush2.bf16.msra.mxu0 0
        %1004 = vmatprep.subr.bf16.mxu0 0
        %1005 = vmatpush2.bf16.msra.mxu0 0
        %1006 = vmatprep.subr.bf16.mxu0 0
        %1007 = vmatpush2.bf16.msra.mxu0 0
        %1008 = vmatprep.subr.bf16.mxu0 0
        %1009 = vmatpush2.bf16.msra.mxu0 0
        %1010 = vmatprep.subr.bf16.mxu0 0
        %1011 = vmatpush2.bf16.msra.mxu0 0
        %1012 = vmatprep.subr.bf16.mxu0 0
        %1013 = vmatpush2.bf16.msra.mxu0 0
        %1014 = vmatprep.subr.bf16.mxu0 0
        %1015 = vmatpush2.bf16.msra.mxu0 0
        %1016 = vmatprep.subr.bf16.mxu0 0
        %1017 = vmatpush2.bf16.msra.mxu0 0
        %1018 = vmatprep.mubr.bf16.mxu0 0
        %1019 = vmatmul.mubr.bf16.gmra.mxu0 %v980
        %v1020 = vpop.f32.mrf.mxu0
        %v1021 = vadd.f32 0.0, %v1020
        %v1022 = vpop.f32.mrf.mxu0
        %v1023 = vpop.f32.mrf.mxu0
        %v1024 = vpop.f32.mrf.mxu0
        %1025 = vdwg.mxu0
        %1026 = vrot.lane.b32.xlu0 %v723, 64
        %v1027 = vpop.permute.xlu0 %1026
        %v1029 = vsel %vm735, %v974, 0
        %v1032 = vsel %vm982, %v1027, 0
        %1034 = vmatprep.subr.bf16.mxu0 0
        %1035 = vmatpush1.bf16.msra.mxu0 0
        %1036 = vmatprep.subr.bf16.mxu0 0
        %1037 = vmatpush1.bf16.msra.mxu0 0
        %1038 = vmatprep.subr.bf16.mxu0 0
        %1039 = vmatpush1.bf16.msra.mxu0 0
        %1040 = vmatprep.subr.bf16.mxu0 0
        %1041 = vmatpush1.bf16.msra.mxu0 0
        %1042 = vmatprep.subr.bf16.mxu0 0
        %1043 = vmatpush1.bf16.msra.mxu0 0
        %1044 = vmatprep.subr.bf16.mxu0 0
        %1045 = vmatpush1.bf16.msra.mxu0 0
        %1046 = vmatprep.subr.bf16.mxu0 0
        %1047 = vmatpush1.bf16.msra.mxu0 0
        %1048 = vmatprep.subr.bf16.mxu0 0
        %1049 = vmatpush1.bf16.msra.mxu0 %v1032
        %1050 = vmatprep.subr.bf16.mxu0 0
        %1051 = vmatpush2.bf16.msra.mxu0 0
        %1052 = vmatprep.subr.bf16.mxu0 0
        %1053 = vmatpush2.bf16.msra.mxu0 0
        %1054 = vmatprep.subr.bf16.mxu0 0
        %1055 = vmatpush2.bf16.msra.mxu0 0
        %1056 = vmatprep.subr.bf16.mxu0 0
        %1057 = vmatpush2.bf16.msra.mxu0 0
        %1058 = vmatprep.subr.bf16.mxu0 0
        %1059 = vmatpush2.bf16.msra.mxu0 0
        %1060 = vmatprep.subr.bf16.mxu0 0
        %1061 = vmatpush2.bf16.msra.mxu0 0
        %1062 = vmatprep.subr.bf16.mxu0 0
        %1063 = vmatpush2.bf16.msra.mxu0 0
        %1064 = vmatprep.subr.bf16.mxu0 0
        %1065 = vmatpush2.bf16.msra.mxu0 0
        %1066 = vmatprep.mubr.bf16.mxu0 0
        %1067 = vmatmul.mubr.bf16.gmra.mxu0 %v1029
        %v1068 = vpop.f32.mrf.mxu0
        %v1069 = vadd.f32 0.0, %v1068
        %v1070 = vpop.f32.mrf.mxu0
        %v1071 = vpop.f32.mrf.mxu0
        %v1072 = vpop.f32.mrf.mxu0
        %1073 = vdwg.mxu0
        %1074 = vrot.lane.b32.xlu0 %v724, 64
        %v1075 = vpop.permute.xlu0 %1074
        %v1077 = vsel %vm735, %v975, 0
        %v1080 = vsel %vm982, %v1075, 0
        %1082 = vmatprep.subr.bf16.mxu0 0
        %1083 = vmatpush1.bf16.msra.mxu0 0
        %1084 = vmatprep.subr.bf16.mxu0 0
        %1085 = vmatpush1.bf16.msra.mxu0 0
        %1086 = vmatprep.subr.bf16.mxu0 0
        %1087 = vmatpush1.bf16.msra.mxu0 0
        %1088 = vmatprep.subr.bf16.mxu0 0
        %1089 = vmatpush1.bf16.msra.mxu0 0
        %1090 = vmatprep.subr.bf16.mxu0 0
        %1091 = vmatpush1.bf16.msra.mxu0 0
        %1092 = vmatprep.subr.bf16.mxu0 0
        %1093 = vmatpush1.bf16.msra.mxu0 0
        %1094 = vmatprep.subr.bf16.mxu0 0
        %1095 = vmatpush1.bf16.msra.mxu0 0
        %1096 = vmatprep.subr.bf16.mxu0 0
        %1097 = vmatpush1.bf16.msra.mxu0 %v1080
        %1098 = vmatprep.subr.bf16.mxu0 0
        %1099 = vmatpush2.bf16.msra.mxu0 0
        %1100 = vmatprep.subr.bf16.mxu0 0
        %1101 = vmatpush2.bf16.msra.mxu0 0
        %1102 = vmatprep.subr.bf16.mxu0 0
        %1103 = vmatpush2.bf16.msra.mxu0 0
        %1104 = vmatprep.subr.bf16.mxu0 0
        %1105 = vmatpush2.bf16.msra.mxu0 0
        %1106 = vmatprep.subr.bf16.mxu0 0
        %1107 = vmatpush2.bf16.msra.mxu0 0
        %1108 = vmatprep.subr.bf16.mxu0 0
        %1109 = vmatpush2.bf16.msra.mxu0 0
        %1110 = vmatprep.subr.bf16.mxu0 0
        %1111 = vmatpush2.bf16.msra.mxu0 0
        %1112 = vmatprep.subr.bf16.mxu0 0
        %1113 = vmatpush2.bf16.msra.mxu0 0
        %1114 = vmatprep.mubr.bf16.mxu0 0
        %1115 = vmatmul.mubr.bf16.gmra.mxu0 %v1077
        %v1116 = vpop.f32.mrf.mxu0
        %v1117 = vadd.f32 0.0, %v1116
        %v1118 = vpop.f32.mrf.mxu0
        %v1119 = vpop.f32.mrf.mxu0
        %v1120 = vpop.f32.mrf.mxu0
        %1121 = vdwg.mxu0
        %1122 = vrot.lane.b32.xlu0 %v725, 64
        %v1123 = vpop.permute.xlu0 %1122
        %v1125 = vsel %vm735, %v976, 0
        %v1128 = vsel %vm982, %v1123, 0
        %1130 = vmatprep.subr.bf16.mxu0 0
        %1131 = vmatpush1.bf16.msra.mxu0 0
        %1132 = vmatprep.subr.bf16.mxu0 0
        %1133 = vmatpush1.bf16.msra.mxu0 0
        %1134 = vmatprep.subr.bf16.mxu0 0
        %1135 = vmatpush1.bf16.msra.mxu0 0
        %1136 = vmatprep.subr.bf16.mxu0 0
        %1137 = vmatpush1.bf16.msra.mxu0 0
        %1138 = vmatprep.subr.bf16.mxu0 0
        %1139 = vmatpush1.bf16.msra.mxu0 0
        %1140 = vmatprep.subr.bf16.mxu0 0
        %1141 = vmatpush1.bf16.msra.mxu0 0
        %1142 = vmatprep.subr.bf16.mxu0 0
        %1143 = vmatpush1.bf16.msra.mxu0 0
        %1144 = vmatprep.subr.bf16.mxu0 0
        %1145 = vmatpush1.bf16.msra.mxu0 %v1128
        %1146 = vmatprep.subr.bf16.mxu0 0
        %1147 = vmatpush2.bf16.msra.mxu0 0
        %1148 = vmatprep.subr.bf16.mxu0 0
        %1149 = vmatpush2.bf16.msra.mxu0 0
        %1150 = vmatprep.subr.bf16.mxu0 0
        %1151 = vmatpush2.bf16.msra.mxu0 0
        %1152 = vmatprep.subr.bf16.mxu0 0
        %1153 = vmatpush2.bf16.msra.mxu0 0
        %1154 = vmatprep.subr.bf16.mxu0 0
        %1155 = vmatpush2.bf16.msra.mxu0 0
        %1156 = vmatprep.subr.bf16.mxu0 0
        %1157 = vmatpush2.bf16.msra.mxu0 0
        %1158 = vmatprep.subr.bf16.mxu0 0
        %1159 = vmatpush2.bf16.msra.mxu0 0
        %1160 = vmatprep.subr.bf16.mxu0 0
        %1161 = vmatpush2.bf16.msra.mxu0 0
        %1162 = vmatprep.mubr.bf16.mxu0 0
        %1163 = vmatmul.mubr.bf16.gmra.mxu0 %v1125
        %v1164 = vpop.f32.mrf.mxu0
        %v1165 = vadd.f32 0.0, %v1164
        %v1166 = vpop.f32.mrf.mxu0
        %v1167 = vpop.f32.mrf.mxu0
        %v1168 = vpop.f32.mrf.mxu0
        %1169 = vdwg.mxu0
        %v1170 = vpack.c.bf16 %v1021, %v1021
        %v1171 = vpack.c.bf16 %v1069, %v1069
        %v1172 = vpack.c.bf16 %v1117, %v1117
        %v1173 = vpack.c.bf16 %v1165, %v1165
        %v1174 = vld [vmem:[#allocation7] sm:$0xf]
        %v1175 = vld [vmem:[#allocation7 + $0x4] sm:$0xf]
        %v1176 = vld [vmem:[#allocation7 + $0x8] sm:$0xf]
        %v1177 = vld [vmem:[#allocation7 + $0xc] sm:$0xf]
        %v1179 = vsel %vm735, %v1170, 0
        %v1182 = vsel %vm982, %v1174, 0
        %1184 = vmatprep.subr.bf16.mxu0 0
        %1185 = vmatpush1.bf16.msra.mxu0 0
        %1186 = vmatprep.subr.bf16.mxu0 0
        %1187 = vmatpush1.bf16.msra.mxu0 0
        %1188 = vmatprep.subr.bf16.mxu0 0
        %1189 = vmatpush1.bf16.msra.mxu0 0
        %1190 = vmatprep.subr.bf16.mxu0 0
        %1191 = vmatpush1.bf16.msra.mxu0 0
        %1192 = vmatprep.subr.bf16.mxu0 0
        %1193 = vmatpush1.bf16.msra.mxu0 0
        %1194 = vmatprep.subr.bf16.mxu0 0
        %1195 = vmatpush1.bf16.msra.mxu0 0
        %1196 = vmatprep.subr.bf16.mxu0 0
        %1197 = vmatpush1.bf16.msra.mxu0 0
        %1198 = vmatprep.subr.bf16.mxu0 0
        %1199 = vmatpush1.bf16.msra.mxu0 %v1182
        %1200 = vmatprep.subr.bf16.mxu0 0
        %1201 = vmatpush2.bf16.msra.mxu0 0
        %1202 = vmatprep.subr.bf16.mxu0 0
        %1203 = vmatpush2.bf16.msra.mxu0 0
        %1204 = vmatprep.subr.bf16.mxu0 0
        %1205 = vmatpush2.bf16.msra.mxu0 0
        %1206 = vmatprep.subr.bf16.mxu0 0
        %1207 = vmatpush2.bf16.msra.mxu0 0
        %1208 = vmatprep.subr.bf16.mxu0 0
        %1209 = vmatpush2.bf16.msra.mxu0 0
        %1210 = vmatprep.subr.bf16.mxu0 0
        %1211 = vmatpush2.bf16.msra.mxu0 0
        %1212 = vmatprep.subr.bf16.mxu0 0
        %1213 = vmatpush2.bf16.msra.mxu0 0
        %1214 = vmatprep.subr.bf16.mxu0 0
        %1215 = vmatpush2.bf16.msra.mxu0 0
        %1216 = vmatprep.mubr.bf16.mxu0 0
        %1217 = vmatmul.mubr.bf16.gmra.mxu0 %v1179
        %v1218 = vpop.f32.mrf.mxu0
        %v1219 = vadd.f32 0.0, %v1218
        %v1220 = vpop.f32.mrf.mxu0
        %v1221 = vpop.f32.mrf.mxu0
        %v1222 = vpop.f32.mrf.mxu0
        %1223 = vdwg.mxu0
        %v1225 = vsel %vm735, %v1171, 0
        %v1228 = vsel %vm982, %v1175, 0
        %1230 = vmatprep.subr.bf16.mxu0 0
        %1231 = vmatpush1.bf16.msra.mxu0 0
        %1232 = vmatprep.subr.bf16.mxu0 0
        %1233 = vmatpush1.bf16.msra.mxu0 0
        %1234 = vmatprep.subr.bf16.mxu0 0
        %1235 = vmatpush1.bf16.msra.mxu0 0
        %1236 = vmatprep.subr.bf16.mxu0 0
        %1237 = vmatpush1.bf16.msra.mxu0 0
        %1238 = vmatprep.subr.bf16.mxu0 0
        %1239 = vmatpush1.bf16.msra.mxu0 0
        %1240 = vmatprep.subr.bf16.mxu0 0
        %1241 = vmatpush1.bf16.msra.mxu0 0
        %1242 = vmatprep.subr.bf16.mxu0 0
        %1243 = vmatpush1.bf16.msra.mxu0 0
        %1244 = vmatprep.subr.bf16.mxu0 0
        %1245 = vmatpush1.bf16.msra.mxu0 %v1228
        %1246 = vmatprep.subr.bf16.mxu0 0
        %1247 = vmatpush2.bf16.msra.mxu0 0
        %1248 = vmatprep.subr.bf16.mxu0 0
        %1249 = vmatpush2.bf16.msra.mxu0 0
        %1250 = vmatprep.subr.bf16.mxu0 0
        %1251 = vmatpush2.bf16.msra.mxu0 0
        %1252 = vmatprep.subr.bf16.mxu0 0
        %1253 = vmatpush2.bf16.msra.mxu0 0
        %1254 = vmatprep.subr.bf16.mxu0 0
        %1255 = vmatpush2.bf16.msra.mxu0 0
        %1256 = vmatprep.subr.bf16.mxu0 0
        %1257 = vmatpush2.bf16.msra.mxu0 0
        %1258 = vmatprep.subr.bf16.mxu0 0
        %1259 = vmatpush2.bf16.msra.mxu0 0
        %1260 = vmatprep.subr.bf16.mxu0 0
        %1261 = vmatpush2.bf16.msra.mxu0 0
        %1262 = vmatprep.mubr.bf16.mxu0 0
        %1263 = vmatmul.mubr.bf16.gmra.mxu0 %v1225
        %v1264 = vpop.f32.mrf.mxu0
        %v1265 = vadd.f32 0.0, %v1264
        %v1266 = vpop.f32.mrf.mxu0
        %v1267 = vpop.f32.mrf.mxu0
        %v1268 = vpop.f32.mrf.mxu0
        %1269 = vdwg.mxu0
        %v1271 = vsel %vm735, %v1172, 0
        %v1274 = vsel %vm982, %v1176, 0
        %1276 = vmatprep.subr.bf16.mxu0 0
        %1277 = vmatpush1.bf16.msra.mxu0 0
        %1278 = vmatprep.subr.bf16.mxu0 0
        %1279 = vmatpush1.bf16.msra.mxu0 0
        %1280 = vmatprep.subr.bf16.mxu0 0
        %1281 = vmatpush1.bf16.msra.mxu0 0
        %1282 = vmatprep.subr.bf16.mxu0 0
        %1283 = vmatpush1.bf16.msra.mxu0 0
        %1284 = vmatprep.subr.bf16.mxu0 0
        %1285 = vmatpush1.bf16.msra.mxu0 0
        %1286 = vmatprep.subr.bf16.mxu0 0
        %1287 = vmatpush1.bf16.msra.mxu0 0
        %1288 = vmatprep.subr.bf16.mxu0 0
        %1289 = vmatpush1.bf16.msra.mxu0 0
        %1290 = vmatprep.subr.bf16.mxu0 0
        %1291 = vmatpush1.bf16.msra.mxu0 %v1274
        %1292 = vmatprep.subr.bf16.mxu0 0
        %1293 = vmatpush2.bf16.msra.mxu0 0
        %1294 = vmatprep.subr.bf16.mxu0 0
        %1295 = vmatpush2.bf16.msra.mxu0 0
        %1296 = vmatprep.subr.bf16.mxu0 0
        %1297 = vmatpush2.bf16.msra.mxu0 0
        %1298 = vmatprep.subr.bf16.mxu0 0
        %1299 = vmatpush2.bf16.msra.mxu0 0
        %1300 = vmatprep.subr.bf16.mxu0 0
        %1301 = vmatpush2.bf16.msra.mxu0 0
        %1302 = vmatprep.subr.bf16.mxu0 0
        %1303 = vmatpush2.bf16.msra.mxu0 0
        %1304 = vmatprep.subr.bf16.mxu0 0
        %1305 = vmatpush2.bf16.msra.mxu0 0
        %1306 = vmatprep.subr.bf16.mxu0 0
        %1307 = vmatpush2.bf16.msra.mxu0 0
        %1308 = vmatprep.mubr.bf16.mxu0 0
        %1309 = vmatmul.mubr.bf16.gmra.mxu0 %v1271
        %v1310 = vpop.f32.mrf.mxu0
        %v1311 = vadd.f32 0.0, %v1310
        %v1312 = vpop.f32.mrf.mxu0
        %v1313 = vpop.f32.mrf.mxu0
        %v1314 = vpop.f32.mrf.mxu0
        %1315 = vdwg.mxu0
        %v1317 = vsel %vm735, %v1173, 0
        %v1320 = vsel %vm982, %v1177, 0
        %1322 = vmatprep.subr.bf16.mxu0 0
        %1323 = vmatpush1.bf16.msra.mxu0 0
        %1324 = vmatprep.subr.bf16.mxu0 0
        %1325 = vmatpush1.bf16.msra.mxu0 0
        %1326 = vmatprep.subr.bf16.mxu0 0
        %1327 = vmatpush1.bf16.msra.mxu0 0
        %1328 = vmatprep.subr.bf16.mxu0 0
        %1329 = vmatpush1.bf16.msra.mxu0 0
        %1330 = vmatprep.subr.bf16.mxu0 0
        %1331 = vmatpush1.bf16.msra.mxu0 0
        %1332 = vmatprep.subr.bf16.mxu0 0
        %1333 = vmatpush1.bf16.msra.mxu0 0
        %1334 = vmatprep.subr.bf16.mxu0 0
        %1335 = vmatpush1.bf16.msra.mxu0 0
        %1336 = vmatprep.subr.bf16.mxu0 0
        %1337 = vmatpush1.bf16.msra.mxu0 %v1320
        %1338 = vmatprep.subr.bf16.mxu0 0
        %1339 = vmatpush2.bf16.msra.mxu0 0
        %1340 = vmatprep.subr.bf16.mxu0 0
        %1341 = vmatpush2.bf16.msra.mxu0 0
        %1342 = vmatprep.subr.bf16.mxu0 0
        %1343 = vmatpush2.bf16.msra.mxu0 0
        %1344 = vmatprep.subr.bf16.mxu0 0
        %1345 = vmatpush2.bf16.msra.mxu0 0
        %1346 = vmatprep.subr.bf16.mxu0 0
        %1347 = vmatpush2.bf16.msra.mxu0 0
        %1348 = vmatprep.subr.bf16.mxu0 0
        %1349 = vmatpush2.bf16.msra.mxu0 0
        %1350 = vmatprep.subr.bf16.mxu0 0
        %1351 = vmatpush2.bf16.msra.mxu0 0
        %1352 = vmatprep.subr.bf16.mxu0 0
        %1353 = vmatpush2.bf16.msra.mxu0 0
        %1354 = vmatprep.mubr.bf16.mxu0 0
        %1355 = vmatmul.mubr.bf16.gmra.mxu0 %v1317
        %v1356 = vpop.f32.mrf.mxu0
        %v1357 = vadd.f32 0.0, %v1356
        %v1358 = vpop.f32.mrf.mxu0
        %v1359 = vpop.f32.mrf.mxu0
        %v1360 = vpop.f32.mrf.mxu0
        %1361 = vdwg.mxu0
        %v1362 = vsel %vm426, %v1219, 0.0
        %v1363 = vsel %vm426, %v1265, 0.0
        %v1364 = vadd.f32 %v1362, %v1363
        %v1365 = vsel %vm426, %v1311, 0.0
        %v1366 = vadd.f32 %v1364, %v1365
        %v1367 = vsel %vm426, %v1357, 0.0
        %v1368 = vadd.f32 %v1366, %v1367
        %v1369 = vlaneseq
        %v1370 = vshrl.u32 %v1369, 7
        %v1371 = vsub.s32 3, %v1370
        %v1372 = vrot.slane %v347, %v1371
        %v1373 = vadd.f32 %v1368, %v1372
        %v1374 = vadd.f32 %v452, %v1373
        %v1375 = vsel %vm426, %v1374, 0.0
        %1376 = vadd.xlane.f32.xlu0 %v1375
        %v1377 = vpop.xlane.xlu0 %1376
        %v1378 = vmul.f32 %v1377, %v430
        %v1379 = vmul.f32 %v1374, %v1374
        %v1380 = vsel %vm426, %v1379, 0.0
        %1381 = vadd.xlane.f32.xlu0 %v1380
        %v1382 = vpop.xlane.xlu0 %1381
        %v1383 = vmul.f32 %v1382, %v430
        %v1384 = vmul.f32 %v1378, %v1378
        %v1385 = vsub.f32 %v1383, %v1384
        %v1386 = vsub.f32 %v1374, %v1378
        %v1387 = vadd.f32 %v1385, 1e-05
        %v1388 = vrsqrt.pop %v1387
        %v1389 = vmul.f32 %v1386, %v1388
        %v1390 = vlaneseq
        %v1391 = vshrl.u32 %v1390, 7
        %v1392 = vsub.s32 4, %v1391
        %v1393 = vrot.slane %v347, %v1392
        %v1394 = vmul.f32 %v1389, %v1393
        %v1395 = vlaneseq
        %v1396 = vshrl.u32 %v1395, 7
        %v1397 = vsub.s32 5, %v1396
        %v1398 = vrot.slane %v347, %v1397
        %v1399 = vadd.f32 %v1394, %v1398
        %v1400 = vpack.c.bf16 %v1399, %v1399
        %v1401 = vld [vmem:[#allocation5 + $0x28] sm:$0xf]
        %v1402 = vld [vmem:[#allocation5 + $0x2c] sm:$0xf]
        %v1403 = vld [vmem:[#allocation5 + $0x30] sm:$0xf]
        %v1404 = vld [vmem:[#allocation5 + $0x34] sm:$0xf]
        %v1409 = vunpack.c.l.b16 %v1401
        %v1410 = vunpack.c.l.b16 %v1402
        %v1411 = vunpack.c.l.b16 %v1403
        %v1412 = vunpack.c.l.b16 %v1404
        %v1413 = vpack.c.b16 %v1410, %v1409
        %v1414 = vpack.c.b16 %v1412, %v1411
        %v1418 = vsel %vm426, %v1400, 0
        %1420 = vmatprep.subr.bf16.mxu0 0
        %1421 = vmatpush1.bf16.msra.mxu0 0
        %1422 = vmatprep.subr.bf16.mxu0 0
        %1423 = vmatpush1.bf16.msra.mxu0 0
        %1424 = vmatprep.subr.bf16.mxu0 0
        %1425 = vmatpush1.bf16.msra.mxu0 0
        %1426 = vmatprep.subr.bf16.mxu0 0
        %1427 = vmatpush1.bf16.msra.mxu0 0
        %1428 = vmatprep.subr.bf16.mxu0 0
        %1429 = vmatpush1.bf16.msra.mxu0 0
        %1430 = vmatprep.subr.bf16.mxu0 0
        %1431 = vmatpush1.bf16.msra.mxu0 0
        %1432 = vmatprep.subr.bf16.mxu0 0
        %1433 = vmatpush1.bf16.msra.mxu0 %v1414
        %1434 = vmatprep.subr.bf16.mxu0 0
        %1435 = vmatpush1.bf16.msra.mxu0 %v1413
        %1436 = vmatprep.subr.bf16.mxu0 0
        %1437 = vmatpush2.bf16.msra.mxu0 0
        %1438 = vmatprep.subr.bf16.mxu0 0
        %1439 = vmatpush2.bf16.msra.mxu0 0
        %1440 = vmatprep.subr.bf16.mxu0 0
        %1441 = vmatpush2.bf16.msra.mxu0 0
        %1442 = vmatprep.subr.bf16.mxu0 0
        %1443 = vmatpush2.bf16.msra.mxu0 0
        %1444 = vmatprep.subr.bf16.mxu0 0
        %1445 = vmatpush2.bf16.msra.mxu0 0
        %1446 = vmatprep.subr.bf16.mxu0 0
        %1447 = vmatpush2.bf16.msra.mxu0 0
        %1448 = vmatprep.subr.bf16.mxu0 0
        %1449 = vmatpush2.bf16.msra.mxu0 0
        %1450 = vmatprep.subr.bf16.mxu0 0
        %1451 = vmatpush2.bf16.msra.mxu0 0
        %1452 = vmatprep.mubr.bf16.mxu0 0
        %1453 = vmatmul.mubr.bf16.gmra.mxu0 %v1418
        %v1454 = vpop.f32.mrf.mxu0
        %v1455 = vadd.f32 %v346, %v1454
        %v1456 = vpop.f32.mrf.mxu0
        %v1457 = vpop.f32.mrf.mxu0
        %v1458 = vpop.f32.mrf.mxu0
        %1459 = vdwg.mxu0
        %1461 = vrot.lane.b32.xlu0 %v1455, 120
        %v1462 = vpop.permute.xlu0 %1461
        %1464 = vrot.lane.b32.xlu0 %v1455, 112
        %v1465 = vpop.permute.xlu0 %1464
        %1467 = vrot.lane.b32.xlu0 %v1455, 104
        %v1468 = vpop.permute.xlu0 %1467
        %v1470 = vpack.c.bf16 %v1455, %v1455
        %v1471 = vpack.c.bf16 %v1462, %v1462
        %v1472 = vpack.c.bf16 %v1465, %v1465
        %v1473 = vpack.c.bf16 %v1468, %v1468
        %v1474 = vld [vmem:[#allocation5 + $0x38] sm:$0xf]
        %v1475 = vld [vmem:[#allocation5 + $0x3c] sm:$0xf]
        %v1476 = vld [vmem:[#allocation5 + $0x40] sm:$0xf]
        %v1477 = vld [vmem:[#allocation5 + $0x44] sm:$0xf]
        %v1478 = vld [vmem:[#allocation5 + $0x48] sm:$0xf]
        %v1479 = vld [vmem:[#allocation5 + $0x4c] sm:$0xf]
        %v1480 = vld [vmem:[#allocation5 + $0x50] sm:$0xf]
        %v1481 = vld [vmem:[#allocation5 + $0x54] sm:$0xf]
        %v1490 = vunpack.c.l.b16 %v1474
        %v1491 = vunpack.c.l.b16 %v1475
        %v1492 = vunpack.c.l.b16 %v1476
        %v1493 = vunpack.c.l.b16 %v1477
        %v1494 = vunpack.c.l.b16 %v1478
        %v1495 = vunpack.c.l.b16 %v1479
        %v1496 = vunpack.c.l.b16 %v1480
        %v1497 = vunpack.c.l.b16 %v1481
        %v1498 = vpack.c.b16 %v1491, %v1490
        %v1499 = vpack.c.b16 %v1493, %v1492
        %v1500 = vpack.c.b16 %v1495, %v1494
        %v1501 = vpack.c.b16 %v1497, %v1496
        %v1503 = vsel %vm426, %v1498, 0
        %v1506 = vsel %vm426, %v1499, 0
        %v1509 = vsel %vm426, %v1500, 0
        %v1512 = vsel %vm426, %v1501, 0
        %1514 = vmatprep.subr.bf16.mxu0 0
        %1515 = vmatpush1.bf16.msra.mxu0 0
        %1516 = vmatprep.subr.bf16.mxu0 0
        %1517 = vmatpush1.bf16.msra.mxu0 0
        %1518 = vmatprep.subr.bf16.mxu0 0
        %1519 = vmatpush1.bf16.msra.mxu0 0
        %1520 = vmatprep.subr.bf16.mxu0 0
        %1521 = vmatpush1.bf16.msra.mxu0 0
        %1522 = vmatprep.subr.bf16.mxu0 0
        %1523 = vmatpush1.bf16.msra.mxu0 0
        %1524 = vmatprep.subr.bf16.mxu0 0
        %1525 = vmatpush1.bf16.msra.mxu0 0
        %1526 = vmatprep.subr.bf16.mxu0 0
        %1527 = vmatpush1.bf16.msra.mxu0 %v649
        %1528 = vmatprep.subr.bf16.mxu0 0
        %1529 = vmatpush1.bf16.msra.mxu0 %v648
        %1530 = vmatprep.subr.bf16.mxu0 0
        %1531 = vmatpush2.bf16.msra.mxu0 0
        %1532 = vmatprep.subr.bf16.mxu0 0
        %1533 = vmatpush2.bf16.msra.mxu0 0
        %1534 = vmatprep.subr.bf16.mxu0 0
        %1535 = vmatpush2.bf16.msra.mxu0 0
        %1536 = vmatprep.subr.bf16.mxu0 0
        %1537 = vmatpush2.bf16.msra.mxu0 0
        %1538 = vmatprep.subr.bf16.mxu0 0
        %1539 = vmatpush2.bf16.msra.mxu0 0
        %1540 = vmatprep.subr.bf16.mxu0 0
        %1541 = vmatpush2.bf16.msra.mxu0 0
        %1542 = vmatprep.subr.bf16.mxu0 0
        %1543 = vmatpush2.bf16.msra.mxu0 0
        %1544 = vmatprep.subr.bf16.mxu0 0
        %1545 = vmatpush2.bf16.msra.mxu0 0
        %1546 = vmatprep.mubr.bf16.mxu0 0
        %1547 = vmatmul.mubr.bf16.gmra.mxu0 %v1503
        %v1548 = vpop.f32.mrf.mxu0
        %v1549 = vadd.f32 0.0, %v1548
        %v1550 = vpop.f32.mrf.mxu0
        %v1551 = vpop.f32.mrf.mxu0
        %v1552 = vadd.f32 0.0, %v1551
        %v1553 = vpop.f32.mrf.mxu0
        %1554 = vmatprep.mubr.bf16.mxu0 0
        %1555 = vmatmul.mubr.bf16.gmra.mxu0 %v1506
        %v1556 = vpop.f32.mrf.mxu0
        %v1557 = vadd.f32 0.0, %v1556
        %v1558 = vpop.f32.mrf.mxu0
        %v1559 = vpop.f32.mrf.mxu0
        %v1560 = vadd.f32 0.0, %v1559
        %v1561 = vpop.f32.mrf.mxu0
        %1562 = vmatprep.mubr.bf16.mxu0 0
        %1563 = vmatmul.mubr.bf16.gmra.mxu0 %v1509
        %v1564 = vpop.f32.mrf.mxu0
        %v1565 = vadd.f32 0.0, %v1564
        %v1566 = vpop.f32.mrf.mxu0
        %v1567 = vpop.f32.mrf.mxu0
        %v1568 = vadd.f32 0.0, %v1567
        %v1569 = vpop.f32.mrf.mxu0
        %1570 = vmatprep.mubr.bf16.mxu0 0
        %1571 = vmatmul.mubr.bf16.gmra.mxu0 %v1512
        %v1572 = vpop.f32.mrf.mxu0
        %v1573 = vadd.f32 0.0, %v1572
        %v1574 = vpop.f32.mrf.mxu0
        %v1575 = vpop.f32.mrf.mxu0
        %v1576 = vadd.f32 0.0, %v1575
        %v1577 = vpop.f32.mrf.mxu0
        %1578 = vdwg.mxu0
        %v1579 = vpack.c.bf16 %v1549, %v1549
        %v1580 = vpack.c.bf16 %v1552, %v1552
        %v1581 = vpack.c.bf16 %v1557, %v1557
        %v1582 = vpack.c.bf16 %v1560, %v1560
        %v1583 = vpack.c.bf16 %v1565, %v1565
        %v1584 = vpack.c.bf16 %v1568, %v1568
        %v1585 = vpack.c.bf16 %v1573, %v1573
        %v1586 = vpack.c.bf16 %v1576, %v1576
        %v1588 = vsel %vm735, %v1470, 0
        %v1591 = vsel %vm982, %v1579, 0
        %1593 = vmatprep.subr.bf16.mxu0 0
        %1594 = vmatpush1.bf16.msra.mxu0 0
        %1595 = vmatprep.subr.bf16.mxu0 0
        %1596 = vmatpush1.bf16.msra.mxu0 0
        %1597 = vmatprep.subr.bf16.mxu0 0
        %1598 = vmatpush1.bf16.msra.mxu0 0
        %1599 = vmatprep.subr.bf16.mxu0 0
        %1600 = vmatpush1.bf16.msra.mxu0 0
        %1601 = vmatprep.subr.bf16.mxu0 0
        %1602 = vmatpush1.bf16.msra.mxu0 0
        %1603 = vmatprep.subr.bf16.mxu0 0
        %1604 = vmatpush1.bf16.msra.mxu0 0
        %1605 = vmatprep.subr.bf16.mxu0 0
        %1606 = vmatpush1.bf16.msra.mxu0 0
        %1607 = vmatprep.subr.bf16.mxu0 0
        %1608 = vmatpush1.bf16.msra.mxu0 %v1591
        %1609 = vmatprep.subr.bf16.mxu0 0
        %1610 = vmatpush2.bf16.msra.mxu0 0
        %1611 = vmatprep.subr.bf16.mxu0 0
        %1612 = vmatpush2.bf16.msra.mxu0 0
        %1613 = vmatprep.subr.bf16.mxu0 0
        %1614 = vmatpush2.bf16.msra.mxu0 0
        %1615 = vmatprep.subr.bf16.mxu0 0
        %1616 = vmatpush2.bf16.msra.mxu0 0
        %1617 = vmatprep.subr.bf16.mxu0 0
        %1618 = vmatpush2.bf16.msra.mxu0 0
        %1619 = vmatprep.subr.bf16.mxu0 0
        %1620 = vmatpush2.bf16.msra.mxu0 0
        %1621 = vmatprep.subr.bf16.mxu0 0
        %1622 = vmatpush2.bf16.msra.mxu0 0
        %1623 = vmatprep.subr.bf16.mxu0 0
        %1624 = vmatpush2.bf16.msra.mxu0 0
        %1625 = vmatprep.mubr.bf16.mxu0 0
        %1626 = vmatmul.mubr.bf16.gmra.mxu0 %v1588
        %v1627 = vpop.f32.mrf.mxu0
        %v1628 = vadd.f32 0.0, %v1627
        %v1629 = vpop.f32.mrf.mxu0
        %v1630 = vpop.f32.mrf.mxu0
        %v1631 = vpop.f32.mrf.mxu0
        %1632 = vdwg.mxu0
        %v1634 = vsel %vm735, %v1471, 0
        %v1637 = vsel %vm982, %v1580, 0
        %1639 = vmatprep.subr.bf16.mxu0 0
        %1640 = vmatpush1.bf16.msra.mxu0 0
        %1641 = vmatprep.subr.bf16.mxu0 0
        %1642 = vmatpush1.bf16.msra.mxu0 0
        %1643 = vmatprep.subr.bf16.mxu0 0
        %1644 = vmatpush1.bf16.msra.mxu0 0
        %1645 = vmatprep.subr.bf16.mxu0 0
        %1646 = vmatpush1.bf16.msra.mxu0 0
        %1647 = vmatprep.subr.bf16.mxu0 0
        %1648 = vmatpush1.bf16.msra.mxu0 0
        %1649 = vmatprep.subr.bf16.mxu0 0
        %1650 = vmatpush1.bf16.msra.mxu0 0
        %1651 = vmatprep.subr.bf16.mxu0 0
        %1652 = vmatpush1.bf16.msra.mxu0 0
        %1653 = vmatprep.subr.bf16.mxu0 0
        %1654 = vmatpush1.bf16.msra.mxu0 %v1637
        %1655 = vmatprep.subr.bf16.mxu0 0
        %1656 = vmatpush2.bf16.msra.mxu0 0
        %1657 = vmatprep.subr.bf16.mxu0 0
        %1658 = vmatpush2.bf16.msra.mxu0 0
        %1659 = vmatprep.subr.bf16.mxu0 0
        %1660 = vmatpush2.bf16.msra.mxu0 0
        %1661 = vmatprep.subr.bf16.mxu0 0
        %1662 = vmatpush2.bf16.msra.mxu0 0
        %1663 = vmatprep.subr.bf16.mxu0 0
        %1664 = vmatpush2.bf16.msra.mxu0 0
        %1665 = vmatprep.subr.bf16.mxu0 0
        %1666 = vmatpush2.bf16.msra.mxu0 0
        %1667 = vmatprep.subr.bf16.mxu0 0
        %1668 = vmatpush2.bf16.msra.mxu0 0
        %1669 = vmatprep.subr.bf16.mxu0 0
        %1670 = vmatpush2.bf16.msra.mxu0 0
        %1671 = vmatprep.mubr.bf16.mxu0 0
        %1672 = vmatmul.mubr.bf16.gmra.mxu0 %v1634
        %v1673 = vpop.f32.mrf.mxu0
        %v1674 = vadd.f32 0.0, %v1673
        %v1675 = vpop.f32.mrf.mxu0
        %v1676 = vpop.f32.mrf.mxu0
        %v1677 = vpop.f32.mrf.mxu0
        %1678 = vdwg.mxu0
        %v1680 = vsel %vm735, %v1472, 0
        %v1683 = vsel %vm982, %v1581, 0
        %1685 = vmatprep.subr.bf16.mxu0 0
        %1686 = vmatpush1.bf16.msra.mxu0 0
        %1687 = vmatprep.subr.bf16.mxu0 0
        %1688 = vmatpush1.bf16.msra.mxu0 0
        %1689 = vmatprep.subr.bf16.mxu0 0
        %1690 = vmatpush1.bf16.msra.mxu0 0
        %1691 = vmatprep.subr.bf16.mxu0 0
        %1692 = vmatpush1.bf16.msra.mxu0 0
        %1693 = vmatprep.subr.bf16.mxu0 0
        %1694 = vmatpush1.bf16.msra.mxu0 0
        %1695 = vmatprep.subr.bf16.mxu0 0
        %1696 = vmatpush1.bf16.msra.mxu0 0
        %1697 = vmatprep.subr.bf16.mxu0 0
        %1698 = vmatpush1.bf16.msra.mxu0 0
        %1699 = vmatprep.subr.bf16.mxu0 0
        %1700 = vmatpush1.bf16.msra.mxu0 %v1683
        %1701 = vmatprep.subr.bf16.mxu0 0
        %1702 = vmatpush2.bf16.msra.mxu0 0
        %1703 = vmatprep.subr.bf16.mxu0 0
        %1704 = vmatpush2.bf16.msra.mxu0 0
        %1705 = vmatprep.subr.bf16.mxu0 0
        %1706 = vmatpush2.bf16.msra.mxu0 0
        %1707 = vmatprep.subr.bf16.mxu0 0
        %1708 = vmatpush2.bf16.msra.mxu0 0
        %1709 = vmatprep.subr.bf16.mxu0 0
        %1710 = vmatpush2.bf16.msra.mxu0 0
        %1711 = vmatprep.subr.bf16.mxu0 0
        %1712 = vmatpush2.bf16.msra.mxu0 0
        %1713 = vmatprep.subr.bf16.mxu0 0
        %1714 = vmatpush2.bf16.msra.mxu0 0
        %1715 = vmatprep.subr.bf16.mxu0 0
        %1716 = vmatpush2.bf16.msra.mxu0 0
        %1717 = vmatprep.mubr.bf16.mxu0 0
        %1718 = vmatmul.mubr.bf16.gmra.mxu0 %v1680
        %v1719 = vpop.f32.mrf.mxu0
        %v1720 = vadd.f32 0.0, %v1719
        %v1721 = vpop.f32.mrf.mxu0
        %v1722 = vpop.f32.mrf.mxu0
        %v1723 = vpop.f32.mrf.mxu0
        %1724 = vdwg.mxu0
        %v1726 = vsel %vm735, %v1473, 0
        %v1729 = vsel %vm982, %v1582, 0
        %1731 = vmatprep.subr.bf16.mxu0 0
        %1732 = vmatpush1.bf16.msra.mxu0 0
        %1733 = vmatprep.subr.bf16.mxu0 0
        %1734 = vmatpush1.bf16.msra.mxu0 0
        %1735 = vmatprep.subr.bf16.mxu0 0
        %1736 = vmatpush1.bf16.msra.mxu0 0
        %1737 = vmatprep.subr.bf16.mxu0 0
        %1738 = vmatpush1.bf16.msra.mxu0 0
        %1739 = vmatprep.subr.bf16.mxu0 0
        %1740 = vmatpush1.bf16.msra.mxu0 0
        %1741 = vmatprep.subr.bf16.mxu0 0
        %1742 = vmatpush1.bf16.msra.mxu0 0
        %1743 = vmatprep.subr.bf16.mxu0 0
        %1744 = vmatpush1.bf16.msra.mxu0 0
        %1745 = vmatprep.subr.bf16.mxu0 0
        %1746 = vmatpush1.bf16.msra.mxu0 %v1729
        %1747 = vmatprep.subr.bf16.mxu0 0
        %1748 = vmatpush2.bf16.msra.mxu0 0
        %1749 = vmatprep.subr.bf16.mxu0 0
        %1750 = vmatpush2.bf16.msra.mxu0 0
        %1751 = vmatprep.subr.bf16.mxu0 0
        %1752 = vmatpush2.bf16.msra.mxu0 0
        %1753 = vmatprep.subr.bf16.mxu0 0
        %1754 = vmatpush2.bf16.msra.mxu0 0
        %1755 = vmatprep.subr.bf16.mxu0 0
        %1756 = vmatpush2.bf16.msra.mxu0 0
        %1757 = vmatprep.subr.bf16.mxu0 0
        %1758 = vmatpush2.bf16.msra.mxu0 0
        %1759 = vmatprep.subr.bf16.mxu0 0
        %1760 = vmatpush2.bf16.msra.mxu0 0
        %1761 = vmatprep.subr.bf16.mxu0 0
        %1762 = vmatpush2.bf16.msra.mxu0 0
        %1763 = vmatprep.mubr.bf16.mxu0 0
        %1764 = vmatmul.mubr.bf16.gmra.mxu0 %v1726
        %v1765 = vpop.f32.mrf.mxu0
        %v1766 = vadd.f32 0.0, %v1765
        %v1767 = vpop.f32.mrf.mxu0
        %v1768 = vpop.f32.mrf.mxu0
        %v1769 = vpop.f32.mrf.mxu0
        %1770 = vdwg.mxu0
        %1771 = vmax.xlane.f32.xlu0 %v1628
        %v1772 = vpop.xlane.xlu0 %1771
        %1773 = vmax.xlane.f32.xlu0 %v1674
        %v1774 = vpop.xlane.xlu0 %1773
        %1775 = vmax.xlane.f32.xlu0 %v1720
        %v1776 = vpop.xlane.xlu0 %1775
        %1777 = vmax.xlane.f32.xlu0 %v1766
        %v1778 = vpop.xlane.xlu0 %1777
        %v1779 = vsub.f32 %v1628, %v1772
        %v1780 = vsub.f32 %v1674, %v1774
        %v1781 = vsub.f32 %v1720, %v1776
        %v1782 = vsub.f32 %v1766, %v1778
        %v1783 = vmul.f32 %v1779, 1.442695
        %v1784 = vpow.pop %v1783
        %v1785 = vmul.f32 %v1780, 1.442695
        %v1786 = vpow.pop %v1785
        %v1787 = vmul.f32 %v1781, 1.442695
        %v1788 = vpow.pop %v1787
        %v1789 = vmul.f32 %v1782, 1.442695
        %v1790 = vpow.pop %v1789
        %1791 = vadd.xlane.f32.xlu0 %v1784
        %v1792 = vpop.xlane.xlu0 %1791
        %1793 = vadd.xlane.f32.xlu0 %v1786
        %v1794 = vpop.xlane.xlu0 %1793
        %1795 = vadd.xlane.f32.xlu0 %v1788
        %v1796 = vpop.xlane.xlu0 %1795
        %1797 = vadd.xlane.f32.xlu0 %v1790
        %v1798 = vpop.xlane.xlu0 %1797
        %v1799 = vrcp.pop %v1792
        %v1800 = vrcp.pop %v1794
        %v1801 = vrcp.pop %v1796
        %v1802 = vrcp.pop %v1798
        %v1803 = vmul.f32 %v1784, %v1799
        %v1804 = vmul.f32 %v1786, %v1800
        %v1805 = vmul.f32 %v1788, %v1801
        %v1806 = vmul.f32 %v1790, %v1802
        %v1807 = vpack.c.bf16 %v1803, %v1803
        %v1808 = vpack.c.bf16 %v1804, %v1804
        %v1809 = vpack.c.bf16 %v1805, %v1805
        %v1810 = vpack.c.bf16 %v1806, %v1806
        %1811 = vmatprep.subr.bf16.mxu0 0
        %1812 = vmatpush1.bf16.xpose.msra.mxu0 0
        %1813 = vmatprep.subr.bf16.mxu0 0
        %1814 = vmatpush1.bf16.xpose.msra.mxu0 0
        %1815 = vmatprep.subr.bf16.mxu0 0
        %1816 = vmatpush1.bf16.xpose.msra.mxu0 0
        %1817 = vmatprep.subr.bf16.mxu0 0
        %1818 = vmatpush1.bf16.xpose.msra.mxu0 0
        %1819 = vmatprep.subr.bf16.mxu0 0
        %1820 = vmatpush1.bf16.xpose.msra.mxu0 0
        %1821 = vmatprep.subr.bf16.mxu0 0
        %1822 = vmatpush1.bf16.xpose.msra.mxu0 0
        %1823 = vmatprep.subr.bf16.mxu0 0
        %1824 = vmatpush1.bf16.xpose.msra.mxu0 0
        %1825 = vmatprep.subr.bf16.mxu0 0
        %1826 = vmatpush1.bf16.xpose.msra.mxu0 %v1583
        %1827 = vmatprep.subr.bf16.mxu0 0
        %1828 = vmatpush2.bf16.xpose.msra.mxu0 0
        %1829 = vmatprep.subr.bf16.mxu0 0
        %1830 = vmatpush2.bf16.xpose.msra.mxu0 0
        %1831 = vmatprep.subr.bf16.mxu0 0
        %1832 = vmatpush2.bf16.xpose.msra.mxu0 0
        %1833 = vmatprep.subr.bf16.mxu0 0
        %1834 = vmatpush2.bf16.xpose.msra.mxu0 0
        %1835 = vmatprep.subr.bf16.mxu0 0
        %1836 = vmatpush2.bf16.xpose.msra.mxu0 0
        %1837 = vmatprep.subr.bf16.mxu0 0
        %1838 = vmatpush2.bf16.xpose.msra.mxu0 0
        %1839 = vmatprep.subr.bf16.mxu0 0
        %1840 = vmatpush2.bf16.xpose.msra.mxu0 0
        %1841 = vmatprep.subr.bf16.mxu0 0
        %1842 = vmatpush2.bf16.xpose.msra.mxu0 0
        %1843 = vmatprep.mubr.bf16.mxu0 0
        %1844 = vmatmul.mubr.bf16.gmra.mxu0 %v1807
        %v1845 = vpop.f32.mrf.mxu0
        %v1846 = vadd.f32 0.0, %v1845
        %v1847 = vpop.f32.mrf.mxu0
        %v1848 = vpop.f32.mrf.mxu0
        %v1849 = vpop.f32.mrf.mxu0
        %1850 = vdwg.mxu0
        %1851 = vmatprep.subr.bf16.mxu0 0
        %1852 = vmatpush1.bf16.xpose.msra.mxu0 0
        %1853 = vmatprep.subr.bf16.mxu0 0
        %1854 = vmatpush1.bf16.xpose.msra.mxu0 0
        %1855 = vmatprep.subr.bf16.mxu0 0
        %1856 = vmatpush1.bf16.xpose.msra.mxu0 0
        %1857 = vmatprep.subr.bf16.mxu0 0
        %1858 = vmatpush1.bf16.xpose.msra.mxu0 0
        %1859 = vmatprep.subr.bf16.mxu0 0
        %1860 = vmatpush1.bf16.xpose.msra.mxu0 0
        %1861 = vmatprep.subr.bf16.mxu0 0
        %1862 = vmatpush1.bf16.xpose.msra.mxu0 0
        %1863 = vmatprep.subr.bf16.mxu0 0
        %1864 = vmatpush1.bf16.xpose.msra.mxu0 0
        %1865 = vmatprep.subr.bf16.mxu0 0
        %1866 = vmatpush1.bf16.xpose.msra.mxu0 %v1584
        %1867 = vmatprep.subr.bf16.mxu0 0
        %1868 = vmatpush2.bf16.xpose.msra.mxu0 0
        %1869 = vmatprep.subr.bf16.mxu0 0
        %1870 = vmatpush2.bf16.xpose.msra.mxu0 0
        %1871 = vmatprep.subr.bf16.mxu0 0
        %1872 = vmatpush2.bf16.xpose.msra.mxu0 0
        %1873 = vmatprep.subr.bf16.mxu0 0
        %1874 = vmatpush2.bf16.xpose.msra.mxu0 0
        %1875 = vmatprep.subr.bf16.mxu0 0
        %1876 = vmatpush2.bf16.xpose.msra.mxu0 0
        %1877 = vmatprep.subr.bf16.mxu0 0
        %1878 = vmatpush2.bf16.xpose.msra.mxu0 0
        %1879 = vmatprep.subr.bf16.mxu0 0
        %1880 = vmatpush2.bf16.xpose.msra.mxu0 0
        %1881 = vmatprep.subr.bf16.mxu0 0
        %1882 = vmatpush2.bf16.xpose.msra.mxu0 0
        %1883 = vmatprep.mubr.bf16.mxu0 0
        %1884 = vmatmul.mubr.bf16.gmra.mxu0 %v1808
        %v1885 = vpop.f32.mrf.mxu0
        %v1886 = vadd.f32 0.0, %v1885
        %v1887 = vpop.f32.mrf.mxu0
        %v1888 = vpop.f32.mrf.mxu0
        %v1889 = vpop.f32.mrf.mxu0
        %1890 = vdwg.mxu0
        %1891 = vmatprep.subr.bf16.mxu0 0
        %1892 = vmatpush1.bf16.xpose.msra.mxu0 0
        %1893 = vmatprep.subr.bf16.mxu0 0
        %1894 = vmatpush1.bf16.xpose.msra.mxu0 0
        %1895 = vmatprep.subr.bf16.mxu0 0
        %1896 = vmatpush1.bf16.xpose.msra.mxu0 0
        %1897 = vmatprep.subr.bf16.mxu0 0
        %1898 = vmatpush1.bf16.xpose.msra.mxu0 0
        %1899 = vmatprep.subr.bf16.mxu0 0
        %1900 = vmatpush1.bf16.xpose.msra.mxu0 0
        %1901 = vmatprep.subr.bf16.mxu0 0
        %1902 = vmatpush1.bf16.xpose.msra.mxu0 0
        %1903 = vmatprep.subr.bf16.mxu0 0
        %1904 = vmatpush1.bf16.xpose.msra.mxu0 0
        %1905 = vmatprep.subr.bf16.mxu0 0
        %1906 = vmatpush1.bf16.xpose.msra.mxu0 %v1585
        %1907 = vmatprep.subr.bf16.mxu0 0
        %1908 = vmatpush2.bf16.xpose.msra.mxu0 0
        %1909 = vmatprep.subr.bf16.mxu0 0
        %1910 = vmatpush2.bf16.xpose.msra.mxu0 0
        %1911 = vmatprep.subr.bf16.mxu0 0
        %1912 = vmatpush2.bf16.xpose.msra.mxu0 0
        %1913 = vmatprep.subr.bf16.mxu0 0
        %1914 = vmatpush2.bf16.xpose.msra.mxu0 0
        %1915 = vmatprep.subr.bf16.mxu0 0
        %1916 = vmatpush2.bf16.xpose.msra.mxu0 0
        %1917 = vmatprep.subr.bf16.mxu0 0
        %1918 = vmatpush2.bf16.xpose.msra.mxu0 0
        %1919 = vmatprep.subr.bf16.mxu0 0
        %1920 = vmatpush2.bf16.xpose.msra.mxu0 0
        %1921 = vmatprep.subr.bf16.mxu0 0
        %1922 = vmatpush2.bf16.xpose.msra.mxu0 0
        %1923 = vmatprep.mubr.bf16.mxu0 0
        %1924 = vmatmul.mubr.bf16.gmra.mxu0 %v1809
        %v1925 = vpop.f32.mrf.mxu0
        %v1926 = vadd.f32 0.0, %v1925
        %v1927 = vpop.f32.mrf.mxu0
        %v1928 = vpop.f32.mrf.mxu0
        %v1929 = vpop.f32.mrf.mxu0
        %1930 = vdwg.mxu0
        %1931 = vmatprep.subr.bf16.mxu0 0
        %1932 = vmatpush1.bf16.xpose.msra.mxu0 0
        %1933 = vmatprep.subr.bf16.mxu0 0
        %1934 = vmatpush1.bf16.xpose.msra.mxu0 0
        %1935 = vmatprep.subr.bf16.mxu0 0
        %1936 = vmatpush1.bf16.xpose.msra.mxu0 0
        %1937 = vmatprep.subr.bf16.mxu0 0
        %1938 = vmatpush1.bf16.xpose.msra.mxu0 0
        %1939 = vmatprep.subr.bf16.mxu0 0
        %1940 = vmatpush1.bf16.xpose.msra.mxu0 0
        %1941 = vmatprep.subr.bf16.mxu0 0
        %1942 = vmatpush1.bf16.xpose.msra.mxu0 0
        %1943 = vmatprep.subr.bf16.mxu0 0
        %1944 = vmatpush1.bf16.xpose.msra.mxu0 0
        %1945 = vmatprep.subr.bf16.mxu0 0
        %1946 = vmatpush1.bf16.xpose.msra.mxu0 %v1586
        %1947 = vmatprep.subr.bf16.mxu0 0
        %1948 = vmatpush2.bf16.xpose.msra.mxu0 0
        %1949 = vmatprep.subr.bf16.mxu0 0
        %1950 = vmatpush2.bf16.xpose.msra.mxu0 0
        %1951 = vmatprep.subr.bf16.mxu0 0
        %1952 = vmatpush2.bf16.xpose.msra.mxu0 0
        %1953 = vmatprep.subr.bf16.mxu0 0
        %1954 = vmatpush2.bf16.xpose.msra.mxu0 0
        %1955 = vmatprep.subr.bf16.mxu0 0
        %1956 = vmatpush2.bf16.xpose.msra.mxu0 0
        %1957 = vmatprep.subr.bf16.mxu0 0
        %1958 = vmatpush2.bf16.xpose.msra.mxu0 0
        %1959 = vmatprep.subr.bf16.mxu0 0
        %1960 = vmatpush2.bf16.xpose.msra.mxu0 0
        %1961 = vmatprep.subr.bf16.mxu0 0
        %1962 = vmatpush2.bf16.xpose.msra.mxu0 0
        %1963 = vmatprep.mubr.bf16.mxu0 0
        %1964 = vmatmul.mubr.bf16.gmra.mxu0 %v1810
        %v1965 = vpop.f32.mrf.mxu0
        %v1966 = vadd.f32 0.0, %v1965
        %v1967 = vpop.f32.mrf.mxu0
        %v1968 = vpop.f32.mrf.mxu0
        %v1969 = vpop.f32.mrf.mxu0
        %1970 = vdwg.mxu0
        %v1971 = vpack.c.bf16 %v1846, %v1846
        %v1972 = vpack.c.bf16 %v1886, %v1886
        %v1973 = vpack.c.bf16 %v1926, %v1926
        %v1974 = vpack.c.bf16 %v1966, %v1966
        %s1975 = scalar_lea.vmem [#allocation7], 16
        %v1976 = vld [vmem:[%s1975] sm:$0xf]
        %v1977 = vld [vmem:[%s1975 + $0x4] sm:$0xf]
        %v1978 = vld [vmem:[%s1975 + $0x8] sm:$0xf]
        %v1979 = vld [vmem:[%s1975 + $0xc] sm:$0xf]
        %v1981 = vsel %vm735, %v1971, 0
        %v1984 = vsel %vm982, %v1976, 0
        %1986 = vmatprep.subr.bf16.mxu0 0
        %1987 = vmatpush1.bf16.msra.mxu0 0
        %1988 = vmatprep.subr.bf16.mxu0 0
        %1989 = vmatpush1.bf16.msra.mxu0 0
        %1990 = vmatprep.subr.bf16.mxu0 0
        %1991 = vmatpush1.bf16.msra.mxu0 0
        %1992 = vmatprep.subr.bf16.mxu0 0
        %1993 = vmatpush1.bf16.msra.mxu0 0
        %1994 = vmatprep.subr.bf16.mxu0 0
        %1995 = vmatpush1.bf16.msra.mxu0 0
        %1996 = vmatprep.subr.bf16.mxu0 0
        %1997 = vmatpush1.bf16.msra.mxu0 0
        %1998 = vmatprep.subr.bf16.mxu0 0
        %1999 = vmatpush1.bf16.msra.mxu0 0
        %2000 = vmatprep.subr.bf16.mxu0 0
        %2001 = vmatpush1.bf16.msra.mxu0 %v1984
        %2002 = vmatprep.subr.bf16.mxu0 0
        %2003 = vmatpush2.bf16.msra.mxu0 0
        %2004 = vmatprep.subr.bf16.mxu0 0
        %2005 = vmatpush2.bf16.msra.mxu0 0
        %2006 = vmatprep.subr.bf16.mxu0 0
        %2007 = vmatpush2.bf16.msra.mxu0 0
        %2008 = vmatprep.subr.bf16.mxu0 0
        %2009 = vmatpush2.bf16.msra.mxu0 0
        %2010 = vmatprep.subr.bf16.mxu0 0
        %2011 = vmatpush2.bf16.msra.mxu0 0
        %2012 = vmatprep.subr.bf16.mxu0 0
        %2013 = vmatpush2.bf16.msra.mxu0 0
        %2014 = vmatprep.subr.bf16.mxu0 0
        %2015 = vmatpush2.bf16.msra.mxu0 0
        %2016 = vmatprep.subr.bf16.mxu0 0
        %2017 = vmatpush2.bf16.msra.mxu0 0
        %2018 = vmatprep.mubr.bf16.mxu0 0
        %2019 = vmatmul.mubr.bf16.gmra.mxu0 %v1981
        %v2020 = vpop.f32.mrf.mxu0
        %v2021 = vadd.f32 0.0, %v2020
        %v2022 = vpop.f32.mrf.mxu0
        %v2023 = vpop.f32.mrf.mxu0
        %v2024 = vpop.f32.mrf.mxu0
        %2025 = vdwg.mxu0
        %v2027 = vsel %vm735, %v1972, 0
        %v2030 = vsel %vm982, %v1977, 0
        %2032 = vmatprep.subr.bf16.mxu0 0
        %2033 = vmatpush1.bf16.msra.mxu0 0
        %2034 = vmatprep.subr.bf16.mxu0 0
        %2035 = vmatpush1.bf16.msra.mxu0 0
        %2036 = vmatprep.subr.bf16.mxu0 0
        %2037 = vmatpush1.bf16.msra.mxu0 0
        %2038 = vmatprep.subr.bf16.mxu0 0
        %2039 = vmatpush1.bf16.msra.mxu0 0
        %2040 = vmatprep.subr.bf16.mxu0 0
        %2041 = vmatpush1.bf16.msra.mxu0 0
        %2042 = vmatprep.subr.bf16.mxu0 0
        %2043 = vmatpush1.bf16.msra.mxu0 0
        %2044 = vmatprep.subr.bf16.mxu0 0
        %2045 = vmatpush1.bf16.msra.mxu0 0
        %2046 = vmatprep.subr.bf16.mxu0 0
        %2047 = vmatpush1.bf16.msra.mxu0 %v2030
        %2048 = vmatprep.subr.bf16.mxu0 0
        %2049 = vmatpush2.bf16.msra.mxu0 0
        %2050 = vmatprep.subr.bf16.mxu0 0
        %2051 = vmatpush2.bf16.msra.mxu0 0
        %2052 = vmatprep.subr.bf16.mxu0 0
        %2053 = vmatpush2.bf16.msra.mxu0 0
        %2054 = vmatprep.subr.bf16.mxu0 0
        %2055 = vmatpush2.bf16.msra.mxu0 0
        %2056 = vmatprep.subr.bf16.mxu0 0
        %2057 = vmatpush2.bf16.msra.mxu0 0
        %2058 = vmatprep.subr.bf16.mxu0 0
        %2059 = vmatpush2.bf16.msra.mxu0 0
        %2060 = vmatprep.subr.bf16.mxu0 0
        %2061 = vmatpush2.bf16.msra.mxu0 0
        %2062 = vmatprep.subr.bf16.mxu0 0
        %2063 = vmatpush2.bf16.msra.mxu0 0
        %2064 = vmatprep.mubr.bf16.mxu0 0
        %2065 = vmatmul.mubr.bf16.gmra.mxu0 %v2027
        %v2066 = vpop.f32.mrf.mxu0
        %v2067 = vadd.f32 0.0, %v2066
        %v2068 = vpop.f32.mrf.mxu0
        %v2069 = vpop.f32.mrf.mxu0
        %v2070 = vpop.f32.mrf.mxu0
        %2071 = vdwg.mxu0
        %v2073 = vsel %vm735, %v1973, 0
        %v2076 = vsel %vm982, %v1978, 0
        %2078 = vmatprep.subr.bf16.mxu0 0
        %2079 = vmatpush1.bf16.msra.mxu0 0
        %2080 = vmatprep.subr.bf16.mxu0 0
        %2081 = vmatpush1.bf16.msra.mxu0 0
        %2082 = vmatprep.subr.bf16.mxu0 0
        %2083 = vmatpush1.bf16.msra.mxu0 0
        %2084 = vmatprep.subr.bf16.mxu0 0
        %2085 = vmatpush1.bf16.msra.mxu0 0
        %2086 = vmatprep.subr.bf16.mxu0 0
        %2087 = vmatpush1.bf16.msra.mxu0 0
        %2088 = vmatprep.subr.bf16.mxu0 0
        %2089 = vmatpush1.bf16.msra.mxu0 0
        %2090 = vmatprep.subr.bf16.mxu0 0
        %2091 = vmatpush1.bf16.msra.mxu0 0
        %2092 = vmatprep.subr.bf16.mxu0 0
        %2093 = vmatpush1.bf16.msra.mxu0 %v2076
        %2094 = vmatprep.subr.bf16.mxu0 0
        %2095 = vmatpush2.bf16.msra.mxu0 0
        %2096 = vmatprep.subr.bf16.mxu0 0
        %2097 = vmatpush2.bf16.msra.mxu0 0
        %2098 = vmatprep.subr.bf16.mxu0 0
        %2099 = vmatpush2.bf16.msra.mxu0 0
        %2100 = vmatprep.subr.bf16.mxu0 0
        %2101 = vmatpush2.bf16.msra.mxu0 0
        %2102 = vmatprep.subr.bf16.mxu0 0
        %2103 = vmatpush2.bf16.msra.mxu0 0
        %2104 = vmatprep.subr.bf16.mxu0 0
        %2105 = vmatpush2.bf16.msra.mxu0 0
        %2106 = vmatprep.subr.bf16.mxu0 0
        %2107 = vmatpush2.bf16.msra.mxu0 0
        %2108 = vmatprep.subr.bf16.mxu0 0
        %2109 = vmatpush2.bf16.msra.mxu0 0
        %2110 = vmatprep.mubr.bf16.mxu0 0
        %2111 = vmatmul.mubr.bf16.gmra.mxu0 %v2073
        %v2112 = vpop.f32.mrf.mxu0
        %v2113 = vadd.f32 0.0, %v2112
        %v2114 = vpop.f32.mrf.mxu0
        %v2115 = vpop.f32.mrf.mxu0
        %v2116 = vpop.f32.mrf.mxu0
        %2117 = vdwg.mxu0
        %v2119 = vsel %vm735, %v1974, 0
        %v2122 = vsel %vm982, %v1979, 0
        %2124 = vmatprep.subr.bf16.mxu0 0
        %2125 = vmatpush1.bf16.msra.mxu0 0
        %2126 = vmatprep.subr.bf16.mxu0 0
        %2127 = vmatpush1.bf16.msra.mxu0 0
        %2128 = vmatprep.subr.bf16.mxu0 0
        %2129 = vmatpush1.bf16.msra.mxu0 0
        %2130 = vmatprep.subr.bf16.mxu0 0
        %2131 = vmatpush1.bf16.msra.mxu0 0
        %2132 = vmatprep.subr.bf16.mxu0 0
        %2133 = vmatpush1.bf16.msra.mxu0 0
        %2134 = vmatprep.subr.bf16.mxu0 0
        %2135 = vmatpush1.bf16.msra.mxu0 0
        %2136 = vmatprep.subr.bf16.mxu0 0
        %2137 = vmatpush1.bf16.msra.mxu0 0
        %2138 = vmatprep.subr.bf16.mxu0 0
        %2139 = vmatpush1.bf16.msra.mxu0 %v2122
        %2140 = vmatprep.subr.bf16.mxu0 0
        %2141 = vmatpush2.bf16.msra.mxu0 0
        %2142 = vmatprep.subr.bf16.mxu0 0
        %2143 = vmatpush2.bf16.msra.mxu0 0
        %2144 = vmatprep.subr.bf16.mxu0 0
        %2145 = vmatpush2.bf16.msra.mxu0 0
        %2146 = vmatprep.subr.bf16.mxu0 0
        %2147 = vmatpush2.bf16.msra.mxu0 0
        %2148 = vmatprep.subr.bf16.mxu0 0
        %2149 = vmatpush2.bf16.msra.mxu0 0
        %2150 = vmatprep.subr.bf16.mxu0 0
        %2151 = vmatpush2.bf16.msra.mxu0 0
        %2152 = vmatprep.subr.bf16.mxu0 0
        %2153 = vmatpush2.bf16.msra.mxu0 0
        %2154 = vmatprep.subr.bf16.mxu0 0
        %2155 = vmatpush2.bf16.msra.mxu0 0
        %2156 = vmatprep.mubr.bf16.mxu0 0
        %2157 = vmatmul.mubr.bf16.gmra.mxu0 %v2119
        %v2158 = vpop.f32.mrf.mxu0
        %v2159 = vadd.f32 0.0, %v2158
        %v2160 = vpop.f32.mrf.mxu0
        %v2161 = vpop.f32.mrf.mxu0
        %v2162 = vpop.f32.mrf.mxu0
        %2163 = vdwg.mxu0
        %v2164 = vsel %vm426, %v2021, 0.0
        %v2165 = vsel %vm426, %v2067, 0.0
        %v2166 = vadd.f32 %v2164, %v2165
        %v2167 = vsel %vm426, %v2113, 0.0
        %v2168 = vadd.f32 %v2166, %v2167
        %v2169 = vsel %vm426, %v2159, 0.0
        %v2170 = vadd.f32 %v2168, %v2169
        %v2171 = vlaneseq
        %v2172 = vshrl.u32 %v2171, 7
        %v2173 = vsub.s32 6, %v2172
        %v2174 = vrot.slane %v347, %v2173
        %v2175 = vadd.f32 %v2170, %v2174
        %v2176 = vadd.f32 %v1399, %v2175
        %v2177 = vsel %vm426, %v2176, 0.0
        %2178 = vadd.xlane.f32.xlu0 %v2177
        %v2179 = vpop.xlane.xlu0 %2178
        %v2180 = vmul.f32 %v2179, %v430
        %v2181 = vmul.f32 %v2176, %v2176
        %v2182 = vsel %vm426, %v2181, 0.0
        %2183 = vadd.xlane.f32.xlu0 %v2182
        %v2184 = vpop.xlane.xlu0 %2183
        %v2185 = vmul.f32 %v2184, %v430
        %v2186 = vmul.f32 %v2180, %v2180
        %v2187 = vsub.f32 %v2185, %v2186
        %v2188 = vsub.f32 %v2176, %v2180
        %v2189 = vadd.f32 %v2187, 1e-05
        %v2190 = vrsqrt.pop %v2189
        %v2191 = vmul.f32 %v2188, %v2190
        %v2192 = vlaneseq
        %v2193 = vshrl.u32 %v2192, 7
        %v2194 = vsub.s32 7, %v2193
        %v2195 = vrot.slane %v347, %v2194
        %v2196 = vmul.f32 %v2191, %v2195
        %v2197 = vlaneseq
        %v2198 = vshrl.u32 %v2197, 7
        %v2199 = vsub.s32 0, %v2198
        %v2200 = vrot.slane %v348, %v2199
        %v2201 = vadd.f32 %v2196, %v2200
        %v2202 = vpack.c.bf16 %v2201, %v2201
        %v2203 = vld [vmem:[#allocation5 + $0x68] sm:$0xf]
        %v2204 = vld [vmem:[#allocation5 + $0x6c] sm:$0xf]
        %v2205 = vld [vmem:[#allocation5 + $0x70] sm:$0xf]
        %v2206 = vld [vmem:[#allocation5 + $0x74] sm:$0xf]
        %v2207 = vlaneseq
        %v2208 = vshrl.u32 %v2207, 7
        %v2209 = vsub.s32 1, %v2208
        %v2210 = vrot.slane %v348, %v2209
        %v2215 = vunpack.c.l.b16 %v2203
        %v2216 = vunpack.c.l.b16 %v2204
        %v2217 = vunpack.c.l.b16 %v2205
        %v2218 = vunpack.c.l.b16 %v2206
        %v2219 = vpack.c.b16 %v2216, %v2215
        %v2220 = vpack.c.b16 %v2218, %v2217
        %v2224 = vsel %vm426, %v2202, 0
        %2226 = vmatprep.subr.bf16.mxu0 0
        %2227 = vmatpush1.bf16.msra.mxu0 0
        %2228 = vmatprep.subr.bf16.mxu0 0
        %2229 = vmatpush1.bf16.msra.mxu0 0
        %2230 = vmatprep.subr.bf16.mxu0 0
        %2231 = vmatpush1.bf16.msra.mxu0 0
        %2232 = vmatprep.subr.bf16.mxu0 0
        %2233 = vmatpush1.bf16.msra.mxu0 0
        %2234 = vmatprep.subr.bf16.mxu0 0
        %2235 = vmatpush1.bf16.msra.mxu0 0
        %2236 = vmatprep.subr.bf16.mxu0 0
        %2237 = vmatpush1.bf16.msra.mxu0 0
        %2238 = vmatprep.subr.bf16.mxu0 0
        %2239 = vmatpush1.bf16.msra.mxu0 %v2220
        %2240 = vmatprep.subr.bf16.mxu0 0
        %2241 = vmatpush1.bf16.msra.mxu0 %v2219
        %2242 = vmatprep.subr.bf16.mxu0 0
        %2243 = vmatpush2.bf16.msra.mxu0 0
        %2244 = vmatprep.subr.bf16.mxu0 0
        %2245 = vmatpush2.bf16.msra.mxu0 0
        %2246 = vmatprep.subr.bf16.mxu0 0
        %2247 = vmatpush2.bf16.msra.mxu0 0
        %2248 = vmatprep.subr.bf16.mxu0 0
        %2249 = vmatpush2.bf16.msra.mxu0 0
        %2250 = vmatprep.subr.bf16.mxu0 0
        %2251 = vmatpush2.bf16.msra.mxu0 0
        %2252 = vmatprep.subr.bf16.mxu0 0
        %2253 = vmatpush2.bf16.msra.mxu0 0
        %2254 = vmatprep.subr.bf16.mxu0 0
        %2255 = vmatpush2.bf16.msra.mxu0 0
        %2256 = vmatprep.subr.bf16.mxu0 0
        %2257 = vmatpush2.bf16.msra.mxu0 0
        %2258 = vmatprep.mubr.bf16.mxu0 0
        %2259 = vmatmul.mubr.bf16.gmra.mxu0 %v2224
        %v2260 = vpop.f32.mrf.mxu0
        %v2261 = vadd.f32 %v2210, %v2260
        %v2262 = vpop.f32.mrf.mxu0
        %v2263 = vpop.f32.mrf.mxu0
        %v2264 = vpop.f32.mrf.mxu0
        %2265 = vdwg.mxu0
        %v2266 = vmax.f32 %v2261, 0.0
        %v2267 = vpack.c.bf16 %v2266, %v2266
        %v2268 = vld [vmem:[#allocation5 + $0x78] sm:$0xf]
        %v2269 = vld [vmem:[#allocation5 + $0x7c] sm:$0xf]
        %v2270 = vld [vmem:[#allocation5 + $0x80] sm:$0xf]
        %v2271 = vld [vmem:[#allocation5 + $0x84] sm:$0xf]
        %v2272 = vld [vmem:[#allocation5 + $0x88] sm:$0xf]
        %v2273 = vld [vmem:[#allocation5 + $0x8c] sm:$0xf]
        %v2274 = vld [vmem:[#allocation5 + $0x90] sm:$0xf]
        %v2275 = vld [vmem:[#allocation5 + $0x94] sm:$0xf]
        %v2276 = vlaneseq
        %v2277 = vshrl.u32 %v2276, 7
        %v2278 = vsub.s32 2, %v2277
        %v2279 = vrot.slane %v348, %v2278
        %v2288 = vunpack.c.l.b16 %v2268
        %v2289 = vunpack.c.l.b16 %v2269
        %v2290 = vunpack.c.l.b16 %v2270
        %v2291 = vunpack.c.l.b16 %v2271
        %v2292 = vunpack.c.l.b16 %v2272
        %v2293 = vunpack.c.l.b16 %v2273
        %v2294 = vunpack.c.l.b16 %v2274
        %v2295 = vunpack.c.l.b16 %v2275
        %v2296 = vpack.c.b16 %v2289, %v2288
        %v2297 = vpack.c.b16 %v2291, %v2290
        %v2298 = vpack.c.b16 %v2293, %v2292
        %v2299 = vpack.c.b16 %v2295, %v2294
        %vm2304 = vcmask 523264
        %v2306 = vsel %vm2304, %v2267, 0
        %2308 = vmatprep.subr.bf16.mxu0 0
        %2309 = vmatpush1.bf16.msra.mxu0 0
        %2310 = vmatprep.subr.bf16.mxu0 0
        %2311 = vmatpush1.bf16.msra.mxu0 0
        %2312 = vmatprep.subr.bf16.mxu0 0
        %2313 = vmatpush1.bf16.msra.mxu0 0
        %2314 = vmatprep.subr.bf16.mxu0 0
        %2315 = vmatpush1.bf16.msra.mxu0 0
        %2316 = vmatprep.subr.bf16.mxu0 0
        %2317 = vmatpush1.bf16.msra.mxu0 %v2299
        %2318 = vmatprep.subr.bf16.mxu0 0
        %2319 = vmatpush1.bf16.msra.mxu0 %v2298
        %2320 = vmatprep.subr.bf16.mxu0 0
        %2321 = vmatpush1.bf16.msra.mxu0 %v2297
        %2322 = vmatprep.subr.bf16.mxu0 0
        %2323 = vmatpush1.bf16.msra.mxu0 %v2296
        %2324 = vmatprep.subr.bf16.mxu0 0
        %2325 = vmatpush2.bf16.msra.mxu0 0
        %2326 = vmatprep.subr.bf16.mxu0 0
        %2327 = vmatpush2.bf16.msra.mxu0 0
        %2328 = vmatprep.subr.bf16.mxu0 0
        %2329 = vmatpush2.bf16.msra.mxu0 0
        %2330 = vmatprep.subr.bf16.mxu0 0
        %2331 = vmatpush2.bf16.msra.mxu0 0
        %2332 = vmatprep.subr.bf16.mxu0 0
        %2333 = vmatpush2.bf16.msra.mxu0 0
        %2334 = vmatprep.subr.bf16.mxu0 0
        %2335 = vmatpush2.bf16.msra.mxu0 0
        %2336 = vmatprep.subr.bf16.mxu0 0
        %2337 = vmatpush2.bf16.msra.mxu0 0
        %2338 = vmatprep.subr.bf16.mxu0 0
        %2339 = vmatpush2.bf16.msra.mxu0 0
        %2340 = vmatprep.mubr.bf16.mxu0 0
        %2341 = vmatmul.mubr.bf16.gmra.mxu0 %v2306
        %v2342 = vpop.f32.mrf.mxu0
        %v2343 = vadd.f32 %v2279, %v2342
        %v2344 = vpop.f32.mrf.mxu0
        %v2345 = vpop.f32.mrf.mxu0
        %v2346 = vpop.f32.mrf.mxu0
        %2347 = vdwg.mxu0
        %v2348 = vadd.f32 %v2201, %v2343
        %v2349 = vsel %vm426, %v2348, 0.0
        %2350 = vadd.xlane.f32.xlu0 %v2349
        %v2351 = vpop.xlane.xlu0 %2350
        %v2352 = vmul.f32 %v2351, %v430
        %v2353 = vmul.f32 %v2348, %v2348
        %v2354 = vsel %vm426, %v2353, 0.0
        %2355 = vadd.xlane.f32.xlu0 %v2354
        %v2356 = vpop.xlane.xlu0 %2355
        %v2357 = vmul.f32 %v2356, %v430
        %v2358 = vmul.f32 %v2352, %v2352
        %v2359 = vsub.f32 %v2357, %v2358
        %v2360 = vsub.f32 %v2348, %v2352
        %v2361 = vadd.f32 %v2359, 1e-05
        %v2362 = vrsqrt.pop %v2361
        %v2363 = vmul.f32 %v2360, %v2362
        %v2364 = vlaneseq
        %v2365 = vshrl.u32 %v2364, 7
        %v2366 = vsub.s32 3, %v2365
        %v2367 = vrot.slane %v348, %v2366
        %v2368 = vmul.f32 %v2363, %v2367
        %v2369 = vlaneseq
        %v2370 = vshrl.u32 %v2369, 7
        %v2371 = vsub.s32 4, %v2370
        %v2372 = vrot.slane %v348, %v2371
        %v2373 = vadd.f32 %v2368, %v2372
        %v2374 = vsel %vm426, %v2373, 0.0
        %2375 = vadd.xlane.f32.xlu0 %v2374
        %v2376 = vpop.xlane.xlu0 %2375
        %v2377 = vmul.f32 %v2376, %v430
        %v2378 = vmul.f32 %v2373, %v2373
        %v2379 = vsel %vm426, %v2378, 0.0
        %2380 = vadd.xlane.f32.xlu0 %v2379
        %v2381 = vpop.xlane.xlu0 %2380
        %v2382 = vmul.f32 %v2381, %v430
        %v2383 = vmul.f32 %v2377, %v2377
        %v2384 = vsub.f32 %v2382, %v2383
        %v2385 = vsub.f32 %v2373, %v2377
        %v2386 = vadd.f32 %v2384, 1e-05
        %v2387 = vrsqrt.pop %v2386
        %v2388 = vmul.f32 %v2385, %v2387
        %v2389 = vlaneseq
        %v2390 = vshrl.u32 %v2389, 7
        %v2391 = vsub.s32 5, %v2390
        %v2392 = vrot.slane %v348, %v2391
        %v2393 = vmul.f32 %v2388, %v2392
        %v2394 = vlaneseq
        %v2395 = vshrl.u32 %v2394, 7
        %v2396 = vsub.s32 6, %v2395
        %v2397 = vrot.slane %v348, %v2396
        %v2398 = vadd.f32 %v2393, %v2397
        %vm2399 = vcmask 57344
        %v2400 = vsel %vm2399, %v343, 0.0
        %2401 = vadd.xlane.f32.xlu0 %v2400
        %v2402 = vpop.xlane.xlu0 %2401
        %v2403 = vmax.f32 %v2402, 1.0
        %v2404 = vpack.c.bf16 %v343, %v343
        %v2405 = vpack.c.bf16 %v2398, %v2398
        %v2407 = vsel %vm735, %v2404, 0
        %v2410 = vsel %vm982, %v2405, 0
        %2412 = vmatprep.subr.bf16.mxu0 0
        %2413 = vmatpush1.bf16.msra.mxu0 0
        %2414 = vmatprep.subr.bf16.mxu0 0
        %2415 = vmatpush1.bf16.msra.mxu0 0
        %2416 = vmatprep.subr.bf16.mxu0 0
        %2417 = vmatpush1.bf16.msra.mxu0 0
        %2418 = vmatprep.subr.bf16.mxu0 0
        %2419 = vmatpush1.bf16.msra.mxu0 0
        %2420 = vmatprep.subr.bf16.mxu0 0
        %2421 = vmatpush1.bf16.msra.mxu0 0
        %2422 = vmatprep.subr.bf16.mxu0 0
        %2423 = vmatpush1.bf16.msra.mxu0 0
        %2424 = vmatprep.subr.bf16.mxu0 0
        %2425 = vmatpush1.bf16.msra.mxu0 0
        %2426 = vmatprep.subr.bf16.mxu0 0
        %2427 = vmatpush1.bf16.msra.mxu0 %v2410
        %2428 = vmatprep.subr.bf16.mxu0 0
        %2429 = vmatpush2.bf16.msra.mxu0 0
        %2430 = vmatprep.subr.bf16.mxu0 0
        %2431 = vmatpush2.bf16.msra.mxu0 0
        %2432 = vmatprep.subr.bf16.mxu0 0
        %2433 = vmatpush2.bf16.msra.mxu0 0
        %2434 = vmatprep.subr.bf16.mxu0 0
        %2435 = vmatpush2.bf16.msra.mxu0 0
        %2436 = vmatprep.subr.bf16.mxu0 0
        %2437 = vmatpush2.bf16.msra.mxu0 0
        %2438 = vmatprep.subr.bf16.mxu0 0
        %2439 = vmatpush2.bf16.msra.mxu0 0
        %2440 = vmatprep.subr.bf16.mxu0 0
        %2441 = vmatpush2.bf16.msra.mxu0 0
        %2442 = vmatprep.subr.bf16.mxu0 0
        %2443 = vmatpush2.bf16.msra.mxu0 0
        %2444 = vmatprep.mubr.bf16.mxu0 0
        %2445 = vmatmul.mubr.bf16.gmra.mxu0 %v2407
        %v2446 = vpop.f32.mrf.mxu0
        %v2447 = vadd.f32 0.0, %v2446
        %v2448 = vpop.f32.mrf.mxu0
        %v2449 = vpop.f32.mrf.mxu0
        %v2450 = vpop.f32.mrf.mxu0
        %2451 = vdwg.mxu0
        %v2452 = vrcp.pop %v2403
        %v2453 = vmul.f32 %v2447, %v2452
        %v2454 = vpack.c.bf16 %v2453, %v2453
        %v2456 = vsel %vm426, %v2454, 0
        %2458 = vmatprep.subr.bf16.mxu0 0
        %2459 = vmatpush1.bf16.msra.mxu0 0
        %2460 = vmatprep.subr.bf16.mxu0 0
        %2461 = vmatpush1.bf16.msra.mxu0 0
        %2462 = vmatprep.subr.bf16.mxu0 0
        %2463 = vmatpush1.bf16.msra.mxu0 0
        %2464 = vmatprep.subr.bf16.mxu0 0
        %2465 = vmatpush1.bf16.msra.mxu0 0
        %2466 = vmatprep.subr.bf16.mxu0 0
        %2467 = vmatpush1.bf16.msra.mxu0 0
        %2468 = vmatprep.subr.bf16.mxu0 0
        %2469 = vmatpush1.bf16.msra.mxu0 0
        %2470 = vmatprep.subr.bf16.mxu0 0
        %2471 = vmatpush1.bf16.msra.mxu0 %v649
        %2472 = vmatprep.subr.bf16.mxu0 0
        %2473 = vmatpush1.bf16.msra.mxu0 %v648
        %2474 = vmatprep.subr.bf16.mxu0 0
        %2475 = vmatpush2.bf16.msra.mxu0 0
        %2476 = vmatprep.subr.bf16.mxu0 0
        %2477 = vmatpush2.bf16.msra.mxu0 0
        %2478 = vmatprep.subr.bf16.mxu0 0
        %2479 = vmatpush2.bf16.msra.mxu0 0
        %2480 = vmatprep.subr.bf16.mxu0 0
        %2481 = vmatpush2.bf16.msra.mxu0 0
        %2482 = vmatprep.subr.bf16.mxu0 0
        %2483 = vmatpush2.bf16.msra.mxu0 0
        %2484 = vmatprep.subr.bf16.mxu0 0
        %2485 = vmatpush2.bf16.msra.mxu0 0
        %2486 = vmatprep.subr.bf16.mxu0 0
        %2487 = vmatpush2.bf16.msra.mxu0 0
        %2488 = vmatprep.subr.bf16.mxu0 0
        %2489 = vmatpush2.bf16.msra.mxu0 0
        %2490 = vmatprep.mubr.bf16.mxu0 0
        %2491 = vmatmul.mubr.bf16.gmra.mxu0 %v2456
        %v2492 = vpop.f32.mrf.mxu0
        %v2493 = vadd.f32 0.0, %v2492
        %v2494 = vpop.f32.mrf.mxu0
        %v2495 = vpop.f32.mrf.mxu0
        %v2496 = vpop.f32.mrf.mxu0
        %2497 = vdwg.mxu0
        %v2498 = vxor.u32 %v2493, 2147483648
        %v2499 = vmul.f32 %v2498, 1.442695
        %v2500 = vpow.pop %v2499
        %v2501 = vadd.f32 %v2500, 1.0
        %v2502 = vrcp.pop %v2501
        %v2503 = vmul.f32 1.0, %v2502
        %2504 = vst [vmem:[%s333] sm:$0x1] %v2503
        %s2505 = sand.u32 %s174, 1
        %s2506 = scalar_lea.sflag [#allocation4], %s2505
        %s2507 = sand.u32 %s174, 1
        %s2508 = scalar_lea.vmem [#allocation10], %s2507
        // Predicated region
        $region61: #{tpu_custom_call.1} parent=43 // pred_check
          %p2509 = pneg %p184
        $region62: #{tpu_custom_call.1} parent=43 // pred_check_branch
          %2511 = sbr.rel (%p2509) target = $region64
        $region63: #{tpu_custom_call.1} parent=43 // pred_region
          %s2513 = ssub.s32 16, 16
          %2514 = vsyncadd %s2506, %s2513
          %s2515 = smul.addr %s25, 16
          %s2516 = scalar_lea.hbm %s6, %s2515
          %s2518 = sshll.u32 %s2508, 4
          %s2519 = int_to_ptr.vmem [resolvable:$true] %s2518
          %2521 = dma.vmem_to_hbm [thread:$0]  %s2519, 16, %s2516, %s2506
        $region64: #{tpu_custom_call.1} parent=43 // pred_fallthru
          _
      $region44: #{tpu_custom_call.1} parent=5 // pred_fallthru
        _
      %p2522 = scmp.le.s32.totalorder 2, %s20
      // Predicated region
      $region65: #{tpu_custom_call.1} parent=5 // pred_check
        %p2523 = pneg %p2522
      $region66: #{tpu_custom_call.1} parent=5 // pred_check_branch
        %2525 = sbr.rel (%p2523) target = $region68
      $region67: #{tpu_custom_call.1} parent=5 // pred_region
        %s2526 = ssub.s32 %s20, 2
        // Predicated region
        $region69: #{tpu_custom_call.1} parent=67 // pred_check
          %p2527 = pneg %p190
        $region70: #{tpu_custom_call.1} parent=67 // pred_check_branch
          %2529 = sbr.rel (%p2527) target = $region72
        $region71: #{tpu_custom_call.1} parent=67 // pred_region
          %s2530 = sand.u32 %s175, 1
          %s2531 = scalar_lea.sflag [#allocation4], %s2530
          %s2532 = sand.u32 %s175, 1
          %s2533 = scalar_lea.vmem [#allocation10], %s2532
          %2534 = dma.done %s2531, 16
        $region72: #{tpu_custom_call.1} parent=67 // pred_fallthru
          _
      $region68: #{tpu_custom_call.1} parent=5 // pred_fallthru
        _
    $region6: #{tpu_custom_call.1} parent=1 // loop_footer
      %s24 = sadd.s32 1, %s20
    $region7: #{tpu_custom_call.1} parent=1 // loop_footer_branch
      %19 = sbr.rel target = $region3
    $region8: #{tpu_custom_call.1} parent=1 // loop_exit
      _
    %2535 = vsyncpa [#allocation3], 1
    %s2536 = scalar_lea.sflag [#allocation3], 1
    %2537 = vsyncpa %s2536, 1
    %2538 = vsyncpa [#allocation6], 1
    %2539 = vsyncpa [#allocation9], 1
    %2540 = vsyncpa [#allocation4], 1
    %s2541 = scalar_lea.sflag [#allocation4], 1
    %2542 = vsyncpa %s2541, 1

</llo_original>
